<compile_context>
chip_gen: v7x
topology: tpu7x:2x2x1
jax: 0.10.0
libtpu: 0.0.40
codegen_flags: <defaults>
</compile_context>

<pallas_src>
import functools

import jax
import jax.numpy as jnp
import numpy as np
from jax.experimental import pallas as pl
from jax.experimental.pallas import tpu as pltpu

EPS = 1e-5
VMEM_LIMIT = 64 * 1024 * 1024


def _prelu(v, a):
    return jnp.where(v >= 0, v, a * v)


def _round_up(x, m):
    return ((x + m - 1) // m) * m


def _choose_tb(B):
    # Keep the MXU M-dim large: >=128 rows per tile unless B itself is
    # smaller; capped at 512; always a multiple of 16 (bf16 sublane packing).
    if B < 128:
        return _round_up(max(B, 16), 16)
    return min(512, _round_up(B, 128))


def _reduce_lead(ref):
    # Sum a (nb, 1, W) stats ref over its (small, static) leading axis.
    tot = ref[0]
    for j in range(1, ref.shape[0]):
        tot = tot + ref[j]
    return tot  # (1, W)


# ---------------------------------------------------------------------------
# Main per-node body, tiled over B (grid axis "parallel"):
#   fused embeddings + grouped convs (block-diag matmuls, 128-lane aligned
#   channel slabs) + LayerNorm + PReLU + channel attention + layer_final +
#   PReLU + fused first lr_output Linear + masked partial batch statistics.
# Flat layout: activations are (tb, C*SL); channel c occupies lanes
# [c*SL, c*SL + H), padded lanes are exact zeros end to end.
# ---------------------------------------------------------------------------
def sehgnn_body_kernel(scal_ref, x_ref,
                       w1_ref, b1_ref, g1_ref, be1_ref,
                       w2_ref, b2_ref, g2_ref, be2_ref,
                       wqkv_ref, wf_ref, bf_ref,
                       wl1_ref, bl1_ref,
                       y1_ref, s1_ref, ss1_ref,
                       *, C, H, SL, SLQ, tb, b_valid):
    p1 = scal_ref[0]
    p2 = scal_ref[1]
    gamma = scal_ref[2]
    p3 = scal_ref[3]
    inv_chn = 1.0 / float(C * H)

    def mm(a, w_ref_):
        # bf16 operands, f32 accumulate on the MXU.
        return jnp.dot(a.astype(jnp.bfloat16), w_ref_[...],
                       preferred_element_type=jnp.float32)

    def ln(v, g_ref_, b_ref_):
        # nn.LayerNorm([C, H]): statistics over the C*H *valid* lanes.  The
        # padded lanes are exact zeros, so plain lane sums with the valid
        # count as divisor are correct; gamma/beta are zero on padded lanes,
        # which keeps them exactly zero after the affine.
        mu = jnp.sum(v, axis=-1, keepdims=True) * inv_chn
        msq = jnp.sum(v * v, axis=-1, keepdims=True) * inv_chn
        var = jnp.maximum(msq - mu * mu, 0.0)
        return (v - mu) * jax.lax.rsqrt(var + EPS) * g_ref_[...] + b_ref_[...]

    # Stage 1: (embedding @ conv1) fused block-diagonal matmul.
    h1 = mm(x_ref[...], w1_ref) + b1_ref[...]                 # (tb, C*SL)
    h1 = _prelu(ln(h1, g1_ref, be1_ref), p1)
    # Stage 2: second grouped conv as block-diagonal matmul.
    h2 = mm(h1, w2_ref) + b2_ref[...]
    h2 = _prelu(ln(h2, g2_ref, be2_ref), p2)                  # (tb, C*SL)

    # q/k/v projections in one lane-dense block-diagonal matmul.
    qkv = mm(h2, wqkv_ref)                        # (tb, 2*C*SLQ + C*SL)
    CSLQ = C * SLQ
    fq = qkv[:, :CSLQ]
    gk = qkv[:, CSLQ:2 * CSLQ]
    hv = qkv[:, 2 * CSLQ:]

    # scores[b,c,d] = sum_k fq[b,c,:]*gk[b,d,:]; softmax over c (dim=1).
    # C is tiny (metapath count): fully unrolled VPU work over 128-lane
    # aligned slabs (no sub-vreg slices, no batched matmuls).
    s = [[jnp.sum(fq[:, c * SLQ:(c + 1) * SLQ] * gk[:, d * SLQ:(d + 1) * SLQ],
                  axis=-1, keepdims=True)
          for d in range(C)] for c in range(C)]
    slabs = []
    for d in range(C):
        m = s[0][d]
        for c in range(1, C):
            m = jnp.maximum(m, s[c][d])
        e = [jnp.exp(s[c][d] - m) for c in range(C)]
        denom = e[0]
        for c in range(1, C):
            denom = denom + e[c]
        inv = pl.reciprocal(denom, approx=True)
        acc = (e[0] * inv) * hv[:, :SL]
        for c in range(1, C):
            acc = acc + (e[c] * inv) * hv[:, c * SL:(c + 1) * SL]
        slabs.append(gamma * acc + h2[:, d * SL:(d + 1) * SL])  # residual
    o_flat = jnp.concatenate(slabs, axis=-1)                    # (tb, C*SL)

    # layer_final + model.prelu (weights pre-padded to 128 output lanes).
    r = _prelu(mm(o_flat, wf_ref) + bf_ref[...], p3)            # (tb, HP)

    # Fused lr_output[0]: Linear(h, h) + masked partial batch statistics.
    y1 = mm(r, wl1_ref) + bl1_ref[...]                          # (tb, HP) f32
    y1_ref[...] = y1.astype(y1_ref.dtype)                       # bf16 stream
    rows = (jax.lax.broadcasted_iota(jnp.int32, y1.shape, 0)
            + pl.program_id(0) * tb)
    ym = jnp.where(rows < b_valid, y1, 0.0)                     # mask pad rows
    s1_ref[...] = jnp.sum(ym, axis=0, keepdims=True)[None]      # (1,1,HP)
    ss1_ref[...] = jnp.sum(ym * ym, axis=0, keepdims=True)[None]


def sehgnn_body(x_pad, kp, tb, b_valid):
    Bp, DtotP = x_pad.shape
    nb = Bp // tb
    C, H, SL, SLQ, HP = kp['C'], kp['H'], kp['SL'], kp['SLQ'], kp['HP']
    kernel = functools.partial(sehgnn_body_kernel, C=C, H=H, SL=SL, SLQ=SLQ,
                               tb=tb, b_valid=b_valid)
    args = (kp['scalars_main'], x_pad,
            kp['W1'], kp['b1'], kp['g1'], kp['be1'],
            kp['W2'], kp['b2'], kp['g2'], kp['be2'],
            kp['Wqkv'], kp['Wf'], kp['bf'], kp['wl1'], kp['bl1'])
    # Constant-index weight blocks are revisited each step -> DMA'd only once.
    full = lambda a: pl.BlockSpec(a.shape, lambda i: (0,) * a.ndim)
    in_specs = [pl.BlockSpec(memory_space=pltpu.MemorySpace.SMEM),
                pl.BlockSpec((tb, DtotP), lambda i: (i, 0))] + \
               [full(a) for a in args[2:]]
    out_shape = (jax.ShapeDtypeStruct((Bp, HP), jnp.bfloat16),
                 jax.ShapeDtypeStruct((nb, 1, HP), jnp.float32),
                 jax.ShapeDtypeStruct((nb, 1, HP), jnp.float32))
    out_specs = (pl.BlockSpec((tb, HP), lambda i: (i, 0)),
                 pl.BlockSpec((1, 1, HP), lambda i: (i, 0, 0)),
                 pl.BlockSpec((1, 1, HP), lambda i: (i, 0, 0)))
    return pl.pallas_call(
        kernel,
        out_shape=out_shape,
        grid=(nb,),
        in_specs=in_specs,
        out_specs=out_specs,
        compiler_params=pltpu.CompilerParams(
            dimension_semantics=("parallel",),
            vmem_limit_bytes=VMEM_LIMIT),
    )(*args)


# ---------------------------------------------------------------------------
# Rest of lr_output, tiled over B, every pass "parallel" (partial-sum stats):
#   pass 2: BN(y1) + PReLU, z = . @ wl2, partial masked sum/sumsq of z
#   pass 3: BN(z)
# Feature dims are 128-lane padded with zeros, so padded features normalize
# to exactly 0 and stores stay lane-dense.
# ---------------------------------------------------------------------------
def lr_head2_kernel(scal_ref, y_ref, s1_ref, ss1_ref, w_ref,
                    z_ref, s2_ref, ss2_ref, *, tb, b_valid):
    p4 = scal_ref[0]
    inv_n = 1.0 / float(b_valid)
    mu = _reduce_lead(s1_ref) * inv_n                    # (1, HP)
    msq = _reduce_lead(ss1_ref) * inv_n
    var = jnp.maximum(msq - mu * mu, 0.0)
    y = y_ref[...].astype(jnp.float32)
    yn = _prelu((y - mu) * jax.lax.rsqrt(var + EPS), p4)
    z = jnp.dot(yn.astype(jnp.bfloat16), w_ref[...],
                preferred_element_type=jnp.float32)
    z_ref[...] = z.astype(z_ref.dtype)                   # bf16 stream
    rows = (jax.lax.broadcasted_iota(jnp.int32, z.shape, 0)
            + pl.program_id(0) * tb)
    zm = jnp.where(rows < b_valid, z, 0.0)
    s2_ref[...] = jnp.sum(zm, axis=0, keepdims=True)[None]
    ss2_ref[...] = jnp.sum(zm * zm, axis=0, keepdims=True)[None]


def lr_head3_kernel(z_ref, s2_ref, ss2_ref, o_ref, *, b_valid):
    inv_n = 1.0 / float(b_valid)
    mu = _reduce_lead(s2_ref) * inv_n
    msq = _reduce_lead(ss2_ref) * inv_n
    var = jnp.maximum(msq - mu * mu, 0.0)
    o_ref[...] = ((z_ref[...].astype(jnp.float32) - mu)
                  * jax.lax.rsqrt(var + EPS))


def lr_head(y1, s1p, ss1p, kp, tb, b_valid):
    Bp, HP = y1.shape
    NP = kp['NP']
    nb = Bp // tb
    full = lambda a: pl.BlockSpec(a.shape, lambda i: (0,) * a.ndim)
    row = lambda w: pl.BlockSpec((tb, w), lambda i: (i, 0))
    stat_in = lambda a: pl.BlockSpec(a.shape, lambda i: (0, 0, 0))
    stat_out = lambda w: pl.BlockSpec((1, 1, w), lambda i: (i, 0, 0))
    cp = pltpu.CompilerParams(dimension_semantics=("parallel",),
                              vmem_limit_bytes=VMEM_LIMIT)

    z, s2p, ss2p = pl.pallas_call(
        functools.partial(lr_head2_kernel, tb=tb, b_valid=b_valid),
        out_shape=(jax.ShapeDtypeStruct((Bp, NP), jnp.bfloat16),
                   jax.ShapeDtypeStruct((nb, 1, NP), jnp.float32),
                   jax.ShapeDtypeStruct((nb, 1, NP), jnp.float32)),
        grid=(nb,),
        in_specs=[pl.BlockSpec(memory_space=pltpu.MemorySpace.SMEM),
                  row(HP), stat_in(s1p), stat_in(ss1p), full(kp['wl2'])],
        out_specs=(row(NP), stat_out(NP), stat_out(NP)),
        compiler_params=cp,
    )(kp['scalars_head'], y1, s1p, ss1p, kp['wl2'])

    return pl.pallas_call(
        functools.partial(lr_head3_kernel, b_valid=b_valid),
        out_shape=jax.ShapeDtypeStruct((Bp, NP), jnp.float32),
        grid=(nb,),
        in_specs=[row(NP), stat_in(s2p), stat_in(ss2p)],
        out_specs=row(NP),
        compiler_params=cp,
    )(z, s2p, ss2p)


# ---------------------------------------------------------------------------
# Host-side weight preparation (one-time): fold embeddings into conv1, build
# block-diagonal weights with 128-lane aligned per-channel slabs, pad all
# output feature dims to 128 lanes, cast matmul weights to bf16.
# ---------------------------------------------------------------------------
def prepare_kernel_params(p, keys_sorted):
    C = len(keys_sorted)
    H = p['w1'].shape[-1]
    H8 = p['wq'].shape[0]
    nclass = p['wl2'].shape[0]
    ds = [p['emb'][k].shape[0] for k in keys_sorted]
    Dtot = int(sum(ds))
    DtotP = _round_up(Dtot, 128)
    SL = _round_up(H, 128)       # per-channel activation slab (lane aligned)
    SLQ = _round_up(H8, 128)     # per-channel q/k slab (lane aligned)
    HP = _round_up(H, 128)
    NP = _round_up(nclass, 128)
    CSL = C * SL
    CSLQ = C * SLQ

    # Stage 1: fused embedding + grouped conv, block-diagonal (DtotP, C*SL).
    W1 = jnp.zeros((DtotP, CSL), jnp.float32)
    off = 0
    for c, k in enumerate(keys_sorted):
        W1 = W1.at[off:off + ds[c], c * SL:c * SL + H].set(
            p['emb'][k] @ p['w1'][c])
        off += ds[c]

    # Stage 2 grouped conv + q/k/v projections + layer_final, block-diagonal.
    W2 = jnp.zeros((CSL, CSL), jnp.float32)
    Wqkv = jnp.zeros((CSL, 2 * CSLQ + CSL), jnp.float32)
    Wf = jnp.zeros((CSL, HP), jnp.float32)
    for c in range(C):
        r0 = c * SL
        W2 = W2.at[r0:r0 + H, r0:r0 + H].set(p['w2'][c])
        Wqkv = Wqkv.at[r0:r0 + H, c * SLQ:c * SLQ + H8].set(p['wq'].T)
        Wqkv = Wqkv.at[r0:r0 + H,
                       CSLQ + c * SLQ:CSLQ + c * SLQ + H8].set(p['wk'].T)
        Wqkv = Wqkv.at[r0:r0 + H,
                       2 * CSLQ + r0:2 * CSLQ + r0 + H].set(p['wv'].T)
        Wf = Wf.at[r0:r0 + H, :H].set(p['wf'][:, c * H:(c + 1) * H].T)

    def pad_vec(v):  # (C, H) -> (1, C*SL), zeros on padded lanes
        out = jnp.zeros((1, CSL), jnp.float32)
        for c in range(C):
            out = out.at[0, c * SL:c * SL + H].set(v[c])
        return out

    bf = jnp.zeros((1, HP), jnp.float32).at[:, :H].set(p['bf'])
    wl1 = jnp.zeros((HP, HP), jnp.float32).at[:H, :H].set(p['wl1'].T)
    bl1 = jnp.zeros((1, HP), jnp.float32).at[:, :H].set(p['bl1'])
    wl2 = jnp.zeros((HP, NP), jnp.float32).at[:H, :nclass].set(p['wl2'].T)

    return dict(
        C=C, H=H, H8=H8, Dtot=Dtot, DtotP=DtotP, SL=SL, SLQ=SLQ,
        HP=HP, NP=NP, nclass=nclass,
        W1=W1.astype(jnp.bfloat16), W2=W2.astype(jnp.bfloat16),
        Wqkv=Wqkv.astype(jnp.bfloat16), Wf=Wf.astype(jnp.bfloat16),
        b1=pad_vec(p['b1']), g1=pad_vec(p['ln1_w']), be1=pad_vec(p['ln1_b']),
        b2=pad_vec(p['b2']), g2=pad_vec(p['ln2_w']), be2=pad_vec(p['ln2_b']),
        bf=bf, wl1=wl1.astype(jnp.bfloat16), bl1=bl1,
        wl2=wl2.astype(jnp.bfloat16),
        scalars_main=p['scalars_main'], scalars_head=p['scalars_head'])


# ---------------------------------------------------------------------------
# Full forward (glue in plain JAX: key sorting, concat, padding, slicing)
# ---------------------------------------------------------------------------
def sehgnn_forward(feature_list, kp, keys_sorted, tb=None):
    # keys_sort=True semantics; input_drop is identity in eval mode.
    x = jnp.concatenate([feature_list[k] for k in keys_sorted], axis=1)
    B, Dtot = x.shape
    if tb is None:
        tb = _choose_tb(B)
    Bp = _round_up(B, tb)
    # bf16 feature stream; padded rows are masked from stats / sliced off.
    x = jnp.pad(x, ((0, Bp - B), (0, kp['DtotP'] - Dtot))).astype(jnp.bfloat16)
    y1, s1p, ss1p = sehgnn_body(x, kp, tb, b_valid=B)   # (Bp, HP) + stats
    out = lr_head(y1, s1p, ss1p, kp, tb, b_valid=B)     # (Bp, NP)
    return out[:B, :kp['nclass']]


# ---------------------------------------------------------------------------
# Pure-JAX f32 reference for verification
# ---------------------------------------------------------------------------
def reference_forward(feature_list, params, keys_sorted):
    sm = params['scalars_main']
    p1, p2, gamma, p3 = sm[0], sm[1], sm[2], sm[3]
    p4 = params['scalars_head'][0]
    feats = [feature_list[k] @ params['emb'][k] for k in keys_sorted]
    x = jnp.stack(feats, axis=1)

    def gconv(v, w, b):
        return jnp.einsum('bcm,cmn->bcn', v, w) + b[None]

    def ln(v, g, b):
        mu = v.mean(axis=(1, 2), keepdims=True)
        var = ((v - mu) ** 2).mean(axis=(1, 2), keepdims=True)
        return (v - mu) / jnp.sqrt(var + EPS) * g[None] + b[None]

    h = _prelu(ln(gconv(x, params['w1'], params['b1']),
                  params['ln1_w'], params['ln1_b']), p1)
    h = _prelu(ln(gconv(h, params['w2'], params['b2']),
                  params['ln2_w'], params['ln2_b']), p2)
    # Transformer in the original torch layout (B, H, C)
    xt = jnp.transpose(h, (0, 2, 1))
    f = jnp.einsum('oh,bhc->boc', params['wq'], xt)
    g = jnp.einsum('oh,bhc->boc', params['wk'], xt)
    hv = jnp.einsum('oh,bhc->boc', params['wv'], xt)
    s = jnp.einsum('bkc,bkd->bcd', f, g)
    beta = jax.nn.softmax(s, axis=1)
    o = gamma * jnp.einsum('bhc,bcd->bhd', hv, beta) + xt
    r = jnp.transpose(o, (0, 2, 1)).reshape(o.shape[0], -1)
    y = _prelu(r @ params['wf'].T + params['bf'], p3)
    y1 = y @ params['wl1'].T + params['bl1']
    mu = y1.mean(axis=0, keepdims=True)
    var = ((y1 - mu) ** 2).mean(axis=0, keepdims=True)
    y1 = _prelu((y1 - mu) / jnp.sqrt(var + EPS), p4)
    z = y1 @ params['wl2'].T
    mu2 = z.mean(axis=0, keepdims=True)
    var2 = ((z - mu2) ** 2).mean(axis=0, keepdims=True)
    return (z - mu2) / jnp.sqrt(var2 + EPS)


# ---------------------------------------------------------------------------
# Deterministic parameter init (shapes from SeHGNN.__init__)
# ---------------------------------------------------------------------------
def make_params(key, data_size, keys_sorted, nfeat, hidden, nclass):
    C = len(keys_sorted)
    H8 = hidden // 8
    ks = iter(jax.random.split(key, 32))

    def xavier(k, shape, fan_in, fan_out, gain=float(np.sqrt(2.0))):
        a = gain * float(np.sqrt(6.0 / (fan_in + fan_out)))
        return jax.random.uniform(k, shape, jnp.float32, -a, a)

    p = {}
    p['emb'] = {k: jax.random.uniform(next(ks), (data_size[k], nfeat),
                                      jnp.float32, -0.5, 0.5)
                for k in keys_sorted}
    p['w1'] = xavier(next(ks), (C, nfeat, hidden), nfeat, hidden)
    p['b1'] = 0.05 * jax.random.normal(next(ks), (C, hidden), jnp.float32)
    p['ln1_w'] = 1.0 + 0.1 * jax.random.normal(next(ks), (C, hidden), jnp.float32)
    p['ln1_b'] = 0.1 * jax.random.normal(next(ks), (C, hidden), jnp.float32)
    p['w2'] = xavier(next(ks), (C, hidden, hidden), hidden, hidden)
    p['b2'] = 0.05 * jax.random.normal(next(ks), (C, hidden), jnp.float32)
    p['ln2_w'] = 1.0 + 0.1 * jax.random.normal(next(ks), (C, hidden), jnp.float32)
    p['ln2_b'] = 0.1 * jax.random.normal(next(ks), (C, hidden), jnp.float32)
    # Transformer q/k/v 1x1 convs (spectral_norm folded into init), no bias.
    p['wq'] = xavier(next(ks), (H8, hidden), hidden, H8, gain=1.0)
    p['wk'] = xavier(next(ks), (H8, hidden), hidden, H8, gain=1.0)
    p['wv'] = xavier(next(ks), (hidden, hidden), hidden, hidden, gain=1.0)
    # layer_final: Linear(C*hidden, hidden)
    p['wf'] = xavier(next(ks), (hidden, C * hidden), C * hidden, hidden)
    p['bf'] = 0.05 * jax.random.normal(next(ks), (1, hidden), jnp.float32)
    # lr_output (n_layers_2 = 2): Linear(h,h)+BN+PReLU+Drop, Linear(h,ncls)+BN
    p['wl1'] = xavier(next(ks), (hidden, hidden), hidden, hidden)
    p['bl1'] = 0.05 * jax.random.normal(next(ks), (1, hidden), jnp.float32)
    p['wl2'] = xavier(next(ks), (nclass, hidden), hidden, nclass)
    # scalars: [PReLU_1, PReLU_2, transformer gamma, model.prelu]
    # (gamma init is 0.0 in the module; set to 0.5 so the attention path is
    #  numerically exercised)
    p['scalars_main'] = jnp.array([0.25, 0.25, 0.5, 0.25], jnp.float32)
    p['scalars_head'] = jnp.array([0.25], jnp.float32)   # lr_output PReLU
    return p


if __name__ == "__main__":
    nfeat, hidden, nclass = 32, 64, 8
    B = 16
    data_size = {'a': 24, 'b': 16, 'c': 40, 'd': 32}
    keys_sorted = sorted(data_size.keys())

    params = make_params(jax.random.PRNGKey(0), data_size, keys_sorted,
                         nfeat, hidden, nclass)
    kparams = prepare_kernel_params(params, keys_sorted)

    fkeys = jax.random.split(jax.random.PRNGKey(1), len(keys_sorted))
    feature_list = {k: jax.random.normal(fk, (B, data_size[k]), jnp.float32)
                    for k, fk in zip(keys_sorted, fkeys)}

    out = sehgnn_forward(feature_list, kparams, keys_sorted)
    out = jax.block_until_ready(out)
    assert out.shape == (B, nclass), out.shape

    ref = jax.block_until_ready(reference_forward(feature_list, params,
                                                  keys_sorted))
    # Tolerance accounts for bf16 MXU operands + bf16 y1/z streams vs the
    # pure-f32 reference (BN statistics are kept in f32).
    np.testing.assert_allclose(np.asarray(out), np.asarray(ref),
                               rtol=5e-2, atol=7e-2)
    print("KERNEL_OK")
</pallas_src>

<mosaic_0001>
module attributes {stable_mosaic.version = 11 : i64} {
  func.func @sehgnn_body_kernel(%arg0: i32, %arg1: memref<4xf32, #tpu.memory_space<smem>>, %arg2: memref<16x128xbf16, #tpu.memory_space<vmem>>, %arg3: memref<128x512xbf16, #tpu.memory_space<vmem>>, %arg4: memref<1x512xf32, #tpu.memory_space<vmem>>, %arg5: memref<1x512xf32, #tpu.memory_space<vmem>>, %arg6: memref<1x512xf32, #tpu.memory_space<vmem>>, %arg7: memref<512x512xbf16, #tpu.memory_space<vmem>>, %arg8: memref<1x512xf32, #tpu.memory_space<vmem>>, %arg9: memref<1x512xf32, #tpu.memory_space<vmem>>, %arg10: memref<1x512xf32, #tpu.memory_space<vmem>>, %arg11: memref<512x1536xbf16, #tpu.memory_space<vmem>>, %arg12: memref<512x128xbf16, #tpu.memory_space<vmem>>, %arg13: memref<1x128xf32, #tpu.memory_space<vmem>>, %arg14: memref<128x128xbf16, #tpu.memory_space<vmem>>, %arg15: memref<1x128xf32, #tpu.memory_space<vmem>>, %arg16: memref<16x128xbf16, #tpu.memory_space<vmem>>, %arg17: memref<1x1x128xf32, #tpu.memory_space<vmem>>, %arg18: memref<1x1x128xf32, #tpu.memory_space<vmem>>) attributes {dimension_semantics = [#tpu.dimension_semantics<parallel>], iteration_bounds = array<i64: 1>, scalar_prefetch = 0 : i64, scratch_operands = 0 : i64, tpu.core_type = #tpu.core_type<tc>, window_params = [{transform_indices = @transform_0, window_bounds = array<i64: 4>}, {transform_indices = @transform_1, window_bounds = array<i64: 16, 128>}, {pipeline_mode = #tpu.pipeline_mode<synchronous>, transform_indices = @transform_2, window_bounds = array<i64: 128, 512>}, {pipeline_mode = #tpu.pipeline_mode<synchronous>, transform_indices = @transform_3, window_bounds = array<i64: 1, 512>}, {pipeline_mode = #tpu.pipeline_mode<synchronous>, transform_indices = @transform_4, window_bounds = array<i64: 1, 512>}, {pipeline_mode = #tpu.pipeline_mode<synchronous>, transform_indices = @transform_5, window_bounds = array<i64: 1, 512>}, {pipeline_mode = #tpu.pipeline_mode<synchronous>, transform_indices = @transform_6, window_bounds = array<i64: 512, 512>}, {pipeline_mode = #tpu.pipeline_mode<synchronous>, transform_indices = @transform_7, window_bounds = array<i64: 1, 512>}, {pipeline_mode = #tpu.pipeline_mode<synchronous>, transform_indices = @transform_8, window_bounds = array<i64: 1, 512>}, {pipeline_mode = #tpu.pipeline_mode<synchronous>, transform_indices = @transform_9, window_bounds = array<i64: 1, 512>}, {pipeline_mode = #tpu.pipeline_mode<synchronous>, transform_indices = @transform_10, window_bounds = array<i64: 512, 1536>}, {pipeline_mode = #tpu.pipeline_mode<synchronous>, transform_indices = @transform_11, window_bounds = array<i64: 512, 128>}, {pipeline_mode = #tpu.pipeline_mode<synchronous>, transform_indices = @transform_12, window_bounds = array<i64: 1, 128>}, {pipeline_mode = #tpu.pipeline_mode<synchronous>, transform_indices = @transform_13, window_bounds = array<i64: 128, 128>}, {pipeline_mode = #tpu.pipeline_mode<synchronous>, transform_indices = @transform_14, window_bounds = array<i64: 1, 128>}, {transform_indices = @transform_15, window_bounds = array<i64: 16, 128>}, {transform_indices = @transform_16, window_bounds = array<i64: 1, 1, 128>}, {transform_indices = @transform_17, window_bounds = array<i64: 1, 1, 128>}]} {
    %c0 = arith.constant 0 : index
    %0 = memref.load %arg1[%c0] : memref<4xf32, #tpu.memory_space<smem>>
    %c1 = arith.constant 1 : index
    %1 = memref.load %arg1[%c1] : memref<4xf32, #tpu.memory_space<smem>>
    %c2 = arith.constant 2 : index
    %2 = memref.load %arg1[%c2] : memref<4xf32, #tpu.memory_space<smem>>
    %c3 = arith.constant 3 : index
    %3 = memref.load %arg1[%c3] : memref<4xf32, #tpu.memory_space<smem>>
    %c0_0 = arith.constant 0 : index
    %c0_1 = arith.constant 0 : index
    %4 = vector.load %arg2[%c0_0, %c0_1] : memref<16x128xbf16, #tpu.memory_space<vmem>>, vector<16x128xbf16>
    %c0_2 = arith.constant 0 : index
    %c0_3 = arith.constant 0 : index
    %5 = vector.load %arg3[%c0_2, %c0_3] : memref<128x512xbf16, #tpu.memory_space<vmem>>, vector<128x512xbf16>
    %cst = arith.constant dense<0.000000e+00> : vector<16x512xf32>
    %6 = tpu.matmul %4, %5, %cst {dimension_numbers = #tpu.dot_dimension_numbers<[1], [0], [0], [1], [0, 0, 1, 1], [], []>} : vector<16x128xbf16>, vector<128x512xbf16>, vector<16x512xf32> -> vector<16x512xf32>
    %c0_4 = arith.constant 0 : index
    %c0_5 = arith.constant 0 : index
    %7 = vector.load %arg4[%c0_4, %c0_5] : memref<1x512xf32, #tpu.memory_space<vmem>>, vector<1x512xf32>
    %8 = vector.broadcast %7 : vector<1x512xf32> to vector<16x512xf32>
    %9 = arith.addf %6, %8 : vector<16x512xf32>
    %cst_6 = arith.constant dense<0.000000e+00> : vector<16xf32>
    %10 = vector.multi_reduction <add>, %9, %cst_6 [1] : vector<16x512xf32> to vector<16xf32>
    %11 = vector.shape_cast %10 : vector<16xf32> to vector<16x1xf32>
    %cst_7 = arith.constant 3.906250e-03 : f32
    %12 = vector.broadcast %cst_7 : f32 to vector<16x1xf32>
    %13 = arith.mulf %11, %12 : vector<16x1xf32>
    %14 = arith.mulf %9, %9 : vector<16x512xf32>
    %cst_8 = arith.constant dense<0.000000e+00> : vector<16xf32>
    %15 = vector.multi_reduction <add>, %14, %cst_8 [1] : vector<16x512xf32> to vector<16xf32>
    %16 = vector.shape_cast %15 : vector<16xf32> to vector<16x1xf32>
    %cst_9 = arith.constant 3.906250e-03 : f32
    %17 = vector.broadcast %cst_9 : f32 to vector<16x1xf32>
    %18 = arith.mulf %16, %17 : vector<16x1xf32>
    %19 = arith.mulf %13, %13 : vector<16x1xf32>
    %20 = arith.subf %18, %19 : vector<16x1xf32>
    %cst_10 = arith.constant 0.000000e+00 : f32
    %21 = vector.broadcast %cst_10 : f32 to vector<16x1xf32>
    %22 = arith.maximumf %20, %21 : vector<16x1xf32>
    %23 = vector.broadcast %13 : vector<16x1xf32> to vector<16x512xf32>
    %24 = arith.subf %9, %23 : vector<16x512xf32>
    %cst_11 = arith.constant 9.99999974E-6 : f32
    %25 = vector.broadcast %cst_11 : f32 to vector<16x1xf32>
    %26 = arith.addf %22, %25 : vector<16x1xf32>
    %27 = math.rsqrt %26 : vector<16x1xf32>
    %28 = vector.broadcast %27 : vector<16x1xf32> to vector<16x512xf32>
    %29 = arith.mulf %24, %28 : vector<16x512xf32>
    %c0_12 = arith.constant 0 : index
    %c0_13 = arith.constant 0 : index
    %30 = vector.load %arg5[%c0_12, %c0_13] : memref<1x512xf32, #tpu.memory_space<vmem>>, vector<1x512xf32>
    %31 = vector.broadcast %30 : vector<1x512xf32> to vector<16x512xf32>
    %32 = arith.mulf %29, %31 : vector<16x512xf32>
    %c0_14 = arith.constant 0 : index
    %c0_15 = arith.constant 0 : index
    %33 = vector.load %arg6[%c0_14, %c0_15] : memref<1x512xf32, #tpu.memory_space<vmem>>, vector<1x512xf32>
    %34 = vector.broadcast %33 : vector<1x512xf32> to vector<16x512xf32>
    %35 = arith.addf %32, %34 : vector<16x512xf32>
    %cst_16 = arith.constant 0.000000e+00 : f32
    %36 = vector.broadcast %cst_16 : f32 to vector<16x512xf32>
    %37 = arith.cmpf oge, %35, %36 : vector<16x512xf32>
    %38 = vector.broadcast %0 : f32 to vector<16x512xf32>
    %39 = arith.mulf %38, %35 : vector<16x512xf32>
    %40 = arith.select %37, %35, %39 : vector<16x512xi1>, vector<16x512xf32>
    %41 = arith.truncf %40 : vector<16x512xf32> to vector<16x512xbf16>
    %c0_17 = arith.constant 0 : index
    %c0_18 = arith.constant 0 : index
    %42 = vector.load %arg7[%c0_17, %c0_18] : memref<512x512xbf16, #tpu.memory_space<vmem>>, vector<512x512xbf16>
    %cst_19 = arith.constant dense<0.000000e+00> : vector<16x512xf32>
    %43 = tpu.matmul %41, %42, %cst_19 {dimension_numbers = #tpu.dot_dimension_numbers<[1], [0], [0], [1], [0, 0, 1, 1], [], []>} : vector<16x512xbf16>, vector<512x512xbf16>, vector<16x512xf32> -> vector<16x512xf32>
    %c0_20 = arith.constant 0 : index
    %c0_21 = arith.constant 0 : index
    %44 = vector.load %arg8[%c0_20, %c0_21] : memref<1x512xf32, #tpu.memory_space<vmem>>, vector<1x512xf32>
    %45 = vector.broadcast %44 : vector<1x512xf32> to vector<16x512xf32>
    %46 = arith.addf %43, %45 : vector<16x512xf32>
    %cst_22 = arith.constant dense<0.000000e+00> : vector<16xf32>
    %47 = vector.multi_reduction <add>, %46, %cst_22 [1] : vector<16x512xf32> to vector<16xf32>
    %48 = vector.shape_cast %47 : vector<16xf32> to vector<16x1xf32>
    %cst_23 = arith.constant 3.906250e-03 : f32
    %49 = vector.broadcast %cst_23 : f32 to vector<16x1xf32>
    %50 = arith.mulf %48, %49 : vector<16x1xf32>
    %51 = arith.mulf %46, %46 : vector<16x512xf32>
    %cst_24 = arith.constant dense<0.000000e+00> : vector<16xf32>
    %52 = vector.multi_reduction <add>, %51, %cst_24 [1] : vector<16x512xf32> to vector<16xf32>
    %53 = vector.shape_cast %52 : vector<16xf32> to vector<16x1xf32>
    %cst_25 = arith.constant 3.906250e-03 : f32
    %54 = vector.broadcast %cst_25 : f32 to vector<16x1xf32>
    %55 = arith.mulf %53, %54 : vector<16x1xf32>
    %56 = arith.mulf %50, %50 : vector<16x1xf32>
    %57 = arith.subf %55, %56 : vector<16x1xf32>
    %cst_26 = arith.constant 0.000000e+00 : f32
    %58 = vector.broadcast %cst_26 : f32 to vector<16x1xf32>
    %59 = arith.maximumf %57, %58 : vector<16x1xf32>
    %60 = vector.broadcast %50 : vector<16x1xf32> to vector<16x512xf32>
    %61 = arith.subf %46, %60 : vector<16x512xf32>
    %cst_27 = arith.constant 9.99999974E-6 : f32
    %62 = vector.broadcast %cst_27 : f32 to vector<16x1xf32>
    %63 = arith.addf %59, %62 : vector<16x1xf32>
    %64 = math.rsqrt %63 : vector<16x1xf32>
    %65 = vector.broadcast %64 : vector<16x1xf32> to vector<16x512xf32>
    %66 = arith.mulf %61, %65 : vector<16x512xf32>
    %c0_28 = arith.constant 0 : index
    %c0_29 = arith.constant 0 : index
    %67 = vector.load %arg9[%c0_28, %c0_29] : memref<1x512xf32, #tpu.memory_space<vmem>>, vector<1x512xf32>
    %68 = vector.broadcast %67 : vector<1x512xf32> to vector<16x512xf32>
    %69 = arith.mulf %66, %68 : vector<16x512xf32>
    %c0_30 = arith.constant 0 : index
    %c0_31 = arith.constant 0 : index
    %70 = vector.load %arg10[%c0_30, %c0_31] : memref<1x512xf32, #tpu.memory_space<vmem>>, vector<1x512xf32>
    %71 = vector.broadcast %70 : vector<1x512xf32> to vector<16x512xf32>
    %72 = arith.addf %69, %71 : vector<16x512xf32>
    %cst_32 = arith.constant 0.000000e+00 : f32
    %73 = vector.broadcast %cst_32 : f32 to vector<16x512xf32>
    %74 = arith.cmpf oge, %72, %73 : vector<16x512xf32>
    %75 = vector.broadcast %1 : f32 to vector<16x512xf32>
    %76 = arith.mulf %75, %72 : vector<16x512xf32>
    %77 = arith.select %74, %72, %76 : vector<16x512xi1>, vector<16x512xf32>
    %78 = arith.truncf %77 : vector<16x512xf32> to vector<16x512xbf16>
    %c0_33 = arith.constant 0 : index
    %c0_34 = arith.constant 0 : index
    %79 = vector.load %arg11[%c0_33, %c0_34] : memref<512x1536xbf16, #tpu.memory_space<vmem>>, vector<512x1536xbf16>
    %cst_35 = arith.constant dense<0.000000e+00> : vector<16x1536xf32>
    %80 = tpu.matmul %78, %79, %cst_35 {dimension_numbers = #tpu.dot_dimension_numbers<[1], [0], [0], [1], [0, 0, 1, 1], [], []>} : vector<16x512xbf16>, vector<512x1536xbf16>, vector<16x1536xf32> -> vector<16x1536xf32>
    %81 = vector.extract_strided_slice %80 {offsets = [0, 0], sizes = [16, 512], strides = [1, 1]} : vector<16x1536xf32> to vector<16x512xf32>
    %82 = vector.extract_strided_slice %80 {offsets = [0, 512], sizes = [16, 512], strides = [1, 1]} : vector<16x1536xf32> to vector<16x512xf32>
    %83 = vector.extract_strided_slice %80 {offsets = [0, 1024], sizes = [16, 512], strides = [1, 1]} : vector<16x1536xf32> to vector<16x512xf32>
    %84 = vector.extract_strided_slice %81 {offsets = [0, 0], sizes = [16, 128], strides = [1, 1]} : vector<16x512xf32> to vector<16x128xf32>
    %85 = vector.extract_strided_slice %82 {offsets = [0, 0], sizes = [16, 128], strides = [1, 1]} : vector<16x512xf32> to vector<16x128xf32>
    %86 = arith.mulf %84, %85 : vector<16x128xf32>
    %cst_36 = arith.constant dense<0.000000e+00> : vector<16xf32>
    %87 = vector.multi_reduction <add>, %86, %cst_36 [1] : vector<16x128xf32> to vector<16xf32>
    %88 = vector.shape_cast %87 : vector<16xf32> to vector<16x1xf32>
    %89 = vector.extract_strided_slice %81 {offsets = [0, 0], sizes = [16, 128], strides = [1, 1]} : vector<16x512xf32> to vector<16x128xf32>
    %90 = vector.extract_strided_slice %82 {offsets = [0, 128], sizes = [16, 128], strides = [1, 1]} : vector<16x512xf32> to vector<16x128xf32>
    %91 = arith.mulf %89, %90 : vector<16x128xf32>
    %cst_37 = arith.constant dense<0.000000e+00> : vector<16xf32>
    %92 = vector.multi_reduction <add>, %91, %cst_37 [1] : vector<16x128xf32> to vector<16xf32>
    %93 = vector.shape_cast %92 : vector<16xf32> to vector<16x1xf32>
    %94 = vector.extract_strided_slice %81 {offsets = [0, 0], sizes = [16, 128], strides = [1, 1]} : vector<16x512xf32> to vector<16x128xf32>
    %95 = vector.extract_strided_slice %82 {offsets = [0, 256], sizes = [16, 128], strides = [1, 1]} : vector<16x512xf32> to vector<16x128xf32>
    %96 = arith.mulf %94, %95 : vector<16x128xf32>
    %cst_38 = arith.constant dense<0.000000e+00> : vector<16xf32>
    %97 = vector.multi_reduction <add>, %96, %cst_38 [1] : vector<16x128xf32> to vector<16xf32>
    %98 = vector.shape_cast %97 : vector<16xf32> to vector<16x1xf32>
    %99 = vector.extract_strided_slice %81 {offsets = [0, 0], sizes = [16, 128], strides = [1, 1]} : vector<16x512xf32> to vector<16x128xf32>
    %100 = vector.extract_strided_slice %82 {offsets = [0, 384], sizes = [16, 128], strides = [1, 1]} : vector<16x512xf32> to vector<16x128xf32>
    %101 = arith.mulf %99, %100 : vector<16x128xf32>
    %cst_39 = arith.constant dense<0.000000e+00> : vector<16xf32>
    %102 = vector.multi_reduction <add>, %101, %cst_39 [1] : vector<16x128xf32> to vector<16xf32>
    %103 = vector.shape_cast %102 : vector<16xf32> to vector<16x1xf32>
    %104 = vector.extract_strided_slice %81 {offsets = [0, 128], sizes = [16, 128], strides = [1, 1]} : vector<16x512xf32> to vector<16x128xf32>
    %105 = vector.extract_strided_slice %82 {offsets = [0, 0], sizes = [16, 128], strides = [1, 1]} : vector<16x512xf32> to vector<16x128xf32>
    %106 = arith.mulf %104, %105 : vector<16x128xf32>
    %cst_40 = arith.constant dense<0.000000e+00> : vector<16xf32>
    %107 = vector.multi_reduction <add>, %106, %cst_40 [1] : vector<16x128xf32> to vector<16xf32>
    %108 = vector.shape_cast %107 : vector<16xf32> to vector<16x1xf32>
    %109 = vector.extract_strided_slice %81 {offsets = [0, 128], sizes = [16, 128], strides = [1, 1]} : vector<16x512xf32> to vector<16x128xf32>
    %110 = vector.extract_strided_slice %82 {offsets = [0, 128], sizes = [16, 128], strides = [1, 1]} : vector<16x512xf32> to vector<16x128xf32>
    %111 = arith.mulf %109, %110 : vector<16x128xf32>
    %cst_41 = arith.constant dense<0.000000e+00> : vector<16xf32>
    %112 = vector.multi_reduction <add>, %111, %cst_41 [1] : vector<16x128xf32> to vector<16xf32>
    %113 = vector.shape_cast %112 : vector<16xf32> to vector<16x1xf32>
    %114 = vector.extract_strided_slice %81 {offsets = [0, 128], sizes = [16, 128], strides = [1, 1]} : vector<16x512xf32> to vector<16x128xf32>
    %115 = vector.extract_strided_slice %82 {offsets = [0, 256], sizes = [16, 128], strides = [1, 1]} : vector<16x512xf32> to vector<16x128xf32>
    %116 = arith.mulf %114, %115 : vector<16x128xf32>
    %cst_42 = arith.constant dense<0.000000e+00> : vector<16xf32>
    %117 = vector.multi_reduction <add>, %116, %cst_42 [1] : vector<16x128xf32> to vector<16xf32>
    %118 = vector.shape_cast %117 : vector<16xf32> to vector<16x1xf32>
    %119 = vector.extract_strided_slice %81 {offsets = [0, 128], sizes = [16, 128], strides = [1, 1]} : vector<16x512xf32> to vector<16x128xf32>
    %120 = vector.extract_strided_slice %82 {offsets = [0, 384], sizes = [16, 128], strides = [1, 1]} : vector<16x512xf32> to vector<16x128xf32>
    %121 = arith.mulf %119, %120 : vector<16x128xf32>
    %cst_43 = arith.constant dense<0.000000e+00> : vector<16xf32>
    %122 = vector.multi_reduction <add>, %121, %cst_43 [1] : vector<16x128xf32> to vector<16xf32>
    %123 = vector.shape_cast %122 : vector<16xf32> to vector<16x1xf32>
    %124 = vector.extract_strided_slice %81 {offsets = [0, 256], sizes = [16, 128], strides = [1, 1]} : vector<16x512xf32> to vector<16x128xf32>
    %125 = vector.extract_strided_slice %82 {offsets = [0, 0], sizes = [16, 128], strides = [1, 1]} : vector<16x512xf32> to vector<16x128xf32>
    %126 = arith.mulf %124, %125 : vector<16x128xf32>
    %cst_44 = arith.constant dense<0.000000e+00> : vector<16xf32>
    %127 = vector.multi_reduction <add>, %126, %cst_44 [1] : vector<16x128xf32> to vector<16xf32>
    %128 = vector.shape_cast %127 : vector<16xf32> to vector<16x1xf32>
    %129 = vector.extract_strided_slice %81 {offsets = [0, 256], sizes = [16, 128], strides = [1, 1]} : vector<16x512xf32> to vector<16x128xf32>
    %130 = vector.extract_strided_slice %82 {offsets = [0, 128], sizes = [16, 128], strides = [1, 1]} : vector<16x512xf32> to vector<16x128xf32>
    %131 = arith.mulf %129, %130 : vector<16x128xf32>
    %cst_45 = arith.constant dense<0.000000e+00> : vector<16xf32>
    %132 = vector.multi_reduction <add>, %131, %cst_45 [1] : vector<16x128xf32> to vector<16xf32>
    %133 = vector.shape_cast %132 : vector<16xf32> to vector<16x1xf32>
    %134 = vector.extract_strided_slice %81 {offsets = [0, 256], sizes = [16, 128], strides = [1, 1]} : vector<16x512xf32> to vector<16x128xf32>
    %135 = vector.extract_strided_slice %82 {offsets = [0, 256], sizes = [16, 128], strides = [1, 1]} : vector<16x512xf32> to vector<16x128xf32>
    %136 = arith.mulf %134, %135 : vector<16x128xf32>
    %cst_46 = arith.constant dense<0.000000e+00> : vector<16xf32>
    %137 = vector.multi_reduction <add>, %136, %cst_46 [1] : vector<16x128xf32> to vector<16xf32>
    %138 = vector.shape_cast %137 : vector<16xf32> to vector<16x1xf32>
    %139 = vector.extract_strided_slice %81 {offsets = [0, 256], sizes = [16, 128], strides = [1, 1]} : vector<16x512xf32> to vector<16x128xf32>
    %140 = vector.extract_strided_slice %82 {offsets = [0, 384], sizes = [16, 128], strides = [1, 1]} : vector<16x512xf32> to vector<16x128xf32>
    %141 = arith.mulf %139, %140 : vector<16x128xf32>
    %cst_47 = arith.constant dense<0.000000e+00> : vector<16xf32>
    %142 = vector.multi_reduction <add>, %141, %cst_47 [1] : vector<16x128xf32> to vector<16xf32>
    %143 = vector.shape_cast %142 : vector<16xf32> to vector<16x1xf32>
    %144 = vector.extract_strided_slice %81 {offsets = [0, 384], sizes = [16, 128], strides = [1, 1]} : vector<16x512xf32> to vector<16x128xf32>
    %145 = vector.extract_strided_slice %82 {offsets = [0, 0], sizes = [16, 128], strides = [1, 1]} : vector<16x512xf32> to vector<16x128xf32>
    %146 = arith.mulf %144, %145 : vector<16x128xf32>
    %cst_48 = arith.constant dense<0.000000e+00> : vector<16xf32>
    %147 = vector.multi_reduction <add>, %146, %cst_48 [1] : vector<16x128xf32> to vector<16xf32>
    %148 = vector.shape_cast %147 : vector<16xf32> to vector<16x1xf32>
    %149 = vector.extract_strided_slice %81 {offsets = [0, 384], sizes = [16, 128], strides = [1, 1]} : vector<16x512xf32> to vector<16x128xf32>
    %150 = vector.extract_strided_slice %82 {offsets = [0, 128], sizes = [16, 128], strides = [1, 1]} : vector<16x512xf32> to vector<16x128xf32>
    %151 = arith.mulf %149, %150 : vector<16x128xf32>
    %cst_49 = arith.constant dense<0.000000e+00> : vector<16xf32>
    %152 = vector.multi_reduction <add>, %151, %cst_49 [1] : vector<16x128xf32> to vector<16xf32>
    %153 = vector.shape_cast %152 : vector<16xf32> to vector<16x1xf32>
    %154 = vector.extract_strided_slice %81 {offsets = [0, 384], sizes = [16, 128], strides = [1, 1]} : vector<16x512xf32> to vector<16x128xf32>
    %155 = vector.extract_strided_slice %82 {offsets = [0, 256], sizes = [16, 128], strides = [1, 1]} : vector<16x512xf32> to vector<16x128xf32>
    %156 = arith.mulf %154, %155 : vector<16x128xf32>
    %cst_50 = arith.constant dense<0.000000e+00> : vector<16xf32>
    %157 = vector.multi_reduction <add>, %156, %cst_50 [1] : vector<16x128xf32> to vector<16xf32>
    %158 = vector.shape_cast %157 : vector<16xf32> to vector<16x1xf32>
    %159 = vector.extract_strided_slice %81 {offsets = [0, 384], sizes = [16, 128], strides = [1, 1]} : vector<16x512xf32> to vector<16x128xf32>
    %160 = vector.extract_strided_slice %82 {offsets = [0, 384], sizes = [16, 128], strides = [1, 1]} : vector<16x512xf32> to vector<16x128xf32>
    %161 = arith.mulf %159, %160 : vector<16x128xf32>
    %cst_51 = arith.constant dense<0.000000e+00> : vector<16xf32>
    %162 = vector.multi_reduction <add>, %161, %cst_51 [1] : vector<16x128xf32> to vector<16xf32>
    %163 = vector.shape_cast %162 : vector<16xf32> to vector<16x1xf32>
    %164 = arith.maximumf %88, %108 : vector<16x1xf32>
    %165 = arith.maximumf %164, %128 : vector<16x1xf32>
    %166 = arith.maximumf %165, %148 : vector<16x1xf32>
    %167 = arith.subf %88, %166 : vector<16x1xf32>
    %168 = math.exp %167 : vector<16x1xf32>
    %169 = arith.subf %108, %166 : vector<16x1xf32>
    %170 = math.exp %169 : vector<16x1xf32>
    %171 = arith.subf %128, %166 : vector<16x1xf32>
    %172 = math.exp %171 : vector<16x1xf32>
    %173 = arith.subf %148, %166 : vector<16x1xf32>
    %174 = math.exp %173 : vector<16x1xf32>
    %175 = arith.addf %168, %170 : vector<16x1xf32>
    %176 = arith.addf %175, %172 : vector<16x1xf32>
    %177 = arith.addf %176, %174 : vector<16x1xf32>
    %178 = tpu.reciprocal %177 {approx = true} : vector<16x1xf32> -> vector<16x1xf32>
    %179 = arith.mulf %168, %178 : vector<16x1xf32>
    %180 = vector.extract_strided_slice %83 {offsets = [0, 0], sizes = [16, 128], strides = [1, 1]} : vector<16x512xf32> to vector<16x128xf32>
    %181 = vector.broadcast %179 : vector<16x1xf32> to vector<16x128xf32>
    %182 = arith.mulf %181, %180 : vector<16x128xf32>
    %183 = arith.mulf %170, %178 : vector<16x1xf32>
    %184 = vector.extract_strided_slice %83 {offsets = [0, 128], sizes = [16, 128], strides = [1, 1]} : vector<16x512xf32> to vector<16x128xf32>
    %185 = vector.broadcast %183 : vector<16x1xf32> to vector<16x128xf32>
    %186 = arith.mulf %185, %184 : vector<16x128xf32>
    %187 = arith.addf %182, %186 : vector<16x128xf32>
    %188 = arith.mulf %172, %178 : vector<16x1xf32>
    %189 = vector.extract_strided_slice %83 {offsets = [0, 256], sizes = [16, 128], strides = [1, 1]} : vector<16x512xf32> to vector<16x128xf32>
    %190 = vector.broadcast %188 : vector<16x1xf32> to vector<16x128xf32>
    %191 = arith.mulf %190, %189 : vector<16x128xf32>
    %192 = arith.addf %187, %191 : vector<16x128xf32>
    %193 = arith.mulf %174, %178 : vector<16x1xf32>
    %194 = vector.extract_strided_slice %83 {offsets = [0, 384], sizes = [16, 128], strides = [1, 1]} : vector<16x512xf32> to vector<16x128xf32>
    %195 = vector.broadcast %193 : vector<16x1xf32> to vector<16x128xf32>
    %196 = arith.mulf %195, %194 : vector<16x128xf32>
    %197 = arith.addf %192, %196 : vector<16x128xf32>
    %198 = vector.broadcast %2 : f32 to vector<16x128xf32>
    %199 = arith.mulf %198, %197 : vector<16x128xf32>
    %200 = vector.extract_strided_slice %77 {offsets = [0, 0], sizes = [16, 128], strides = [1, 1]} : vector<16x512xf32> to vector<16x128xf32>
    %201 = arith.addf %199, %200 : vector<16x128xf32>
    %202 = arith.maximumf %93, %113 : vector<16x1xf32>
    %203 = arith.maximumf %202, %133 : vector<16x1xf32>
    %204 = arith.maximumf %203, %153 : vector<16x1xf32>
    %205 = arith.subf %93, %204 : vector<16x1xf32>
    %206 = math.exp %205 : vector<16x1xf32>
    %207 = arith.subf %113, %204 : vector<16x1xf32>
    %208 = math.exp %207 : vector<16x1xf32>
    %209 = arith.subf %133, %204 : vector<16x1xf32>
    %210 = math.exp %209 : vector<16x1xf32>
    %211 = arith.subf %153, %204 : vector<16x1xf32>
    %212 = math.exp %211 : vector<16x1xf32>
    %213 = arith.addf %206, %208 : vector<16x1xf32>
    %214 = arith.addf %213, %210 : vector<16x1xf32>
    %215 = arith.addf %214, %212 : vector<16x1xf32>
    %216 = tpu.reciprocal %215 {approx = true} : vector<16x1xf32> -> vector<16x1xf32>
    %217 = arith.mulf %206, %216 : vector<16x1xf32>
    %218 = vector.extract_strided_slice %83 {offsets = [0, 0], sizes = [16, 128], strides = [1, 1]} : vector<16x512xf32> to vector<16x128xf32>
    %219 = vector.broadcast %217 : vector<16x1xf32> to vector<16x128xf32>
    %220 = arith.mulf %219, %218 : vector<16x128xf32>
    %221 = arith.mulf %208, %216 : vector<16x1xf32>
    %222 = vector.extract_strided_slice %83 {offsets = [0, 128], sizes = [16, 128], strides = [1, 1]} : vector<16x512xf32> to vector<16x128xf32>
    %223 = vector.broadcast %221 : vector<16x1xf32> to vector<16x128xf32>
    %224 = arith.mulf %223, %222 : vector<16x128xf32>
    %225 = arith.addf %220, %224 : vector<16x128xf32>
    %226 = arith.mulf %210, %216 : vector<16x1xf32>
    %227 = vector.extract_strided_slice %83 {offsets = [0, 256], sizes = [16, 128], strides = [1, 1]} : vector<16x512xf32> to vector<16x128xf32>
    %228 = vector.broadcast %226 : vector<16x1xf32> to vector<16x128xf32>
    %229 = arith.mulf %228, %227 : vector<16x128xf32>
    %230 = arith.addf %225, %229 : vector<16x128xf32>
    %231 = arith.mulf %212, %216 : vector<16x1xf32>
    %232 = vector.extract_strided_slice %83 {offsets = [0, 384], sizes = [16, 128], strides = [1, 1]} : vector<16x512xf32> to vector<16x128xf32>
    %233 = vector.broadcast %231 : vector<16x1xf32> to vector<16x128xf32>
    %234 = arith.mulf %233, %232 : vector<16x128xf32>
    %235 = arith.addf %230, %234 : vector<16x128xf32>
    %236 = vector.broadcast %2 : f32 to vector<16x128xf32>
    %237 = arith.mulf %236, %235 : vector<16x128xf32>
    %238 = vector.extract_strided_slice %77 {offsets = [0, 128], sizes = [16, 128], strides = [1, 1]} : vector<16x512xf32> to vector<16x128xf32>
    %239 = arith.addf %237, %238 : vector<16x128xf32>
    %240 = arith.maximumf %98, %118 : vector<16x1xf32>
    %241 = arith.maximumf %240, %138 : vector<16x1xf32>
    %242 = arith.maximumf %241, %158 : vector<16x1xf32>
    %243 = arith.subf %98, %242 : vector<16x1xf32>
    %244 = math.exp %243 : vector<16x1xf32>
    %245 = arith.subf %118, %242 : vector<16x1xf32>
    %246 = math.exp %245 : vector<16x1xf32>
    %247 = arith.subf %138, %242 : vector<16x1xf32>
    %248 = math.exp %247 : vector<16x1xf32>
    %249 = arith.subf %158, %242 : vector<16x1xf32>
    %250 = math.exp %249 : vector<16x1xf32>
    %251 = arith.addf %244, %246 : vector<16x1xf32>
    %252 = arith.addf %251, %248 : vector<16x1xf32>
    %253 = arith.addf %252, %250 : vector<16x1xf32>
    %254 = tpu.reciprocal %253 {approx = true} : vector<16x1xf32> -> vector<16x1xf32>
    %255 = arith.mulf %244, %254 : vector<16x1xf32>
    %256 = vector.extract_strided_slice %83 {offsets = [0, 0], sizes = [16, 128], strides = [1, 1]} : vector<16x512xf32> to vector<16x128xf32>
    %257 = vector.broadcast %255 : vector<16x1xf32> to vector<16x128xf32>
    %258 = arith.mulf %257, %256 : vector<16x128xf32>
    %259 = arith.mulf %246, %254 : vector<16x1xf32>
    %260 = vector.extract_strided_slice %83 {offsets = [0, 128], sizes = [16, 128], strides = [1, 1]} : vector<16x512xf32> to vector<16x128xf32>
    %261 = vector.broadcast %259 : vector<16x1xf32> to vector<16x128xf32>
    %262 = arith.mulf %261, %260 : vector<16x128xf32>
    %263 = arith.addf %258, %262 : vector<16x128xf32>
    %264 = arith.mulf %248, %254 : vector<16x1xf32>
    %265 = vector.extract_strided_slice %83 {offsets = [0, 256], sizes = [16, 128], strides = [1, 1]} : vector<16x512xf32> to vector<16x128xf32>
    %266 = vector.broadcast %264 : vector<16x1xf32> to vector<16x128xf32>
    %267 = arith.mulf %266, %265 : vector<16x128xf32>
    %268 = arith.addf %263, %267 : vector<16x128xf32>
    %269 = arith.mulf %250, %254 : vector<16x1xf32>
    %270 = vector.extract_strided_slice %83 {offsets = [0, 384], sizes = [16, 128], strides = [1, 1]} : vector<16x512xf32> to vector<16x128xf32>
    %271 = vector.broadcast %269 : vector<16x1xf32> to vector<16x128xf32>
    %272 = arith.mulf %271, %270 : vector<16x128xf32>
    %273 = arith.addf %268, %272 : vector<16x128xf32>
    %274 = vector.broadcast %2 : f32 to vector<16x128xf32>
    %275 = arith.mulf %274, %273 : vector<16x128xf32>
    %276 = vector.extract_strided_slice %77 {offsets = [0, 256], sizes = [16, 128], strides = [1, 1]} : vector<16x512xf32> to vector<16x128xf32>
    %277 = arith.addf %275, %276 : vector<16x128xf32>
    %278 = arith.maximumf %103, %123 : vector<16x1xf32>
    %279 = arith.maximumf %278, %143 : vector<16x1xf32>
    %280 = arith.maximumf %279, %163 : vector<16x1xf32>
    %281 = arith.subf %103, %280 : vector<16x1xf32>
    %282 = math.exp %281 : vector<16x1xf32>
    %283 = arith.subf %123, %280 : vector<16x1xf32>
    %284 = math.exp %283 : vector<16x1xf32>
    %285 = arith.subf %143, %280 : vector<16x1xf32>
    %286 = math.exp %285 : vector<16x1xf32>
    %287 = arith.subf %163, %280 : vector<16x1xf32>
    %288 = math.exp %287 : vector<16x1xf32>
    %289 = arith.addf %282, %284 : vector<16x1xf32>
    %290 = arith.addf %289, %286 : vector<16x1xf32>
    %291 = arith.addf %290, %288 : vector<16x1xf32>
    %292 = tpu.reciprocal %291 {approx = true} : vector<16x1xf32> -> vector<16x1xf32>
    %293 = arith.mulf %282, %292 : vector<16x1xf32>
    %294 = vector.extract_strided_slice %83 {offsets = [0, 0], sizes = [16, 128], strides = [1, 1]} : vector<16x512xf32> to vector<16x128xf32>
    %295 = vector.broadcast %293 : vector<16x1xf32> to vector<16x128xf32>
    %296 = arith.mulf %295, %294 : vector<16x128xf32>
    %297 = arith.mulf %284, %292 : vector<16x1xf32>
    %298 = vector.extract_strided_slice %83 {offsets = [0, 128], sizes = [16, 128], strides = [1, 1]} : vector<16x512xf32> to vector<16x128xf32>
    %299 = vector.broadcast %297 : vector<16x1xf32> to vector<16x128xf32>
    %300 = arith.mulf %299, %298 : vector<16x128xf32>
    %301 = arith.addf %296, %300 : vector<16x128xf32>
    %302 = arith.mulf %286, %292 : vector<16x1xf32>
    %303 = vector.extract_strided_slice %83 {offsets = [0, 256], sizes = [16, 128], strides = [1, 1]} : vector<16x512xf32> to vector<16x128xf32>
    %304 = vector.broadcast %302 : vector<16x1xf32> to vector<16x128xf32>
    %305 = arith.mulf %304, %303 : vector<16x128xf32>
    %306 = arith.addf %301, %305 : vector<16x128xf32>
    %307 = arith.mulf %288, %292 : vector<16x1xf32>
    %308 = vector.extract_strided_slice %83 {offsets = [0, 384], sizes = [16, 128], strides = [1, 1]} : vector<16x512xf32> to vector<16x128xf32>
    %309 = vector.broadcast %307 : vector<16x1xf32> to vector<16x128xf32>
    %310 = arith.mulf %309, %308 : vector<16x128xf32>
    %311 = arith.addf %306, %310 : vector<16x128xf32>
    %312 = vector.broadcast %2 : f32 to vector<16x128xf32>
    %313 = arith.mulf %312, %311 : vector<16x128xf32>
    %314 = vector.extract_strided_slice %77 {offsets = [0, 384], sizes = [16, 128], strides = [1, 1]} : vector<16x512xf32> to vector<16x128xf32>
    %315 = arith.addf %313, %314 : vector<16x128xf32>
    %316 = tpu.concatenate %201, %239, %277, %315 in 1 : vector<16x128xf32>, vector<16x128xf32>, vector<16x128xf32>, vector<16x128xf32> -> vector<16x512xf32>
    %317 = arith.truncf %316 : vector<16x512xf32> to vector<16x512xbf16>
    %c0_52 = arith.constant 0 : index
    %c0_53 = arith.constant 0 : index
    %318 = vector.load %arg12[%c0_52, %c0_53] : memref<512x128xbf16, #tpu.memory_space<vmem>>, vector<512x128xbf16>
    %cst_54 = arith.constant dense<0.000000e+00> : vector<16x128xf32>
    %319 = tpu.matmul %317, %318, %cst_54 {dimension_numbers = #tpu.dot_dimension_numbers<[1], [0], [0], [1], [0, 0, 1, 1], [], []>} : vector<16x512xbf16>, vector<512x128xbf16>, vector<16x128xf32> -> vector<16x128xf32>
    %c0_55 = arith.constant 0 : index
    %c0_56 = arith.constant 0 : index
    %320 = vector.load %arg13[%c0_55, %c0_56] : memref<1x128xf32, #tpu.memory_space<vmem>>, vector<1x128xf32>
    %321 = vector.broadcast %320 : vector<1x128xf32> to vector<16x128xf32>
    %322 = arith.addf %319, %321 : vector<16x128xf32>
    %cst_57 = arith.constant 0.000000e+00 : f32
    %323 = vector.broadcast %cst_57 : f32 to vector<16x128xf32>
    %324 = arith.cmpf oge, %322, %323 : vector<16x128xf32>
    %325 = vector.broadcast %3 : f32 to vector<16x128xf32>
    %326 = arith.mulf %325, %322 : vector<16x128xf32>
    %327 = arith.select %324, %322, %326 : vector<16x128xi1>, vector<16x128xf32>
    %328 = arith.truncf %327 : vector<16x128xf32> to vector<16x128xbf16>
    %c0_58 = arith.constant 0 : index
    %c0_59 = arith.constant 0 : index
    %329 = vector.load %arg14[%c0_58, %c0_59] : memref<128x128xbf16, #tpu.memory_space<vmem>>, vector<128x128xbf16>
    %cst_60 = arith.constant dense<0.000000e+00> : vector<16x128xf32>
    %330 = tpu.matmul %328, %329, %cst_60 {dimension_numbers = #tpu.dot_dimension_numbers<[1], [0], [0], [1], [0, 0, 1, 1], [], []>} : vector<16x128xbf16>, vector<128x128xbf16>, vector<16x128xf32> -> vector<16x128xf32>
    %c0_61 = arith.constant 0 : index
    %c0_62 = arith.constant 0 : index
    %331 = vector.load %arg15[%c0_61, %c0_62] : memref<1x128xf32, #tpu.memory_space<vmem>>, vector<1x128xf32>
    %332 = vector.broadcast %331 : vector<1x128xf32> to vector<16x128xf32>
    %333 = arith.addf %330, %332 : vector<16x128xf32>
    %334 = arith.truncf %333 : vector<16x128xf32> to vector<16x128xbf16>
    %c0_63 = arith.constant 0 : index
    %c0_64 = arith.constant 0 : index
    %335 = vector.load %arg16[%c0_63, %c0_64] : memref<16x128xbf16, #tpu.memory_space<vmem>>, vector<16x128xbf16>
    tpu.vector_store %arg16[%c0_63, %c0_64], %334 {strides = array<i32>} : memref<16x128xbf16, #tpu.memory_space<vmem>>, vector<16x128xbf16>,
    %336 = tpu.iota {dimensions = array<i32: 0>} : vector<16x128xi32>
    %c16_i32 = arith.constant 16 : i32
    %337 = arith.muli %arg0, %c16_i32 : i32
    %338 = vector.broadcast %337 : i32 to vector<16x128xi32>
    %339 = arith.addi %336, %338 : vector<16x128xi32>
    %c16_i32_65 = arith.constant 16 : i32
    %340 = vector.broadcast %c16_i32_65 : i32 to vector<16x128xi32>
    %341 = arith.cmpi slt, %339, %340 : vector<16x128xi32>
    %cst_66 = arith.constant 0.000000e+00 : f32
    %342 = vector.broadcast %cst_66 : f32 to vector<16x128xf32>
    %343 = arith.select %341, %333, %342 : vector<16x128xi1>, vector<16x128xf32>
    %cst_67 = arith.constant dense<0.000000e+00> : vector<128xf32>
    %344 = vector.multi_reduction <add>, %343, %cst_67 [0] : vector<16x128xf32> to vector<128xf32>
    %345 = vector.shape_cast %344 : vector<128xf32> to vector<1x128xf32>
    %346 = vector.shape_cast %345 : vector<1x128xf32> to vector<1x1x128xf32>
    %c0_68 = arith.constant 0 : index
    %c0_69 = arith.constant 0 : index
    %c0_70 = arith.constant 0 : index
    %347 = vector.load %arg17[%c0_68, %c0_69, %c0_70] : memref<1x1x128xf32, #tpu.memory_space<vmem>>, vector<1x1x128xf32>
    tpu.vector_store %arg17[%c0_68, %c0_69, %c0_70], %346 {strides = array<i32>} : memref<1x1x128xf32, #tpu.memory_space<vmem>>, vector<1x1x128xf32>,
    %348 = arith.mulf %343, %343 : vector<16x128xf32>
    %cst_71 = arith.constant dense<0.000000e+00> : vector<128xf32>
    %349 = vector.multi_reduction <add>, %348, %cst_71 [0] : vector<16x128xf32> to vector<128xf32>
    %350 = vector.shape_cast %349 : vector<128xf32> to vector<1x128xf32>
    %351 = vector.shape_cast %350 : vector<1x128xf32> to vector<1x1x128xf32>
    %c0_72 = arith.constant 0 : index
    %c0_73 = arith.constant 0 : index
    %c0_74 = arith.constant 0 : index
    %352 = vector.load %arg18[%c0_72, %c0_73, %c0_74] : memref<1x1x128xf32, #tpu.memory_space<vmem>>, vector<1x1x128xf32>
    tpu.vector_store %arg18[%c0_72, %c0_73, %c0_74], %351 {strides = array<i32>} : memref<1x1x128xf32, #tpu.memory_space<vmem>>, vector<1x1x128xf32>,
    return
  }
  func.func @transform_0(%arg0: i32) -> i32 {
    %c0_i32 = arith.constant 0 : i32
    %c0_i32_0 = arith.constant 0 : i32
    return %c0_i32 : i32
  }
  func.func @transform_1(%arg0: i32) -> (i32, i32) {
    %c0_i32 = arith.constant 0 : i32
    %c0_i32_0 = arith.constant 0 : i32
    return %arg0, %c0_i32 : i32, i32
  }
  func.func @transform_2(%arg0: i32) -> (i32, i32) {
    %c0_i32 = arith.constant 0 : i32
    %c0_i32_0 = arith.constant 0 : i32
    %c0_i32_1 = arith.constant 0 : i32
    return %c0_i32, %c0_i32_0 : i32, i32
  }
  func.func @transform_3(%arg0: i32) -> (i32, i32) {
    %c0_i32 = arith.constant 0 : i32
    %c0_i32_0 = arith.constant 0 : i32
    %c0_i32_1 = arith.constant 0 : i32
    return %c0_i32, %c0_i32_0 : i32, i32
  }
  func.func @transform_4(%arg0: i32) -> (i32, i32) {
    %c0_i32 = arith.constant 0 : i32
    %c0_i32_0 = arith.constant 0 : i32
    %c0_i32_1 = arith.constant 0 : i32
    return %c0_i32, %c0_i32_0 : i32, i32
  }
  func.func @transform_5(%arg0: i32) -> (i32, i32) {
    %c0_i32 = arith.constant 0 : i32
    %c0_i32_0 = arith.constant 0 : i32
    %c0_i32_1 = arith.constant 0 : i32
    return %c0_i32, %c0_i32_0 : i32, i32
  }
  func.func @transform_6(%arg0: i32) -> (i32, i32) {
    %c0_i32 = arith.constant 0 : i32
    %c0_i32_0 = arith.constant 0 : i32
    %c0_i32_1 = arith.constant 0 : i32
    return %c0_i32, %c0_i32_0 : i32, i32
  }
  func.func @transform_7(%arg0: i32) -> (i32, i32) {
    %c0_i32 = arith.constant 0 : i32
    %c0_i32_0 = arith.constant 0 : i32
    %c0_i32_1 = arith.constant 0 : i32
    return %c0_i32, %c0_i32_0 : i32, i32
  }
  func.func @transform_8(%arg0: i32) -> (i32, i32) {
    %c0_i32 = arith.constant 0 : i32
    %c0_i32_0 = arith.constant 0 : i32
    %c0_i32_1 = arith.constant 0 : i32
    return %c0_i32, %c0_i32_0 : i32, i32
  }
  func.func @transform_9(%arg0: i32) -> (i32, i32) {
    %c0_i32 = arith.constant 0 : i32
    %c0_i32_0 = arith.constant 0 : i32
    %c0_i32_1 = arith.constant 0 : i32
    return %c0_i32, %c0_i32_0 : i32, i32
  }
  func.func @transform_10(%arg0: i32) -> (i32, i32) {
    %c0_i32 = arith.constant 0 : i32
    %c0_i32_0 = arith.constant 0 : i32
    %c0_i32_1 = arith.constant 0 : i32
    return %c0_i32, %c0_i32_0 : i32, i32
  }
  func.func @transform_11(%arg0: i32) -> (i32, i32) {
    %c0_i32 = arith.constant 0 : i32
    %c0_i32_0 = arith.constant 0 : i32
    %c0_i32_1 = arith.constant 0 : i32
    return %c0_i32, %c0_i32_0 : i32, i32
  }
  func.func @transform_12(%arg0: i32) -> (i32, i32) {
    %c0_i32 = arith.constant 0 : i32
    %c0_i32_0 = arith.constant 0 : i32
    %c0_i32_1 = arith.constant 0 : i32
    return %c0_i32, %c0_i32_0 : i32, i32
  }
  func.func @transform_13(%arg0: i32) -> (i32, i32) {
    %c0_i32 = arith.constant 0 : i32
    %c0_i32_0 = arith.constant 0 : i32
    %c0_i32_1 = arith.constant 0 : i32
    return %c0_i32, %c0_i32_0 : i32, i32
  }
  func.func @transform_14(%arg0: i32) -> (i32, i32) {
    %c0_i32 = arith.constant 0 : i32
    %c0_i32_0 = arith.constant 0 : i32
    %c0_i32_1 = arith.constant 0 : i32
    return %c0_i32, %c0_i32_0 : i32, i32
  }
  func.func @transform_15(%arg0: i32) -> (i32, i32) {
    %c0_i32 = arith.constant 0 : i32
    %c0_i32_0 = arith.constant 0 : i32
    return %arg0, %c0_i32 : i32, i32
  }
  func.func @transform_16(%arg0: i32) -> (i32, i32, i32) {
    %c0_i32 = arith.constant 0 : i32
    %c0_i32_0 = arith.constant 0 : i32
    %c0_i32_1 = arith.constant 0 : i32
    return %arg0, %c0_i32, %c0_i32_0 : i32, i32, i32
  }
  func.func @transform_17(%arg0: i32) -> (i32, i32, i32) {
    %c0_i32 = arith.constant 0 : i32
    %c0_i32_0 = arith.constant 0 : i32
    %c0_i32_1 = arith.constant 0 : i32
    return %arg0, %c0_i32, %c0_i32_0 : i32, i32, i32
  }
}

</mosaic_0001>

<llo_original>
// kernel: tpu_custom_call.1
$region0: #{tpu_custom_call.1}
  #allocation0 [shape = 'u32[]', space=smem, size = 0x4, offset = 0x4, fixed_abs, tag = 'smem constant byte address 0x4 - core index']
  #allocation1 [shape = 'u32[144,128]{1,0:T(1,128)}', space=vmem, size = 0x12000, scoped, tag = 'internal scratch']
  %s0 = inlined_call_operand.hbm [shape: f32[4], index: 0, kind: input, shape index: {}]
  %s1 = inlined_call_operand.hbm [shape: bf16[16,128], index: 1, kind: input, shape index: {}]
  %s2 = inlined_call_operand.hbm [shape: bf16[128,512], index: 2, kind: input, shape index: {}]
  %s3 = inlined_call_operand.hbm [shape: f32[1,512], index: 3, kind: input, shape index: {}]
  %s4 = inlined_call_operand.hbm [shape: f32[1,512], index: 4, kind: input, shape index: {}]
  %s5 = inlined_call_operand.hbm [shape: f32[1,512], index: 5, kind: input, shape index: {}]
  %s6 = inlined_call_operand.hbm [shape: bf16[512,512], index: 6, kind: input, shape index: {}]
  %s7 = inlined_call_operand.hbm [shape: f32[1,512], index: 7, kind: input, shape index: {}]
  %s8 = inlined_call_operand.hbm [shape: f32[1,512], index: 8, kind: input, shape index: {}]
  %s9 = inlined_call_operand.hbm [shape: f32[1,512], index: 9, kind: input, shape index: {}]
  %s10 = inlined_call_operand.hbm [shape: bf16[512,1536], index: 10, kind: input, shape index: {}]
  %s11 = inlined_call_operand.hbm [shape: bf16[512,128], index: 11, kind: input, shape index: {}]
  %s12 = inlined_call_operand.hbm [shape: f32[1,128], index: 12, kind: input, shape index: {}]
  %s13 = inlined_call_operand.hbm [shape: bf16[128,128], index: 13, kind: input, shape index: {}]
  %s14 = inlined_call_operand.hbm [shape: f32[1,128], index: 14, kind: input, shape index: {}]
  %s15 = inlined_call_operand.hbm [shape: bf16[16,128], index: 15, kind: output, shape index: {0}]
  %s16 = inlined_call_operand.hbm [shape: f32[1,1,128], index: 16, kind: output, shape index: {1}]
  %s17 = inlined_call_operand.hbm [shape: f32[1,1,128], index: 17, kind: output, shape index: {2}]
  %18 = xla_tuple %s15, %s16, %s17
  %s19 = sld [smem:[#allocation0]]
  $region146: #{tpu_custom_call.1} parent=0
    _
  %s21 = ssub.s32 1, %s19
  %s22 = scalar_select 0, %s21, %s19
  $region1: #{tpu_custom_call.1} parent=0
    #allocation2 [shape = 'u8[512]{0}', space=smem, size = 0x200, scoped, tag = 'input window, operand 0, single buffered']
    #allocation3 [shape = 's32[1]{0}', space=sflag, size = 0x4, scoped, tag = 'scoped memory for tpu_custom_call.1']
    #allocation4 [shape = 's32[1]{0}', space=sflag, size = 0x4, scoped, tag = 'scoped memory for tpu_custom_call.1']
    #allocation5 [shape = 's32[1]{0}', space=sflag, size = 0x4, scoped, tag = 'scoped memory for tpu_custom_call.1']
    #allocation6 [shape = 'u8[4096]{0}', space=vmem, size = 0x1000, scoped, tag = 'input window, operand 1, single buffered']
    #allocation7 [shape = 'u8[131072]{0}', space=vmem, size = 0x20000, scoped, tag = 'input window, operand 2, single buffered']
    #allocation8 [shape = 's32[1]{0}', space=sflag, size = 0x4, scoped, tag = 'scoped memory for tpu_custom_call.1']
    #allocation9 [shape = 'u8[2048]{0}', space=vmem, size = 0x800, scoped, tag = 'input window, operand 3, single buffered']
    #allocation10 [shape = 'u8[2048]{0}', space=vmem, size = 0x800, scoped, tag = 'input window, operand 4, single buffered']
    #allocation11 [shape = 's32[1]{0}', space=sflag, size = 0x4, scoped, tag = 'scoped memory for tpu_custom_call.1']
    #allocation12 [shape = 'u8[2048]{0}', space=vmem, size = 0x800, scoped, tag = 'input window, operand 5, single buffered']
    #allocation13 [shape = 'u8[524288]{0}', space=vmem, size = 0x80000, scoped, tag = 'input window, operand 6, single buffered']
    #allocation14 [shape = 's32[1]{0}', space=sflag, size = 0x4, scoped, tag = 'scoped memory for tpu_custom_call.1']
    #allocation15 [shape = 'u8[2048]{0}', space=vmem, size = 0x800, scoped, tag = 'input window, operand 7, single buffered']
    #allocation16 [shape = 'u8[2048]{0}', space=vmem, size = 0x800, scoped, tag = 'input window, operand 8, single buffered']
    #allocation17 [shape = 's32[1]{0}', space=sflag, size = 0x4, scoped, tag = 'scoped memory for tpu_custom_call.1']
    #allocation18 [shape = 'u8[2048]{0}', space=vmem, size = 0x800, scoped, tag = 'input window, operand 9, single buffered']
    #allocation19 [shape = 'u8[1572864]{0}', space=vmem, size = 0x180000, scoped, tag = 'input window, operand 10, single buffered']
    #allocation20 [shape = 's32[1]{0}', space=sflag, size = 0x4, scoped, tag = 'scoped memory for tpu_custom_call.1']
    #allocation21 [shape = 'u8[131072]{0}', space=vmem, size = 0x20000, scoped, tag = 'input window, operand 11, single buffered']
    #allocation22 [shape = 'u8[512]{0}', space=vmem, size = 0x400, scoped, tag = 'input window, operand 12, single buffered']
    #allocation23 [shape = 's32[1]{0}', space=sflag, size = 0x4, scoped, tag = 'scoped memory for tpu_custom_call.1']
    #allocation24 [shape = 'u8[32768]{0}', space=vmem, size = 0x8000, scoped, tag = 'input window, operand 13, single buffered']
    #allocation25 [shape = 'u8[512]{0}', space=vmem, size = 0x400, scoped, tag = 'input window, operand 14, single buffered']
    #allocation26 [shape = 's32[1]{0}', space=sflag, size = 0x4, scoped, tag = 'scoped memory for tpu_custom_call.1']
    #allocation27 [shape = 'u8[4096]{0}', space=vmem, size = 0x1000, scoped, tag = 'output window, operand 0, single buffered']
    #allocation28 [shape = 'u8[512]{0}', space=vmem, size = 0x400, scoped, tag = 'output window, operand 1, single buffered']
    #allocation29 [shape = 's32[1]{0}', space=sflag, size = 0x4, scoped, tag = 'scoped memory for tpu_custom_call.1']
    #allocation30 [shape = 'u8[512]{0}', space=vmem, size = 0x400, scoped, tag = 'output window, operand 2, single buffered']
    %23 = vsyncpa [#allocation5], 0
    %24 = vsyncpa [#allocation3], 0
    %25 = vsyncpa [#allocation8], 0
    %26 = vsyncpa [#allocation11], 0
    %27 = vsyncpa [#allocation14], 0
    %28 = vsyncpa [#allocation17], 0
    %29 = vsyncpa [#allocation20], 0
    %30 = vsyncpa [#allocation23], 0
    %31 = vsyncpa [#allocation26], 0
    %32 = vsyncpa [#allocation4], 0
    %33 = vsyncpa [#allocation29], 0
    // Predicated region
    $region2: #{tpu_custom_call.1} parent=1 // pred_check
      _
    $region3: #{tpu_custom_call.1} parent=1 // pred_check_branch
      %35 = sbr.rel (0) target = $region5
    $region4: #{tpu_custom_call.1} parent=1 // pred_region
      %s37 = ssub.s32 16, 16
      %38 = vsyncadd [#allocation5], %s37
      %41 = dma.hbm_to_smem %s0, 16, [#allocation2], [#allocation5]
    $region5: #{tpu_custom_call.1} parent=1 // pred_fallthru
      _
    // Predicated region
    $region6: #{tpu_custom_call.1} parent=1 // pred_check
      _
    $region7: #{tpu_custom_call.1} parent=1 // pred_check_branch
      %43 = sbr.rel (0) target = $region9
    $region8: #{tpu_custom_call.1} parent=1 // pred_region
      %s45 = ssub.s32 128, 128
      %46 = vsyncadd [#allocation3], %s45
      %s47 = sshll.u32 [#allocation6], 4
      %s48 = int_to_ptr.vmem [resolvable:$true] %s47
      %53 = dma.hbm_to_vmem [thread:$0]  %s1, 128, %s48, [#allocation3], 64, 64, 4
    $region9: #{tpu_custom_call.1} parent=1 // pred_fallthru
      _
    // Predicated region
    $region10: #{tpu_custom_call.1} parent=1 // pred_check
      _
    $region11: #{tpu_custom_call.1} parent=1 // pred_check_branch
      %55 = sbr.rel (0) target = $region13
    $region12: #{tpu_custom_call.1} parent=1 // pred_region
      %s57 = ssub.s32 4096, 4096
      %58 = vsyncadd [#allocation8], %s57
      %s59 = sshll.u32 [#allocation7], 4
      %s60 = int_to_ptr.vmem [resolvable:$true] %s59
      %65 = dma.hbm_to_vmem [thread:$0]  %s2, 4096, %s60, [#allocation8], 256, 256, 16
    $region13: #{tpu_custom_call.1} parent=1 // pred_fallthru
      _
    // Predicated region
    $region14: #{tpu_custom_call.1} parent=1 // pred_check
      _
    $region15: #{tpu_custom_call.1} parent=1 // pred_check_branch
      %67 = sbr.rel (0) target = $region17
    $region16: #{tpu_custom_call.1} parent=1 // pred_region
      %s69 = ssub.s32 64, 64
      %70 = vsyncadd [#allocation8], %s69
      %s72 = sshll.u32 [#allocation9], 4
      %s73 = int_to_ptr.vmem [resolvable:$true] %s72
      %75 = dma.hbm_to_vmem [thread:$0]  %s3, 64, %s73, [#allocation8]
    $region17: #{tpu_custom_call.1} parent=1 // pred_fallthru
      _
    // Predicated region
    $region18: #{tpu_custom_call.1} parent=1 // pred_check
      _
    $region19: #{tpu_custom_call.1} parent=1 // pred_check_branch
      %77 = sbr.rel (0) target = $region21
    $region20: #{tpu_custom_call.1} parent=1 // pred_region
      %s79 = ssub.s32 64, 64
      %80 = vsyncadd [#allocation11], %s79
      %s82 = sshll.u32 [#allocation10], 4
      %s83 = int_to_ptr.vmem [resolvable:$true] %s82
      %85 = dma.hbm_to_vmem [thread:$0]  %s4, 64, %s83, [#allocation11]
    $region21: #{tpu_custom_call.1} parent=1 // pred_fallthru
      _
    // Predicated region
    $region22: #{tpu_custom_call.1} parent=1 // pred_check
      _
    $region23: #{tpu_custom_call.1} parent=1 // pred_check_branch
      %87 = sbr.rel (0) target = $region25
    $region24: #{tpu_custom_call.1} parent=1 // pred_region
      %s89 = ssub.s32 64, 64
      %90 = vsyncadd [#allocation11], %s89
      %s92 = sshll.u32 [#allocation12], 4
      %s93 = int_to_ptr.vmem [resolvable:$true] %s92
      %95 = dma.hbm_to_vmem [thread:$0]  %s5, 64, %s93, [#allocation11]
    $region25: #{tpu_custom_call.1} parent=1 // pred_fallthru
      _
    // Predicated region
    $region26: #{tpu_custom_call.1} parent=1 // pred_check
      _
    $region27: #{tpu_custom_call.1} parent=1 // pred_check_branch
      %97 = sbr.rel (0) target = $region29
    $region28: #{tpu_custom_call.1} parent=1 // pred_region
      %s99 = ssub.s32 16384, 16384
      %100 = vsyncadd [#allocation14], %s99
      %s101 = sshll.u32 [#allocation13], 4
      %s102 = int_to_ptr.vmem [resolvable:$true] %s101
      %107 = dma.hbm_to_vmem [thread:$0]  %s6, 16384, %s102, [#allocation14], 256, 256, 16
    $region29: #{tpu_custom_call.1} parent=1 // pred_fallthru
      _
    // Predicated region
    $region30: #{tpu_custom_call.1} parent=1 // pred_check
      _
    $region31: #{tpu_custom_call.1} parent=1 // pred_check_branch
      %109 = sbr.rel (0) target = $region33
    $region32: #{tpu_custom_call.1} parent=1 // pred_region
      %s111 = ssub.s32 64, 64
      %112 = vsyncadd [#allocation14], %s111
      %s114 = sshll.u32 [#allocation15], 4
      %s115 = int_to_ptr.vmem [resolvable:$true] %s114
      %117 = dma.hbm_to_vmem [thread:$0]  %s7, 64, %s115, [#allocation14]
    $region33: #{tpu_custom_call.1} parent=1 // pred_fallthru
      _
    // Predicated region
    $region34: #{tpu_custom_call.1} parent=1 // pred_check
      _
    $region35: #{tpu_custom_call.1} parent=1 // pred_check_branch
      %119 = sbr.rel (0) target = $region37
    $region36: #{tpu_custom_call.1} parent=1 // pred_region
      %s121 = ssub.s32 64, 64
      %122 = vsyncadd [#allocation17], %s121
      %s124 = sshll.u32 [#allocation16], 4
      %s125 = int_to_ptr.vmem [resolvable:$true] %s124
      %127 = dma.hbm_to_vmem [thread:$0]  %s8, 64, %s125, [#allocation17]
    $region37: #{tpu_custom_call.1} parent=1 // pred_fallthru
      _
    // Predicated region
    $region38: #{tpu_custom_call.1} parent=1 // pred_check
      _
    $region39: #{tpu_custom_call.1} parent=1 // pred_check_branch
      %129 = sbr.rel (0) target = $region41
    $region40: #{tpu_custom_call.1} parent=1 // pred_region
      %s131 = ssub.s32 64, 64
      %132 = vsyncadd [#allocation17], %s131
      %s134 = sshll.u32 [#allocation18], 4
      %s135 = int_to_ptr.vmem [resolvable:$true] %s134
      %137 = dma.hbm_to_vmem [thread:$0]  %s9, 64, %s135, [#allocation17]
    $region41: #{tpu_custom_call.1} parent=1 // pred_fallthru
      _
    // Predicated region
    $region42: #{tpu_custom_call.1} parent=1 // pred_check
      _
    $region43: #{tpu_custom_call.1} parent=1 // pred_check_branch
      %139 = sbr.rel (0) target = $region45
    $region44: #{tpu_custom_call.1} parent=1 // pred_region
      %s141 = ssub.s32 49152, 49152
      %142 = vsyncadd [#allocation20], %s141
      %s143 = sshll.u32 [#allocation19], 4
      %s144 = int_to_ptr.vmem [resolvable:$true] %s143
      %149 = dma.hbm_to_vmem [thread:$0]  %s10, 49152, %s144, [#allocation20], 768, 768, 48
    $region45: #{tpu_custom_call.1} parent=1 // pred_fallthru
      _
    // Predicated region
    $region46: #{tpu_custom_call.1} parent=1 // pred_check
      _
    $region47: #{tpu_custom_call.1} parent=1 // pred_check_branch
      %151 = sbr.rel (0) target = $region49
    $region48: #{tpu_custom_call.1} parent=1 // pred_region
      %s153 = ssub.s32 4096, 4096
      %154 = vsyncadd [#allocation20], %s153
      %s155 = sshll.u32 [#allocation21], 4
      %s156 = int_to_ptr.vmem [resolvable:$true] %s155
      %161 = dma.hbm_to_vmem [thread:$0]  %s11, 4096, %s156, [#allocation20], 64, 64, 4
    $region49: #{tpu_custom_call.1} parent=1 // pred_fallthru
      _
    // Predicated region
    $region50: #{tpu_custom_call.1} parent=1 // pred_check
      _
    $region51: #{tpu_custom_call.1} parent=1 // pred_check_branch
      %163 = sbr.rel (0) target = $region53
    $region52: #{tpu_custom_call.1} parent=1 // pred_region
      %s165 = ssub.s32 16, 16
      %166 = vsyncadd [#allocation23], %s165
      %s168 = sshll.u32 [#allocation22], 4
      %s169 = int_to_ptr.vmem [resolvable:$true] %s168
      %171 = dma.hbm_to_vmem [thread:$0]  %s12, 16, %s169, [#allocation23]
    $region53: #{tpu_custom_call.1} parent=1 // pred_fallthru
      _
    // Predicated region
    $region54: #{tpu_custom_call.1} parent=1 // pred_check
      _
    $region55: #{tpu_custom_call.1} parent=1 // pred_check_branch
      %173 = sbr.rel (0) target = $region57
    $region56: #{tpu_custom_call.1} parent=1 // pred_region
      %s175 = ssub.s32 1024, 1024
      %176 = vsyncadd [#allocation23], %s175
      %s177 = sshll.u32 [#allocation24], 4
      %s178 = int_to_ptr.vmem [resolvable:$true] %s177
      %183 = dma.hbm_to_vmem [thread:$0]  %s13, 1024, %s178, [#allocation23], 64, 64, 4
    $region57: #{tpu_custom_call.1} parent=1 // pred_fallthru
      _
    // Predicated region
    $region58: #{tpu_custom_call.1} parent=1 // pred_check
      _
    $region59: #{tpu_custom_call.1} parent=1 // pred_check_branch
      %185 = sbr.rel (0) target = $region61
    $region60: #{tpu_custom_call.1} parent=1 // pred_region
      %s187 = ssub.s32 16, 16
      %188 = vsyncadd [#allocation26], %s187
      %s190 = sshll.u32 [#allocation25], 4
      %s191 = int_to_ptr.vmem [resolvable:$true] %s190
      %193 = dma.hbm_to_vmem [thread:$0]  %s14, 16, %s191, [#allocation26]
    $region61: #{tpu_custom_call.1} parent=1 // pred_fallthru
      _
    // Predicated region
    $region62: #{tpu_custom_call.1} parent=1 // pred_check
      _
    $region63: #{tpu_custom_call.1} parent=1 // pred_check_branch
      %195 = sbr.rel (0) target = $region65
    $region64: #{tpu_custom_call.1} parent=1 // pred_region
      %196 = dma.done [#allocation5], 16
    $region65: #{tpu_custom_call.1} parent=1 // pred_fallthru
      _
    // Predicated region
    $region66: #{tpu_custom_call.1} parent=1 // pred_check
      _
    $region67: #{tpu_custom_call.1} parent=1 // pred_check_branch
      %198 = sbr.rel (0) target = $region69
    $region68: #{tpu_custom_call.1} parent=1 // pred_region
      %199 = dma.done [#allocation3], 128
    $region69: #{tpu_custom_call.1} parent=1 // pred_fallthru
      _
    // Predicated region
    $region70: #{tpu_custom_call.1} parent=1 // pred_check
      _
    $region71: #{tpu_custom_call.1} parent=1 // pred_check_branch
      %201 = sbr.rel (0) target = $region73
    $region72: #{tpu_custom_call.1} parent=1 // pred_region
      %202 = dma.done [#allocation8], 4096
    $region73: #{tpu_custom_call.1} parent=1 // pred_fallthru
      _
    // Predicated region
    $region74: #{tpu_custom_call.1} parent=1 // pred_check
      _
    $region75: #{tpu_custom_call.1} parent=1 // pred_check_branch
      %204 = sbr.rel (0) target = $region77
    $region76: #{tpu_custom_call.1} parent=1 // pred_region
      %205 = dma.done [#allocation8], 64
    $region77: #{tpu_custom_call.1} parent=1 // pred_fallthru
      _
    // Predicated region
    $region78: #{tpu_custom_call.1} parent=1 // pred_check
      _
    $region79: #{tpu_custom_call.1} parent=1 // pred_check_branch
      %207 = sbr.rel (0) target = $region81
    $region80: #{tpu_custom_call.1} parent=1 // pred_region
      %208 = dma.done [#allocation11], 64
    $region81: #{tpu_custom_call.1} parent=1 // pred_fallthru
      _
    // Predicated region
    $region82: #{tpu_custom_call.1} parent=1 // pred_check
      _
    $region83: #{tpu_custom_call.1} parent=1 // pred_check_branch
      %210 = sbr.rel (0) target = $region85
    $region84: #{tpu_custom_call.1} parent=1 // pred_region
      %211 = dma.done [#allocation11], 64
    $region85: #{tpu_custom_call.1} parent=1 // pred_fallthru
      _
    // Predicated region
    $region86: #{tpu_custom_call.1} parent=1 // pred_check
      _
    $region87: #{tpu_custom_call.1} parent=1 // pred_check_branch
      %213 = sbr.rel (0) target = $region89
    $region88: #{tpu_custom_call.1} parent=1 // pred_region
      %214 = dma.done [#allocation14], 16384
    $region89: #{tpu_custom_call.1} parent=1 // pred_fallthru
      _
    // Predicated region
    $region90: #{tpu_custom_call.1} parent=1 // pred_check
      _
    $region91: #{tpu_custom_call.1} parent=1 // pred_check_branch
      %216 = sbr.rel (0) target = $region93
    $region92: #{tpu_custom_call.1} parent=1 // pred_region
      %217 = dma.done [#allocation14], 64
    $region93: #{tpu_custom_call.1} parent=1 // pred_fallthru
      _
    // Predicated region
    $region94: #{tpu_custom_call.1} parent=1 // pred_check
      _
    $region95: #{tpu_custom_call.1} parent=1 // pred_check_branch
      %219 = sbr.rel (0) target = $region97
    $region96: #{tpu_custom_call.1} parent=1 // pred_region
      %220 = dma.done [#allocation17], 64
    $region97: #{tpu_custom_call.1} parent=1 // pred_fallthru
      _
    // Predicated region
    $region98: #{tpu_custom_call.1} parent=1 // pred_check
      _
    $region99: #{tpu_custom_call.1} parent=1 // pred_check_branch
      %222 = sbr.rel (0) target = $region101
    $region100: #{tpu_custom_call.1} parent=1 // pred_region
      %223 = dma.done [#allocation17], 64
    $region101: #{tpu_custom_call.1} parent=1 // pred_fallthru
      _
    // Predicated region
    $region102: #{tpu_custom_call.1} parent=1 // pred_check
      _
    $region103: #{tpu_custom_call.1} parent=1 // pred_check_branch
      %225 = sbr.rel (0) target = $region105
    $region104: #{tpu_custom_call.1} parent=1 // pred_region
      %226 = dma.done [#allocation20], 49152
    $region105: #{tpu_custom_call.1} parent=1 // pred_fallthru
      _
    // Predicated region
    $region106: #{tpu_custom_call.1} parent=1 // pred_check
      _
    $region107: #{tpu_custom_call.1} parent=1 // pred_check_branch
      %228 = sbr.rel (0) target = $region109
    $region108: #{tpu_custom_call.1} parent=1 // pred_region
      %229 = dma.done [#allocation20], 4096
    $region109: #{tpu_custom_call.1} parent=1 // pred_fallthru
      _
    // Predicated region
    $region110: #{tpu_custom_call.1} parent=1 // pred_check
      _
    $region111: #{tpu_custom_call.1} parent=1 // pred_check_branch
      %231 = sbr.rel (0) target = $region113
    $region112: #{tpu_custom_call.1} parent=1 // pred_region
      %232 = dma.done [#allocation23], 16
    $region113: #{tpu_custom_call.1} parent=1 // pred_fallthru
      _
    // Predicated region
    $region114: #{tpu_custom_call.1} parent=1 // pred_check
      _
    $region115: #{tpu_custom_call.1} parent=1 // pred_check_branch
      %234 = sbr.rel (0) target = $region117
    $region116: #{tpu_custom_call.1} parent=1 // pred_region
      %235 = dma.done [#allocation23], 1024
    $region117: #{tpu_custom_call.1} parent=1 // pred_fallthru
      _
    // Predicated region
    $region118: #{tpu_custom_call.1} parent=1 // pred_check
      _
    $region119: #{tpu_custom_call.1} parent=1 // pred_check_branch
      %237 = sbr.rel (0) target = $region121
    $region120: #{tpu_custom_call.1} parent=1 // pred_region
      %238 = dma.done [#allocation26], 16
    $region121: #{tpu_custom_call.1} parent=1 // pred_fallthru
      _
    %239 = sfence
    %s241 = sld [smem:[#allocation2]]
    %s242 = sld [smem:[#allocation2 + $0x1]]
    %s243 = sld [smem:[#allocation2 + $0x2]]
    %s244 = sld [smem:[#allocation2 + $0x3]]
    %v245 = vld [vmem:[#allocation6] sm:$0xf]
    %v246 = vld [vmem:[#allocation6 + $0x4] sm:$0xf]
    %v247 = vld [vmem:[#allocation7] sm:$0xff]
    %v248 = vld [vmem:[#allocation7 + $0x8] sm:$0xff]
    %v249 = vld [vmem:[#allocation7 + $0x10] sm:$0xff]
    %v250 = vld [vmem:[#allocation7 + $0x18] sm:$0xff]
    %v251 = vld [vmem:[#allocation7 + $0x20] sm:$0xff]
    %v252 = vld [vmem:[#allocation7 + $0x28] sm:$0xff]
    %v253 = vld [vmem:[#allocation7 + $0x30] sm:$0xff]
    %v254 = vld [vmem:[#allocation7 + $0x38] sm:$0xff]
    %v255 = vld [vmem:[#allocation7 + $0x40] sm:$0xff]
    %v256 = vld [vmem:[#allocation7 + $0x48] sm:$0xff]
    %v257 = vld [vmem:[#allocation7 + $0x50] sm:$0xff]
    %v258 = vld [vmem:[#allocation7 + $0x58] sm:$0xff]
    %v259 = vld [vmem:[#allocation7 + $0x60] sm:$0xff]
    %v260 = vld [vmem:[#allocation7 + $0x68] sm:$0xff]
    %v261 = vld [vmem:[#allocation7 + $0x70] sm:$0xff]
    %v262 = vld [vmem:[#allocation7 + $0x78] sm:$0xff]
    %v263 = vld [vmem:[#allocation7 + $0x80] sm:$0xff]
    %v264 = vld [vmem:[#allocation7 + $0x88] sm:$0xff]
    %v265 = vld [vmem:[#allocation7 + $0x90] sm:$0xff]
    %v266 = vld [vmem:[#allocation7 + $0x98] sm:$0xff]
    %v267 = vld [vmem:[#allocation7 + $0xa0] sm:$0xff]
    %v268 = vld [vmem:[#allocation7 + $0xa8] sm:$0xff]
    %v269 = vld [vmem:[#allocation7 + $0xb0] sm:$0xff]
    %v270 = vld [vmem:[#allocation7 + $0xb8] sm:$0xff]
    %v271 = vld [vmem:[#allocation7 + $0xc0] sm:$0xff]
    %v272 = vld [vmem:[#allocation7 + $0xc8] sm:$0xff]
    %v273 = vld [vmem:[#allocation7 + $0xd0] sm:$0xff]
    %v274 = vld [vmem:[#allocation7 + $0xd8] sm:$0xff]
    %v275 = vld [vmem:[#allocation7 + $0xe0] sm:$0xff]
    %v276 = vld [vmem:[#allocation7 + $0xe8] sm:$0xff]
    %v277 = vld [vmem:[#allocation7 + $0xf0] sm:$0xff]
    %v278 = vld [vmem:[#allocation7 + $0xf8] sm:$0xff]
    %v279 = vld [vmem:[#allocation9] sm:$0xf]
    %v281 = vlaneseq
    %v282 = vshrl.u32 %v281, 7
    %v283 = vsub.s32 0, %v282
    %v284 = vrot.slane %v279, %v283
    %v285 = vlaneseq
    %v286 = vshrl.u32 %v285, 7
    %v287 = vsub.s32 1, %v286
    %v288 = vrot.slane %v279, %v287
    %v289 = vlaneseq
    %v290 = vshrl.u32 %v289, 7
    %v291 = vsub.s32 2, %v290
    %v292 = vrot.slane %v279, %v291
    %v293 = vlaneseq
    %v294 = vshrl.u32 %v293, 7
    %v295 = vsub.s32 3, %v294
    %v296 = vrot.slane %v279, %v295
    %v303 = vunpack.c.l.b16 %v245
    %v304 = vunpack.c.l.b16 %v246
    %v305 = vpack.c.b16 %v304, %v303
    %v339 = vunpack.c.l.b16 %v247
    %v340 = vunpack.c.h.b16 %v247
    %v341 = vunpack.c.l.b16 %v248
    %v342 = vunpack.c.h.b16 %v248
    %v343 = vunpack.c.l.b16 %v249
    %v344 = vunpack.c.h.b16 %v249
    %v345 = vunpack.c.l.b16 %v250
    %v346 = vunpack.c.h.b16 %v250
    %v347 = vunpack.c.l.b16 %v251
    %v348 = vunpack.c.h.b16 %v251
    %v349 = vunpack.c.l.b16 %v252
    %v350 = vunpack.c.h.b16 %v252
    %v351 = vunpack.c.l.b16 %v253
    %v352 = vunpack.c.h.b16 %v253
    %v353 = vunpack.c.l.b16 %v254
    %v354 = vunpack.c.h.b16 %v254
    %v355 = vunpack.c.l.b16 %v255
    %v356 = vunpack.c.h.b16 %v255
    %v357 = vunpack.c.l.b16 %v256
    %v358 = vunpack.c.h.b16 %v256
    %v359 = vunpack.c.l.b16 %v257
    %v360 = vunpack.c.h.b16 %v257
    %v361 = vunpack.c.l.b16 %v258
    %v362 = vunpack.c.h.b16 %v258
    %v363 = vunpack.c.l.b16 %v259
    %v364 = vunpack.c.h.b16 %v259
    %v365 = vunpack.c.l.b16 %v260
    %v366 = vunpack.c.h.b16 %v260
    %v367 = vunpack.c.l.b16 %v261
    %v368 = vunpack.c.h.b16 %v261
    %v369 = vunpack.c.l.b16 %v262
    %v370 = vunpack.c.h.b16 %v262
    %v371 = vunpack.c.l.b16 %v263
    %v372 = vunpack.c.h.b16 %v263
    %v373 = vunpack.c.l.b16 %v264
    %v374 = vunpack.c.h.b16 %v264
    %v375 = vunpack.c.l.b16 %v265
    %v376 = vunpack.c.h.b16 %v265
    %v377 = vunpack.c.l.b16 %v266
    %v378 = vunpack.c.h.b16 %v266
    %v379 = vunpack.c.l.b16 %v267
    %v380 = vunpack.c.h.b16 %v267
    %v381 = vunpack.c.l.b16 %v268
    %v382 = vunpack.c.h.b16 %v268
    %v383 = vunpack.c.l.b16 %v269
    %v384 = vunpack.c.h.b16 %v269
    %v385 = vunpack.c.l.b16 %v270
    %v386 = vunpack.c.h.b16 %v270
    %v387 = vunpack.c.l.b16 %v271
    %v388 = vunpack.c.h.b16 %v271
    %v389 = vunpack.c.l.b16 %v272
    %v390 = vunpack.c.h.b16 %v272
    %v391 = vunpack.c.l.b16 %v273
    %v392 = vunpack.c.h.b16 %v273
    %v393 = vunpack.c.l.b16 %v274
    %v394 = vunpack.c.h.b16 %v274
    %v395 = vunpack.c.l.b16 %v275
    %v396 = vunpack.c.h.b16 %v275
    %v397 = vunpack.c.l.b16 %v276
    %v398 = vunpack.c.h.b16 %v276
    %v399 = vunpack.c.l.b16 %v277
    %v400 = vunpack.c.h.b16 %v277
    %v401 = vunpack.c.l.b16 %v278
    %v402 = vunpack.c.h.b16 %v278
    %v403 = vpack.c.b16 %v343, %v339
    %v404 = vpack.c.b16 %v344, %v340
    %v405 = vpack.c.b16 %v345, %v341
    %v406 = vpack.c.b16 %v346, %v342
    %v407 = vpack.c.b16 %v351, %v347
    %v408 = vpack.c.b16 %v352, %v348
    %v409 = vpack.c.b16 %v353, %v349
    %v410 = vpack.c.b16 %v354, %v350
    %v411 = vpack.c.b16 %v359, %v355
    %v412 = vpack.c.b16 %v360, %v356
    %v413 = vpack.c.b16 %v361, %v357
    %v414 = vpack.c.b16 %v362, %v358
    %v415 = vpack.c.b16 %v367, %v363
    %v416 = vpack.c.b16 %v368, %v364
    %v417 = vpack.c.b16 %v369, %v365
    %v418 = vpack.c.b16 %v370, %v366
    %v419 = vpack.c.b16 %v375, %v371
    %v420 = vpack.c.b16 %v376, %v372
    %v421 = vpack.c.b16 %v377, %v373
    %v422 = vpack.c.b16 %v378, %v374
    %v423 = vpack.c.b16 %v383, %v379
    %v424 = vpack.c.b16 %v384, %v380
    %v425 = vpack.c.b16 %v385, %v381
    %v426 = vpack.c.b16 %v386, %v382
    %v427 = vpack.c.b16 %v391, %v387
    %v428 = vpack.c.b16 %v392, %v388
    %v429 = vpack.c.b16 %v393, %v389
    %v430 = vpack.c.b16 %v394, %v390
    %v431 = vpack.c.b16 %v399, %v395
    %v432 = vpack.c.b16 %v400, %v396
    %v433 = vpack.c.b16 %v401, %v397
    %v434 = vpack.c.b16 %v402, %v398
    %467 = vmatprep.subr.bf16.mxu0 %v404
    %468 = vmatpush1.bf16.msra.mxu0 %v403
    %469 = vmatprep.subr.bf16.mxu0 %v408
    %470 = vmatpush1.bf16.msra.mxu0 %v407
    %471 = vmatprep.subr.bf16.mxu0 %v412
    %472 = vmatpush1.bf16.msra.mxu0 %v411
    %473 = vmatprep.subr.bf16.mxu0 %v416
    %474 = vmatpush1.bf16.msra.mxu0 %v415
    %475 = vmatprep.subr.bf16.mxu0 %v420
    %476 = vmatpush1.bf16.msra.mxu0 %v419
    %477 = vmatprep.subr.bf16.mxu0 %v424
    %478 = vmatpush1.bf16.msra.mxu0 %v423
    %479 = vmatprep.subr.bf16.mxu0 %v428
    %480 = vmatpush1.bf16.msra.mxu0 %v427
    %481 = vmatprep.subr.bf16.mxu0 %v432
    %482 = vmatpush1.bf16.msra.mxu0 %v431
    %483 = vmatprep.subr.bf16.mxu0 0
    %484 = vmatpush1.bf16.msra.mxu0 0
    %485 = vmatprep.subr.bf16.mxu0 0
    %486 = vmatpush1.bf16.msra.mxu0 0
    %487 = vmatprep.subr.bf16.mxu0 0
    %488 = vmatpush1.bf16.msra.mxu0 0
    %489 = vmatprep.subr.bf16.mxu0 0
    %490 = vmatpush1.bf16.msra.mxu0 0
    %491 = vmatprep.subr.bf16.mxu0 0
    %492 = vmatpush1.bf16.msra.mxu0 0
    %493 = vmatprep.subr.bf16.mxu0 0
    %494 = vmatpush1.bf16.msra.mxu0 0
    %495 = vmatprep.subr.bf16.mxu0 0
    %496 = vmatpush1.bf16.msra.mxu0 0
    %497 = vmatprep.subr.bf16.mxu0 0
    %498 = vmatpush1.bf16.msra.mxu0 0
    %499 = vmatprep.mubr.bf16.mxu0 0
    %500 = vmatmul.mubr.bf16.gmra.mrb[0].mxu0 %v305
    %v501 = vpop.f32.mrb[0].mxu0
    %v502 = vadd.f32 %v284, %v501
    %v503 = vpop.f32.mrb[0].mxu0
    %v504 = vadd.f32 %v288, %v503
    %v505 = vpop.f32.mrb[0].mxu0
    %v506 = vadd.f32 %v284, %v505
    %v507 = vpop.f32.mrb[0].mxu0
    %v508 = vadd.f32 %v288, %v507
    %509 = vdwg.mxu0
    %510 = vmatprep.subr.bf16.mxu0 %v406
    %511 = vmatpush1.bf16.msra.mxu0 %v405
    %512 = vmatprep.subr.bf16.mxu0 %v410
    %513 = vmatpush1.bf16.msra.mxu0 %v409
    %514 = vmatprep.subr.bf16.mxu0 %v414
    %515 = vmatpush1.bf16.msra.mxu0 %v413
    %516 = vmatprep.subr.bf16.mxu0 %v418
    %517 = vmatpush1.bf16.msra.mxu0 %v417
    %518 = vmatprep.subr.bf16.mxu0 %v422
    %519 = vmatpush1.bf16.msra.mxu0 %v421
    %520 = vmatprep.subr.bf16.mxu0 %v426
    %521 = vmatpush1.bf16.msra.mxu0 %v425
    %522 = vmatprep.subr.bf16.mxu0 %v430
    %523 = vmatpush1.bf16.msra.mxu0 %v429
    %524 = vmatprep.subr.bf16.mxu0 %v434
    %525 = vmatpush1.bf16.msra.mxu0 %v433
    %526 = vmatprep.subr.bf16.mxu0 0
    %527 = vmatpush1.bf16.msra.mxu0 0
    %528 = vmatprep.subr.bf16.mxu0 0
    %529 = vmatpush1.bf16.msra.mxu0 0
    %530 = vmatprep.subr.bf16.mxu0 0
    %531 = vmatpush1.bf16.msra.mxu0 0
    %532 = vmatprep.subr.bf16.mxu0 0
    %533 = vmatpush1.bf16.msra.mxu0 0
    %534 = vmatprep.subr.bf16.mxu0 0
    %535 = vmatpush1.bf16.msra.mxu0 0
    %536 = vmatprep.subr.bf16.mxu0 0
    %537 = vmatpush1.bf16.msra.mxu0 0
    %538 = vmatprep.subr.bf16.mxu0 0
    %539 = vmatpush1.bf16.msra.mxu0 0
    %540 = vmatprep.subr.bf16.mxu0 0
    %541 = vmatpush1.bf16.msra.mxu0 0
    %542 = vmatprep.mubr.bf16.mxu0 0
    %543 = vmatmul.mubr.bf16.gmra.mrb[0].mxu0 %v305
    %v544 = vpop.f32.mrb[0].mxu0
    %v545 = vadd.f32 %v292, %v544
    %v546 = vpop.f32.mrb[0].mxu0
    %v547 = vadd.f32 %v296, %v546
    %v548 = vpop.f32.mrb[0].mxu0
    %v549 = vadd.f32 %v292, %v548
    %v550 = vpop.f32.mrb[0].mxu0
    %v551 = vadd.f32 %v296, %v550
    %552 = vdwg.mxu0
    %v553 = vadd.f32 %v502, %v504
    %v554 = vadd.f32 %v553, %v545
    %v555 = vadd.f32 %v554, %v547
    %556 = vadd.xlane.f32.xlu0 %v555
    %v557 = vpop.xlane.xlu0 %556
    %v558 = vadd.f32 %v506, %v508
    %v559 = vadd.f32 %v558, %v549
    %v560 = vadd.f32 %v559, %v551
    %561 = vadd.xlane.f32.xlu0 %v560
    %v562 = vpop.xlane.xlu0 %561
    %v563 = vmul.f32 %v557, 0.00390625
    %v564 = vmul.f32 %v562, 0.00390625
    %v565 = vmul.f32 %v502, %v502
    %v566 = vmul.f32 %v504, %v504
    %v567 = vmul.f32 %v545, %v545
    %v568 = vmul.f32 %v547, %v547
    %v569 = vmul.f32 %v506, %v506
    %v570 = vmul.f32 %v508, %v508
    %v571 = vmul.f32 %v549, %v549
    %v572 = vmul.f32 %v551, %v551
    %v573 = vadd.f32 %v565, %v566
    %v574 = vadd.f32 %v573, %v567
    %v575 = vadd.f32 %v574, %v568
    %576 = vadd.xlane.f32.xlu0 %v575
    %v577 = vpop.xlane.xlu0 %576
    %v578 = vadd.f32 %v569, %v570
    %v579 = vadd.f32 %v578, %v571
    %v580 = vadd.f32 %v579, %v572
    %581 = vadd.xlane.f32.xlu0 %v580
    %v582 = vpop.xlane.xlu0 %581
    %v583 = vmul.f32 %v577, 0.00390625
    %v584 = vmul.f32 %v582, 0.00390625
    %v585 = vmul.f32 %v563, %v563
    %v586 = vmul.f32 %v564, %v564
    %v587 = vsub.f32 %v583, %v585
    %v588 = vsub.f32 %v584, %v586
    %v589 = vmax.f32 %v587, 0.0
    %v590 = vmax.f32 %v588, 0.0
    %v591 = vsub.f32 %v502, %v563
    %v592 = vsub.f32 %v504, %v563
    %v593 = vsub.f32 %v545, %v563
    %v594 = vsub.f32 %v547, %v563
    %v595 = vsub.f32 %v506, %v564
    %v596 = vsub.f32 %v508, %v564
    %v597 = vsub.f32 %v549, %v564
    %v598 = vsub.f32 %v551, %v564
    %v599 = vadd.f32 %v589, 1e-05
    %v600 = vadd.f32 %v590, 1e-05
    %v601 = vrsqrt.pop %v599
    %v602 = vrsqrt.pop %v600
    %v603 = vmul.f32 %v591, %v601
    %v604 = vmul.f32 %v592, %v601
    %v605 = vmul.f32 %v593, %v601
    %v606 = vmul.f32 %v594, %v601
    %v607 = vmul.f32 %v595, %v602
    %v608 = vmul.f32 %v596, %v602
    %v609 = vmul.f32 %v597, %v602
    %v610 = vmul.f32 %v598, %v602
    %v611 = vld [vmem:[#allocation10] sm:$0xf]
    %v613 = vlaneseq
    %v614 = vshrl.u32 %v613, 7
    %v615 = vsub.s32 0, %v614
    %v616 = vrot.slane %v611, %v615
    %v617 = vlaneseq
    %v618 = vshrl.u32 %v617, 7
    %v619 = vsub.s32 1, %v618
    %v620 = vrot.slane %v611, %v619
    %v621 = vlaneseq
    %v622 = vshrl.u32 %v621, 7
    %v623 = vsub.s32 2, %v622
    %v624 = vrot.slane %v611, %v623
    %v625 = vlaneseq
    %v626 = vshrl.u32 %v625, 7
    %v627 = vsub.s32 3, %v626
    %v628 = vrot.slane %v611, %v627
    %v633 = vmul.f32 %v603, %v616
    %v634 = vmul.f32 %v604, %v620
    %v635 = vmul.f32 %v605, %v624
    %v636 = vmul.f32 %v606, %v628
    %v637 = vmul.f32 %v607, %v616
    %v638 = vmul.f32 %v608, %v620
    %v639 = vmul.f32 %v609, %v624
    %v640 = vmul.f32 %v610, %v628
    %v641 = vld [vmem:[#allocation12] sm:$0xf]
    %v643 = vlaneseq
    %v644 = vshrl.u32 %v643, 7
    %v645 = vsub.s32 0, %v644
    %v646 = vrot.slane %v641, %v645
    %v647 = vlaneseq
    %v648 = vshrl.u32 %v647, 7
    %v649 = vsub.s32 1, %v648
    %v650 = vrot.slane %v641, %v649
    %v651 = vlaneseq
    %v652 = vshrl.u32 %v651, 7
    %v653 = vsub.s32 2, %v652
    %v654 = vrot.slane %v641, %v653
    %v655 = vlaneseq
    %v656 = vshrl.u32 %v655, 7
    %v657 = vsub.s32 3, %v656
    %v658 = vrot.slane %v641, %v657
    %v663 = vadd.f32 %v633, %v646
    %v664 = vadd.f32 %v634, %v650
    %v665 = vadd.f32 %v635, %v654
    %v666 = vadd.f32 %v636, %v658
    %v667 = vadd.f32 %v637, %v646
    %v668 = vadd.f32 %v638, %v650
    %v669 = vadd.f32 %v639, %v654
    %v670 = vadd.f32 %v640, %v658
    %vm671 = vcmp.ge.f32.partialorder %v663, 0.0
    %vm672 = vcmp.ge.f32.partialorder %v664, 0.0
    %vm673 = vcmp.ge.f32.partialorder %v665, 0.0
    %vm674 = vcmp.ge.f32.partialorder %v666, 0.0
    %vm675 = vcmp.ge.f32.partialorder %v667, 0.0
    %vm676 = vcmp.ge.f32.partialorder %v668, 0.0
    %vm677 = vcmp.ge.f32.partialorder %v669, 0.0
    %vm678 = vcmp.ge.f32.partialorder %v670, 0.0
    %v679 = vstv %s241
    %v680 = vmul.f32 %v679, %v663
    %v681 = vmul.f32 %v679, %v664
    %v682 = vmul.f32 %v679, %v665
    %v683 = vmul.f32 %v679, %v666
    %v684 = vmul.f32 %v679, %v667
    %v685 = vmul.f32 %v679, %v668
    %v686 = vmul.f32 %v679, %v669
    %v687 = vmul.f32 %v679, %v670
    %v688 = vsel %vm671, %v663, %v680
    %v689 = vsel %vm672, %v664, %v681
    %v690 = vsel %vm673, %v665, %v682
    %v691 = vsel %vm674, %v666, %v683
    %v692 = vsel %vm675, %v667, %v684
    %v693 = vsel %vm676, %v668, %v685
    %v694 = vsel %vm677, %v669, %v686
    %v695 = vsel %vm678, %v670, %v687
    %v696 = vpack.c.bf16 %v692, %v688
    %v697 = vpack.c.bf16 %v693, %v689
    %v698 = vpack.c.bf16 %v694, %v690
    %v699 = vpack.c.bf16 %v695, %v691
    %v700 = vld [vmem:[#allocation13] sm:$0xff]
    %v701 = vld [vmem:[#allocation13 + $0x8] sm:$0xff]
    %v702 = vld [vmem:[#allocation13 + $0x10] sm:$0xff]
    %v703 = vld [vmem:[#allocation13 + $0x18] sm:$0xff]
    %v704 = vld [vmem:[#allocation13 + $0x20] sm:$0xff]
    %v705 = vld [vmem:[#allocation13 + $0x28] sm:$0xff]
    %v706 = vld [vmem:[#allocation13 + $0x30] sm:$0xff]
    %v707 = vld [vmem:[#allocation13 + $0x38] sm:$0xff]
    %v708 = vld [vmem:[#allocation13 + $0x40] sm:$0xff]
    %v709 = vld [vmem:[#allocation13 + $0x48] sm:$0xff]
    %v710 = vld [vmem:[#allocation13 + $0x50] sm:$0xff]
    %v711 = vld [vmem:[#allocation13 + $0x58] sm:$0xff]
    %v712 = vld [vmem:[#allocation13 + $0x60] sm:$0xff]
    %v713 = vld [vmem:[#allocation13 + $0x68] sm:$0xff]
    %v714 = vld [vmem:[#allocation13 + $0x70] sm:$0xff]
    %v715 = vld [vmem:[#allocation13 + $0x78] sm:$0xff]
    %v716 = vld [vmem:[#allocation13 + $0x80] sm:$0xff]
    %v717 = vld [vmem:[#allocation13 + $0x88] sm:$0xff]
    %v718 = vld [vmem:[#allocation13 + $0x90] sm:$0xff]
    %v719 = vld [vmem:[#allocation13 + $0x98] sm:$0xff]
    %v720 = vld [vmem:[#allocation13 + $0xa0] sm:$0xff]
    %v721 = vld [vmem:[#allocation13 + $0xa8] sm:$0xff]
    %v722 = vld [vmem:[#allocation13 + $0xb0] sm:$0xff]
    %v723 = vld [vmem:[#allocation13 + $0xb8] sm:$0xff]
    %v724 = vld [vmem:[#allocation13 + $0xc0] sm:$0xff]
    %v725 = vld [vmem:[#allocation13 + $0xc8] sm:$0xff]
    %v726 = vld [vmem:[#allocation13 + $0xd0] sm:$0xff]
    %v727 = vld [vmem:[#allocation13 + $0xd8] sm:$0xff]
    %v728 = vld [vmem:[#allocation13 + $0xe0] sm:$0xff]
    %v729 = vld [vmem:[#allocation13 + $0xe8] sm:$0xff]
    %v730 = vld [vmem:[#allocation13 + $0xf0] sm:$0xff]
    %v731 = vld [vmem:[#allocation13 + $0xf8] sm:$0xff]
    %v732 = vld [vmem:[#allocation13 + $0x100] sm:$0xff]
    %v733 = vld [vmem:[#allocation13 + $0x108] sm:$0xff]
    %v734 = vld [vmem:[#allocation13 + $0x110] sm:$0xff]
    %v735 = vld [vmem:[#allocation13 + $0x118] sm:$0xff]
    %v736 = vld [vmem:[#allocation13 + $0x120] sm:$0xff]
    %v737 = vld [vmem:[#allocation13 + $0x128] sm:$0xff]
    %v738 = vld [vmem:[#allocation13 + $0x130] sm:$0xff]
    %v739 = vld [vmem:[#allocation13 + $0x138] sm:$0xff]
    %v740 = vld [vmem:[#allocation13 + $0x140] sm:$0xff]
    %v741 = vld [vmem:[#allocation13 + $0x148] sm:$0xff]
    %v742 = vld [vmem:[#allocation13 + $0x150] sm:$0xff]
    %v743 = vld [vmem:[#allocation13 + $0x158] sm:$0xff]
    %v744 = vld [vmem:[#allocation13 + $0x160] sm:$0xff]
    %v745 = vld [vmem:[#allocation13 + $0x168] sm:$0xff]
    %v746 = vld [vmem:[#allocation13 + $0x170] sm:$0xff]
    %v747 = vld [vmem:[#allocation13 + $0x178] sm:$0xff]
    %v748 = vld [vmem:[#allocation13 + $0x180] sm:$0xff]
    %v749 = vld [vmem:[#allocation13 + $0x188] sm:$0xff]
    %v750 = vld [vmem:[#allocation13 + $0x190] sm:$0xff]
    %v751 = vld [vmem:[#allocation13 + $0x198] sm:$0xff]
    %v752 = vld [vmem:[#allocation13 + $0x1a0] sm:$0xff]
    %v753 = vld [vmem:[#allocation13 + $0x1a8] sm:$0xff]
    %v754 = vld [vmem:[#allocation13 + $0x1b0] sm:$0xff]
    %v755 = vld [vmem:[#allocation13 + $0x1b8] sm:$0xff]
    %v756 = vld [vmem:[#allocation13 + $0x1c0] sm:$0xff]
    %v757 = vld [vmem:[#allocation13 + $0x1c8] sm:$0xff]
    %v758 = vld [vmem:[#allocation13 + $0x1d0] sm:$0xff]
    %v759 = vld [vmem:[#allocation13 + $0x1d8] sm:$0xff]
    %v760 = vld [vmem:[#allocation13 + $0x1e0] sm:$0xff]
    %v761 = vld [vmem:[#allocation13 + $0x1e8] sm:$0xff]
    %v762 = vld [vmem:[#allocation13 + $0x1f0] sm:$0xff]
    %v763 = vld [vmem:[#allocation13 + $0x1f8] sm:$0xff]
    %v764 = vld [vmem:[#allocation13 + $0x200] sm:$0xff]
    %v765 = vld [vmem:[#allocation13 + $0x208] sm:$0xff]
    %v766 = vld [vmem:[#allocation13 + $0x210] sm:$0xff]
    %v767 = vld [vmem:[#allocation13 + $0x218] sm:$0xff]
    %v768 = vld [vmem:[#allocation13 + $0x220] sm:$0xff]
    %v769 = vld [vmem:[#allocation13 + $0x228] sm:$0xff]
    %v770 = vld [vmem:[#allocation13 + $0x230] sm:$0xff]
    %v771 = vld [vmem:[#allocation13 + $0x238] sm:$0xff]
    %v772 = vld [vmem:[#allocation13 + $0x240] sm:$0xff]
    %v773 = vld [vmem:[#allocation13 + $0x248] sm:$0xff]
    %v774 = vld [vmem:[#allocation13 + $0x250] sm:$0xff]
    %v775 = vld [vmem:[#allocation13 + $0x258] sm:$0xff]
    %v776 = vld [vmem:[#allocation13 + $0x260] sm:$0xff]
    %v777 = vld [vmem:[#allocation13 + $0x268] sm:$0xff]
    %v778 = vld [vmem:[#allocation13 + $0x270] sm:$0xff]
    %v779 = vld [vmem:[#allocation13 + $0x278] sm:$0xff]
    %v780 = vld [vmem:[#allocation13 + $0x280] sm:$0xff]
    %v781 = vld [vmem:[#allocation13 + $0x288] sm:$0xff]
    %v782 = vld [vmem:[#allocation13 + $0x290] sm:$0xff]
    %v783 = vld [vmem:[#allocation13 + $0x298] sm:$0xff]
    %v784 = vld [vmem:[#allocation13 + $0x2a0] sm:$0xff]
    %v785 = vld [vmem:[#allocation13 + $0x2a8] sm:$0xff]
    %v786 = vld [vmem:[#allocation13 + $0x2b0] sm:$0xff]
    %v787 = vld [vmem:[#allocation13 + $0x2b8] sm:$0xff]
    %v788 = vld [vmem:[#allocation13 + $0x2c0] sm:$0xff]
    %v789 = vld [vmem:[#allocation13 + $0x2c8] sm:$0xff]
    %v790 = vld [vmem:[#allocation13 + $0x2d0] sm:$0xff]
    %v791 = vld [vmem:[#allocation13 + $0x2d8] sm:$0xff]
    %v792 = vld [vmem:[#allocation13 + $0x2e0] sm:$0xff]
    %v793 = vld [vmem:[#allocation13 + $0x2e8] sm:$0xff]
    %v794 = vld [vmem:[#allocation13 + $0x2f0] sm:$0xff]
    %v795 = vld [vmem:[#allocation13 + $0x2f8] sm:$0xff]
    %v796 = vld [vmem:[#allocation13 + $0x300] sm:$0xff]
    %v797 = vld [vmem:[#allocation13 + $0x308] sm:$0xff]
    %v798 = vld [vmem:[#allocation13 + $0x310] sm:$0xff]
    %v799 = vld [vmem:[#allocation13 + $0x318] sm:$0xff]
    %v800 = vld [vmem:[#allocation13 + $0x320] sm:$0xff]
    %v801 = vld [vmem:[#allocation13 + $0x328] sm:$0xff]
    %v802 = vld [vmem:[#allocation13 + $0x330] sm:$0xff]
    %v803 = vld [vmem:[#allocation13 + $0x338] sm:$0xff]
    %v804 = vld [vmem:[#allocation13 + $0x340] sm:$0xff]
    %v805 = vld [vmem:[#allocation13 + $0x348] sm:$0xff]
    %v806 = vld [vmem:[#allocation13 + $0x350] sm:$0xff]
    %v807 = vld [vmem:[#allocation13 + $0x358] sm:$0xff]
    %v808 = vld [vmem:[#allocation13 + $0x360] sm:$0xff]
    %v809 = vld [vmem:[#allocation13 + $0x368] sm:$0xff]
    %v810 = vld [vmem:[#allocation13 + $0x370] sm:$0xff]
    %v811 = vld [vmem:[#allocation13 + $0x378] sm:$0xff]
    %v812 = vld [vmem:[#allocation13 + $0x380] sm:$0xff]
    %v813 = vld [vmem:[#allocation13 + $0x388] sm:$0xff]
    %v814 = vld [vmem:[#allocation13 + $0x390] sm:$0xff]
    %v815 = vld [vmem:[#allocation13 + $0x398] sm:$0xff]
    %v816 = vld [vmem:[#allocation13 + $0x3a0] sm:$0xff]
    %v817 = vld [vmem:[#allocation13 + $0x3a8] sm:$0xff]
    %v818 = vld [vmem:[#allocation13 + $0x3b0] sm:$0xff]
    %v819 = vld [vmem:[#allocation13 + $0x3b8] sm:$0xff]
    %v820 = vld [vmem:[#allocation13 + $0x3c0] sm:$0xff]
    %v821 = vld [vmem:[#allocation13 + $0x3c8] sm:$0xff]
    %v822 = vld [vmem:[#allocation13 + $0x3d0] sm:$0xff]
    %v823 = vld [vmem:[#allocation13 + $0x3d8] sm:$0xff]
    %v824 = vld [vmem:[#allocation13 + $0x3e0] sm:$0xff]
    %v825 = vld [vmem:[#allocation13 + $0x3e8] sm:$0xff]
    %v826 = vld [vmem:[#allocation13 + $0x3f0] sm:$0xff]
    %v827 = vld [vmem:[#allocation13 + $0x3f8] sm:$0xff]
    %v828 = vld [vmem:[#allocation15] sm:$0xf]
    %v830 = vlaneseq
    %v831 = vshrl.u32 %v830, 7
    %v832 = vsub.s32 0, %v831
    %v833 = vrot.slane %v828, %v832
    %v834 = vlaneseq
    %v835 = vshrl.u32 %v834, 7
    %v836 = vsub.s32 1, %v835
    %v837 = vrot.slane %v828, %v836
    %v838 = vlaneseq
    %v839 = vshrl.u32 %v838, 7
    %v840 = vsub.s32 2, %v839
    %v841 = vrot.slane %v828, %v840
    %v842 = vlaneseq
    %v843 = vshrl.u32 %v842, 7
    %v844 = vsub.s32 3, %v843
    %v845 = vrot.slane %v828, %v844
    %v978 = vunpack.c.l.b16 %v700
    %v979 = vunpack.c.h.b16 %v700
    %v980 = vunpack.c.l.b16 %v701
    %v981 = vunpack.c.h.b16 %v701
    %v982 = vunpack.c.l.b16 %v702
    %v983 = vunpack.c.h.b16 %v702
    %v984 = vunpack.c.l.b16 %v703
    %v985 = vunpack.c.h.b16 %v703
    %v986 = vunpack.c.l.b16 %v704
    %v987 = vunpack.c.h.b16 %v704
    %v988 = vunpack.c.l.b16 %v705
    %v989 = vunpack.c.h.b16 %v705
    %v990 = vunpack.c.l.b16 %v706
    %v991 = vunpack.c.h.b16 %v706
    %v992 = vunpack.c.l.b16 %v707
    %v993 = vunpack.c.h.b16 %v707
    %v994 = vunpack.c.l.b16 %v708
    %v995 = vunpack.c.h.b16 %v708
    %v996 = vunpack.c.l.b16 %v709
    %v997 = vunpack.c.h.b16 %v709
    %v998 = vunpack.c.l.b16 %v710
    %v999 = vunpack.c.h.b16 %v710
    %v1000 = vunpack.c.l.b16 %v711
    %v1001 = vunpack.c.h.b16 %v711
    %v1002 = vunpack.c.l.b16 %v712
    %v1003 = vunpack.c.h.b16 %v712
    %v1004 = vunpack.c.l.b16 %v713
    %v1005 = vunpack.c.h.b16 %v713
    %v1006 = vunpack.c.l.b16 %v714
    %v1007 = vunpack.c.h.b16 %v714
    %v1008 = vunpack.c.l.b16 %v715
    %v1009 = vunpack.c.h.b16 %v715
    %v1010 = vunpack.c.l.b16 %v716
    %v1011 = vunpack.c.h.b16 %v716
    %v1012 = vunpack.c.l.b16 %v717
    %v1013 = vunpack.c.h.b16 %v717
    %v1014 = vunpack.c.l.b16 %v718
    %v1015 = vunpack.c.h.b16 %v718
    %v1016 = vunpack.c.l.b16 %v719
    %v1017 = vunpack.c.h.b16 %v719
    %v1018 = vunpack.c.l.b16 %v720
    %v1019 = vunpack.c.h.b16 %v720
    %v1020 = vunpack.c.l.b16 %v721
    %v1021 = vunpack.c.h.b16 %v721
    %v1022 = vunpack.c.l.b16 %v722
    %v1023 = vunpack.c.h.b16 %v722
    %v1024 = vunpack.c.l.b16 %v723
    %v1025 = vunpack.c.h.b16 %v723
    %v1026 = vunpack.c.l.b16 %v724
    %v1027 = vunpack.c.h.b16 %v724
    %v1028 = vunpack.c.l.b16 %v725
    %v1029 = vunpack.c.h.b16 %v725
    %v1030 = vunpack.c.l.b16 %v726
    %v1031 = vunpack.c.h.b16 %v726
    %v1032 = vunpack.c.l.b16 %v727
    %v1033 = vunpack.c.h.b16 %v727
    %v1034 = vunpack.c.l.b16 %v728
    %v1035 = vunpack.c.h.b16 %v728
    %v1036 = vunpack.c.l.b16 %v729
    %v1037 = vunpack.c.h.b16 %v729
    %v1038 = vunpack.c.l.b16 %v730
    %v1039 = vunpack.c.h.b16 %v730
    %v1040 = vunpack.c.l.b16 %v731
    %v1041 = vunpack.c.h.b16 %v731
    %v1042 = vunpack.c.l.b16 %v732
    %v1043 = vunpack.c.h.b16 %v732
    %v1044 = vunpack.c.l.b16 %v733
    %v1045 = vunpack.c.h.b16 %v733
    %v1046 = vunpack.c.l.b16 %v734
    %v1047 = vunpack.c.h.b16 %v734
    %v1048 = vunpack.c.l.b16 %v735
    %v1049 = vunpack.c.h.b16 %v735
    %v1050 = vunpack.c.l.b16 %v736
    %v1051 = vunpack.c.h.b16 %v736
    %v1052 = vunpack.c.l.b16 %v737
    %v1053 = vunpack.c.h.b16 %v737
    %v1054 = vunpack.c.l.b16 %v738
    %v1055 = vunpack.c.h.b16 %v738
    %v1056 = vunpack.c.l.b16 %v739
    %v1057 = vunpack.c.h.b16 %v739
    %v1058 = vunpack.c.l.b16 %v740
    %v1059 = vunpack.c.h.b16 %v740
    %v1060 = vunpack.c.l.b16 %v741
    %v1061 = vunpack.c.h.b16 %v741
    %v1062 = vunpack.c.l.b16 %v742
    %v1063 = vunpack.c.h.b16 %v742
    %v1064 = vunpack.c.l.b16 %v743
    %v1065 = vunpack.c.h.b16 %v743
    %v1066 = vunpack.c.l.b16 %v744
    %v1067 = vunpack.c.h.b16 %v744
    %v1068 = vunpack.c.l.b16 %v745
    %v1069 = vunpack.c.h.b16 %v745
    %v1070 = vunpack.c.l.b16 %v746
    %v1071 = vunpack.c.h.b16 %v746
    %v1072 = vunpack.c.l.b16 %v747
    %v1073 = vunpack.c.h.b16 %v747
    %v1074 = vunpack.c.l.b16 %v748
    %v1075 = vunpack.c.h.b16 %v748
    %v1076 = vunpack.c.l.b16 %v749
    %v1077 = vunpack.c.h.b16 %v749
    %v1078 = vunpack.c.l.b16 %v750
    %v1079 = vunpack.c.h.b16 %v750
    %v1080 = vunpack.c.l.b16 %v751
    %v1081 = vunpack.c.h.b16 %v751
    %v1082 = vunpack.c.l.b16 %v752
    %v1083 = vunpack.c.h.b16 %v752
    %v1084 = vunpack.c.l.b16 %v753
    %v1085 = vunpack.c.h.b16 %v753
    %v1086 = vunpack.c.l.b16 %v754
    %v1087 = vunpack.c.h.b16 %v754
    %v1088 = vunpack.c.l.b16 %v755
    %v1089 = vunpack.c.h.b16 %v755
    %v1090 = vunpack.c.l.b16 %v756
    %v1091 = vunpack.c.h.b16 %v756
    %v1092 = vunpack.c.l.b16 %v757
    %v1093 = vunpack.c.h.b16 %v757
    %v1094 = vunpack.c.l.b16 %v758
    %v1095 = vunpack.c.h.b16 %v758
    %v1096 = vunpack.c.l.b16 %v759
    %v1097 = vunpack.c.h.b16 %v759
    %v1098 = vunpack.c.l.b16 %v760
    %v1099 = vunpack.c.h.b16 %v760
    %v1100 = vunpack.c.l.b16 %v761
    %v1101 = vunpack.c.h.b16 %v761
    %v1102 = vunpack.c.l.b16 %v762
    %v1103 = vunpack.c.h.b16 %v762
    %v1104 = vunpack.c.l.b16 %v763
    %v1105 = vunpack.c.h.b16 %v763
    %v1106 = vunpack.c.l.b16 %v764
    %v1107 = vunpack.c.h.b16 %v764
    %v1108 = vunpack.c.l.b16 %v765
    %v1109 = vunpack.c.h.b16 %v765
    %v1110 = vunpack.c.l.b16 %v766
    %v1111 = vunpack.c.h.b16 %v766
    %v1112 = vunpack.c.l.b16 %v767
    %v1113 = vunpack.c.h.b16 %v767
    %v1114 = vunpack.c.l.b16 %v768
    %v1115 = vunpack.c.h.b16 %v768
    %v1116 = vunpack.c.l.b16 %v769
    %v1117 = vunpack.c.h.b16 %v769
    %v1118 = vunpack.c.l.b16 %v770
    %v1119 = vunpack.c.h.b16 %v770
    %v1120 = vunpack.c.l.b16 %v771
    %v1121 = vunpack.c.h.b16 %v771
    %v1122 = vunpack.c.l.b16 %v772
    %v1123 = vunpack.c.h.b16 %v772
    %v1124 = vunpack.c.l.b16 %v773
    %v1125 = vunpack.c.h.b16 %v773
    %v1126 = vunpack.c.l.b16 %v774
    %v1127 = vunpack.c.h.b16 %v774
    %v1128 = vunpack.c.l.b16 %v775
    %v1129 = vunpack.c.h.b16 %v775
    %v1130 = vunpack.c.l.b16 %v776
    %v1131 = vunpack.c.h.b16 %v776
    %v1132 = vunpack.c.l.b16 %v777
    %v1133 = vunpack.c.h.b16 %v777
    %v1134 = vunpack.c.l.b16 %v778
    %v1135 = vunpack.c.h.b16 %v778
    %v1136 = vunpack.c.l.b16 %v779
    %v1137 = vunpack.c.h.b16 %v779
    %v1138 = vunpack.c.l.b16 %v780
    %v1139 = vunpack.c.h.b16 %v780
    %v1140 = vunpack.c.l.b16 %v781
    %v1141 = vunpack.c.h.b16 %v781
    %v1142 = vunpack.c.l.b16 %v782
    %v1143 = vunpack.c.h.b16 %v782
    %v1144 = vunpack.c.l.b16 %v783
    %v1145 = vunpack.c.h.b16 %v783
    %v1146 = vunpack.c.l.b16 %v784
    %v1147 = vunpack.c.h.b16 %v784
    %v1148 = vunpack.c.l.b16 %v785
    %v1149 = vunpack.c.h.b16 %v785
    %v1150 = vunpack.c.l.b16 %v786
    %v1151 = vunpack.c.h.b16 %v786
    %v1152 = vunpack.c.l.b16 %v787
    %v1153 = vunpack.c.h.b16 %v787
    %v1154 = vunpack.c.l.b16 %v788
    %v1155 = vunpack.c.h.b16 %v788
    %v1156 = vunpack.c.l.b16 %v789
    %v1157 = vunpack.c.h.b16 %v789
    %v1158 = vunpack.c.l.b16 %v790
    %v1159 = vunpack.c.h.b16 %v790
    %v1160 = vunpack.c.l.b16 %v791
    %v1161 = vunpack.c.h.b16 %v791
    %v1162 = vunpack.c.l.b16 %v792
    %v1163 = vunpack.c.h.b16 %v792
    %v1164 = vunpack.c.l.b16 %v793
    %v1165 = vunpack.c.h.b16 %v793
    %v1166 = vunpack.c.l.b16 %v794
    %v1167 = vunpack.c.h.b16 %v794
    %v1168 = vunpack.c.l.b16 %v795
    %v1169 = vunpack.c.h.b16 %v795
    %v1170 = vunpack.c.l.b16 %v796
    %v1171 = vunpack.c.h.b16 %v796
    %v1172 = vunpack.c.l.b16 %v797
    %v1173 = vunpack.c.h.b16 %v797
    %v1174 = vunpack.c.l.b16 %v798
    %v1175 = vunpack.c.h.b16 %v798
    %v1176 = vunpack.c.l.b16 %v799
    %v1177 = vunpack.c.h.b16 %v799
    %v1178 = vunpack.c.l.b16 %v800
    %v1179 = vunpack.c.h.b16 %v800
    %v1180 = vunpack.c.l.b16 %v801
    %v1181 = vunpack.c.h.b16 %v801
    %v1182 = vunpack.c.l.b16 %v802
    %v1183 = vunpack.c.h.b16 %v802
    %v1184 = vunpack.c.l.b16 %v803
    %v1185 = vunpack.c.h.b16 %v803
    %v1186 = vunpack.c.l.b16 %v804
    %v1187 = vunpack.c.h.b16 %v804
    %v1188 = vunpack.c.l.b16 %v805
    %v1189 = vunpack.c.h.b16 %v805
    %v1190 = vunpack.c.l.b16 %v806
    %v1191 = vunpack.c.h.b16 %v806
    %v1192 = vunpack.c.l.b16 %v807
    %v1193 = vunpack.c.h.b16 %v807
    %v1194 = vunpack.c.l.b16 %v808
    %v1195 = vunpack.c.h.b16 %v808
    %v1196 = vunpack.c.l.b16 %v809
    %v1197 = vunpack.c.h.b16 %v809
    %v1198 = vunpack.c.l.b16 %v810
    %v1199 = vunpack.c.h.b16 %v810
    %v1200 = vunpack.c.l.b16 %v811
    %v1201 = vunpack.c.h.b16 %v811
    %v1202 = vunpack.c.l.b16 %v812
    %v1203 = vunpack.c.h.b16 %v812
    %v1204 = vunpack.c.l.b16 %v813
    %v1205 = vunpack.c.h.b16 %v813
    %v1206 = vunpack.c.l.b16 %v814
    %v1207 = vunpack.c.h.b16 %v814
    %v1208 = vunpack.c.l.b16 %v815
    %v1209 = vunpack.c.h.b16 %v815
    %v1210 = vunpack.c.l.b16 %v816
    %v1211 = vunpack.c.h.b16 %v816
    %v1212 = vunpack.c.l.b16 %v817
    %v1213 = vunpack.c.h.b16 %v817
    %v1214 = vunpack.c.l.b16 %v818
    %v1215 = vunpack.c.h.b16 %v818
    %v1216 = vunpack.c.l.b16 %v819
    %v1217 = vunpack.c.h.b16 %v819
    %v1218 = vunpack.c.l.b16 %v820
    %v1219 = vunpack.c.h.b16 %v820
    %v1220 = vunpack.c.l.b16 %v821
    %v1221 = vunpack.c.h.b16 %v821
    %v1222 = vunpack.c.l.b16 %v822
    %v1223 = vunpack.c.h.b16 %v822
    %v1224 = vunpack.c.l.b16 %v823
    %v1225 = vunpack.c.h.b16 %v823
    %v1226 = vunpack.c.l.b16 %v824
    %v1227 = vunpack.c.h.b16 %v824
    %v1228 = vunpack.c.l.b16 %v825
    %v1229 = vunpack.c.h.b16 %v825
    %v1230 = vunpack.c.l.b16 %v826
    %v1231 = vunpack.c.h.b16 %v826
    %v1232 = vunpack.c.l.b16 %v827
    %v1233 = vunpack.c.h.b16 %v827
    %v1234 = vpack.c.b16 %v982, %v978
    %v1235 = vpack.c.b16 %v983, %v979
    %v1236 = vpack.c.b16 %v984, %v980
    %v1237 = vpack.c.b16 %v985, %v981
    %v1238 = vpack.c.b16 %v990, %v986
    %v1239 = vpack.c.b16 %v991, %v987
    %v1240 = vpack.c.b16 %v992, %v988
    %v1241 = vpack.c.b16 %v993, %v989
    %v1242 = vpack.c.b16 %v998, %v994
    %v1243 = vpack.c.b16 %v999, %v995
    %v1244 = vpack.c.b16 %v1000, %v996
    %v1245 = vpack.c.b16 %v1001, %v997
    %v1246 = vpack.c.b16 %v1006, %v1002
    %v1247 = vpack.c.b16 %v1007, %v1003
    %v1248 = vpack.c.b16 %v1008, %v1004
    %v1249 = vpack.c.b16 %v1009, %v1005
    %v1250 = vpack.c.b16 %v1014, %v1010
    %v1251 = vpack.c.b16 %v1015, %v1011
    %v1252 = vpack.c.b16 %v1016, %v1012
    %v1253 = vpack.c.b16 %v1017, %v1013
    %v1254 = vpack.c.b16 %v1022, %v1018
    %v1255 = vpack.c.b16 %v1023, %v1019
    %v1256 = vpack.c.b16 %v1024, %v1020
    %v1257 = vpack.c.b16 %v1025, %v1021
    %v1258 = vpack.c.b16 %v1030, %v1026
    %v1259 = vpack.c.b16 %v1031, %v1027
    %v1260 = vpack.c.b16 %v1032, %v1028
    %v1261 = vpack.c.b16 %v1033, %v1029
    %v1262 = vpack.c.b16 %v1038, %v1034
    %v1263 = vpack.c.b16 %v1039, %v1035
    %v1264 = vpack.c.b16 %v1040, %v1036
    %v1265 = vpack.c.b16 %v1041, %v1037
    %v1266 = vpack.c.b16 %v1046, %v1042
    %v1267 = vpack.c.b16 %v1047, %v1043
    %v1268 = vpack.c.b16 %v1048, %v1044
    %v1269 = vpack.c.b16 %v1049, %v1045
    %v1270 = vpack.c.b16 %v1054, %v1050
    %v1271 = vpack.c.b16 %v1055, %v1051
    %v1272 = vpack.c.b16 %v1056, %v1052
    %v1273 = vpack.c.b16 %v1057, %v1053
    %v1274 = vpack.c.b16 %v1062, %v1058
    %v1275 = vpack.c.b16 %v1063, %v1059
    %v1276 = vpack.c.b16 %v1064, %v1060
    %v1277 = vpack.c.b16 %v1065, %v1061
    %v1278 = vpack.c.b16 %v1070, %v1066
    %v1279 = vpack.c.b16 %v1071, %v1067
    %v1280 = vpack.c.b16 %v1072, %v1068
    %v1281 = vpack.c.b16 %v1073, %v1069
    %v1282 = vpack.c.b16 %v1078, %v1074
    %v1283 = vpack.c.b16 %v1079, %v1075
    %v1284 = vpack.c.b16 %v1080, %v1076
    %v1285 = vpack.c.b16 %v1081, %v1077
    %v1286 = vpack.c.b16 %v1086, %v1082
    %v1287 = vpack.c.b16 %v1087, %v1083
    %v1288 = vpack.c.b16 %v1088, %v1084
    %v1289 = vpack.c.b16 %v1089, %v1085
    %v1290 = vpack.c.b16 %v1094, %v1090
    %v1291 = vpack.c.b16 %v1095, %v1091
    %v1292 = vpack.c.b16 %v1096, %v1092
    %v1293 = vpack.c.b16 %v1097, %v1093
    %v1294 = vpack.c.b16 %v1102, %v1098
    %v1295 = vpack.c.b16 %v1103, %v1099
    %v1296 = vpack.c.b16 %v1104, %v1100
    %v1297 = vpack.c.b16 %v1105, %v1101
    %v1298 = vpack.c.b16 %v1110, %v1106
    %v1299 = vpack.c.b16 %v1111, %v1107
    %v1300 = vpack.c.b16 %v1112, %v1108
    %v1301 = vpack.c.b16 %v1113, %v1109
    %v1302 = vpack.c.b16 %v1118, %v1114
    %v1303 = vpack.c.b16 %v1119, %v1115
    %v1304 = vpack.c.b16 %v1120, %v1116
    %v1305 = vpack.c.b16 %v1121, %v1117
    %v1306 = vpack.c.b16 %v1126, %v1122
    %v1307 = vpack.c.b16 %v1127, %v1123
    %v1308 = vpack.c.b16 %v1128, %v1124
    %v1309 = vpack.c.b16 %v1129, %v1125
    %v1310 = vpack.c.b16 %v1134, %v1130
    %v1311 = vpack.c.b16 %v1135, %v1131
    %v1312 = vpack.c.b16 %v1136, %v1132
    %v1313 = vpack.c.b16 %v1137, %v1133
    %v1314 = vpack.c.b16 %v1142, %v1138
    %v1315 = vpack.c.b16 %v1143, %v1139
    %v1316 = vpack.c.b16 %v1144, %v1140
    %v1317 = vpack.c.b16 %v1145, %v1141
    %v1318 = vpack.c.b16 %v1150, %v1146
    %v1319 = vpack.c.b16 %v1151, %v1147
    %v1320 = vpack.c.b16 %v1152, %v1148
    %v1321 = vpack.c.b16 %v1153, %v1149
    %v1322 = vpack.c.b16 %v1158, %v1154
    %v1323 = vpack.c.b16 %v1159, %v1155
    %v1324 = vpack.c.b16 %v1160, %v1156
    %v1325 = vpack.c.b16 %v1161, %v1157
    %v1326 = vpack.c.b16 %v1166, %v1162
    %v1327 = vpack.c.b16 %v1167, %v1163
    %v1328 = vpack.c.b16 %v1168, %v1164
    %v1329 = vpack.c.b16 %v1169, %v1165
    %v1330 = vpack.c.b16 %v1174, %v1170
    %v1331 = vpack.c.b16 %v1175, %v1171
    %v1332 = vpack.c.b16 %v1176, %v1172
    %v1333 = vpack.c.b16 %v1177, %v1173
    %v1334 = vpack.c.b16 %v1182, %v1178
    %v1335 = vpack.c.b16 %v1183, %v1179
    %v1336 = vpack.c.b16 %v1184, %v1180
    %v1337 = vpack.c.b16 %v1185, %v1181
    %v1338 = vpack.c.b16 %v1190, %v1186
    %v1339 = vpack.c.b16 %v1191, %v1187
    %v1340 = vpack.c.b16 %v1192, %v1188
    %v1341 = vpack.c.b16 %v1193, %v1189
    %v1342 = vpack.c.b16 %v1198, %v1194
    %v1343 = vpack.c.b16 %v1199, %v1195
    %v1344 = vpack.c.b16 %v1200, %v1196
    %v1345 = vpack.c.b16 %v1201, %v1197
    %v1346 = vpack.c.b16 %v1206, %v1202
    %v1347 = vpack.c.b16 %v1207, %v1203
    %v1348 = vpack.c.b16 %v1208, %v1204
    %v1349 = vpack.c.b16 %v1209, %v1205
    %v1350 = vpack.c.b16 %v1214, %v1210
    %v1351 = vpack.c.b16 %v1215, %v1211
    %v1352 = vpack.c.b16 %v1216, %v1212
    %v1353 = vpack.c.b16 %v1217, %v1213
    %v1354 = vpack.c.b16 %v1222, %v1218
    %v1355 = vpack.c.b16 %v1223, %v1219
    %v1356 = vpack.c.b16 %v1224, %v1220
    %v1357 = vpack.c.b16 %v1225, %v1221
    %v1358 = vpack.c.b16 %v1230, %v1226
    %v1359 = vpack.c.b16 %v1231, %v1227
    %v1360 = vpack.c.b16 %v1232, %v1228
    %v1361 = vpack.c.b16 %v1233, %v1229
    %1490 = vmatprep.subr.bf16.mxu0 %v1235
    %1491 = vmatpush1.bf16.msra.mxu0 %v1234
    %1492 = vmatprep.subr.bf16.mxu0 %v1239
    %1493 = vmatpush1.bf16.msra.mxu0 %v1238
    %1494 = vmatprep.subr.bf16.mxu0 %v1243
    %1495 = vmatpush1.bf16.msra.mxu0 %v1242
    %1496 = vmatprep.subr.bf16.mxu0 %v1247
    %1497 = vmatpush1.bf16.msra.mxu0 %v1246
    %1498 = vmatprep.subr.bf16.mxu0 %v1251
    %1499 = vmatpush1.bf16.msra.mxu0 %v1250
    %1500 = vmatprep.subr.bf16.mxu0 %v1255
    %1501 = vmatpush1.bf16.msra.mxu0 %v1254
    %1502 = vmatprep.subr.bf16.mxu0 %v1259
    %1503 = vmatpush1.bf16.msra.mxu0 %v1258
    %1504 = vmatprep.subr.bf16.mxu0 %v1263
    %1505 = vmatpush1.bf16.msra.mxu0 %v1262
    %1506 = vmatprep.subr.bf16.mxu0 %v1267
    %1507 = vmatpush1.bf16.msra.mxu0 %v1266
    %1508 = vmatprep.subr.bf16.mxu0 %v1271
    %1509 = vmatpush1.bf16.msra.mxu0 %v1270
    %1510 = vmatprep.subr.bf16.mxu0 %v1275
    %1511 = vmatpush1.bf16.msra.mxu0 %v1274
    %1512 = vmatprep.subr.bf16.mxu0 %v1279
    %1513 = vmatpush1.bf16.msra.mxu0 %v1278
    %1514 = vmatprep.subr.bf16.mxu0 %v1283
    %1515 = vmatpush1.bf16.msra.mxu0 %v1282
    %1516 = vmatprep.subr.bf16.mxu0 %v1287
    %1517 = vmatpush1.bf16.msra.mxu0 %v1286
    %1518 = vmatprep.subr.bf16.mxu0 %v1291
    %1519 = vmatpush1.bf16.msra.mxu0 %v1290
    %1520 = vmatprep.subr.bf16.mxu0 %v1295
    %1521 = vmatpush1.bf16.msra.mxu0 %v1294
    %1522 = vmatprep.mubr.bf16.mxu0 %v697
    %1523 = vmatmul.mubr.bf16.gmra.mrb[0].mxu0 %v696
    %v1524 = vpop.f32.mrb[0].mxu0
    %v1525 = vadd.f32 %v833, %v1524
    %v1526 = vpop.f32.mrb[0].mxu0
    %v1527 = vadd.f32 %v837, %v1526
    %v1528 = vpop.f32.mrb[0].mxu0
    %v1529 = vadd.f32 %v833, %v1528
    %v1530 = vpop.f32.mrb[0].mxu0
    %v1531 = vadd.f32 %v837, %v1530
    %1532 = vdwg.mxu0
    %1533 = vmatprep.subr.bf16.mxu0 %v1299
    %1534 = vmatpush1.bf16.msra.mxu0 %v1298
    %1535 = vmatprep.subr.bf16.mxu0 %v1303
    %1536 = vmatpush1.bf16.msra.mxu0 %v1302
    %1537 = vmatprep.subr.bf16.mxu0 %v1307
    %1538 = vmatpush1.bf16.msra.mxu0 %v1306
    %1539 = vmatprep.subr.bf16.mxu0 %v1311
    %1540 = vmatpush1.bf16.msra.mxu0 %v1310
    %1541 = vmatprep.subr.bf16.mxu0 %v1315
    %1542 = vmatpush1.bf16.msra.mxu0 %v1314
    %1543 = vmatprep.subr.bf16.mxu0 %v1319
    %1544 = vmatpush1.bf16.msra.mxu0 %v1318
    %1545 = vmatprep.subr.bf16.mxu0 %v1323
    %1546 = vmatpush1.bf16.msra.mxu0 %v1322
    %1547 = vmatprep.subr.bf16.mxu0 %v1327
    %1548 = vmatpush1.bf16.msra.mxu0 %v1326
    %1549 = vmatprep.subr.bf16.mxu0 %v1331
    %1550 = vmatpush1.bf16.msra.mxu0 %v1330
    %1551 = vmatprep.subr.bf16.mxu0 %v1335
    %1552 = vmatpush1.bf16.msra.mxu0 %v1334
    %1553 = vmatprep.subr.bf16.mxu0 %v1339
    %1554 = vmatpush1.bf16.msra.mxu0 %v1338
    %1555 = vmatprep.subr.bf16.mxu0 %v1343
    %1556 = vmatpush1.bf16.msra.mxu0 %v1342
    %1557 = vmatprep.subr.bf16.mxu0 %v1347
    %1558 = vmatpush1.bf16.msra.mxu0 %v1346
    %1559 = vmatprep.subr.bf16.mxu0 %v1351
    %1560 = vmatpush1.bf16.msra.mxu0 %v1350
    %1561 = vmatprep.subr.bf16.mxu0 %v1355
    %1562 = vmatpush1.bf16.msra.mxu0 %v1354
    %1563 = vmatprep.subr.bf16.mxu0 %v1359
    %1564 = vmatpush1.bf16.msra.mxu0 %v1358
    %1565 = vmatprep.mubr.bf16.mxu0 %v699
    %1566 = vmatmul.mubr.bf16.gmra.mrb[0].mxu0 %v698
    %v1567 = vpop.f32.mrb[0].mxu0
    %v1568 = vadd.f32 %v1525, %v1567
    %v1569 = vpop.f32.mrb[0].mxu0
    %v1570 = vadd.f32 %v1527, %v1569
    %v1571 = vpop.f32.mrb[0].mxu0
    %v1572 = vadd.f32 %v1529, %v1571
    %v1573 = vpop.f32.mrb[0].mxu0
    %v1574 = vadd.f32 %v1531, %v1573
    %1575 = vdwg.mxu0
    %1576 = vmatprep.subr.bf16.mxu0 %v1237
    %1577 = vmatpush1.bf16.msra.mxu0 %v1236
    %1578 = vmatprep.subr.bf16.mxu0 %v1241
    %1579 = vmatpush1.bf16.msra.mxu0 %v1240
    %1580 = vmatprep.subr.bf16.mxu0 %v1245
    %1581 = vmatpush1.bf16.msra.mxu0 %v1244
    %1582 = vmatprep.subr.bf16.mxu0 %v1249
    %1583 = vmatpush1.bf16.msra.mxu0 %v1248
    %1584 = vmatprep.subr.bf16.mxu0 %v1253
    %1585 = vmatpush1.bf16.msra.mxu0 %v1252
    %1586 = vmatprep.subr.bf16.mxu0 %v1257
    %1587 = vmatpush1.bf16.msra.mxu0 %v1256
    %1588 = vmatprep.subr.bf16.mxu0 %v1261
    %1589 = vmatpush1.bf16.msra.mxu0 %v1260
    %1590 = vmatprep.subr.bf16.mxu0 %v1265
    %1591 = vmatpush1.bf16.msra.mxu0 %v1264
    %1592 = vmatprep.subr.bf16.mxu0 %v1269
    %1593 = vmatpush1.bf16.msra.mxu0 %v1268
    %1594 = vmatprep.subr.bf16.mxu0 %v1273
    %1595 = vmatpush1.bf16.msra.mxu0 %v1272
    %1596 = vmatprep.subr.bf16.mxu0 %v1277
    %1597 = vmatpush1.bf16.msra.mxu0 %v1276
    %1598 = vmatprep.subr.bf16.mxu0 %v1281
    %1599 = vmatpush1.bf16.msra.mxu0 %v1280
    %1600 = vmatprep.subr.bf16.mxu0 %v1285
    %1601 = vmatpush1.bf16.msra.mxu0 %v1284
    %1602 = vmatprep.subr.bf16.mxu0 %v1289
    %1603 = vmatpush1.bf16.msra.mxu0 %v1288
    %1604 = vmatprep.subr.bf16.mxu0 %v1293
    %1605 = vmatpush1.bf16.msra.mxu0 %v1292
    %1606 = vmatprep.subr.bf16.mxu0 %v1297
    %1607 = vmatpush1.bf16.msra.mxu0 %v1296
    %1608 = vmatprep.mubr.bf16.mxu0 %v697
    %1609 = vmatmul.mubr.bf16.gmra.mrb[0].mxu0 %v696
    %v1610 = vpop.f32.mrb[0].mxu0
    %v1611 = vadd.f32 %v841, %v1610
    %v1612 = vpop.f32.mrb[0].mxu0
    %v1613 = vadd.f32 %v845, %v1612
    %v1614 = vpop.f32.mrb[0].mxu0
    %v1615 = vadd.f32 %v841, %v1614
    %v1616 = vpop.f32.mrb[0].mxu0
    %v1617 = vadd.f32 %v845, %v1616
    %1618 = vdwg.mxu0
    %1619 = vmatprep.subr.bf16.mxu0 %v1301
    %1620 = vmatpush1.bf16.msra.mxu0 %v1300
    %1621 = vmatprep.subr.bf16.mxu0 %v1305
    %1622 = vmatpush1.bf16.msra.mxu0 %v1304
    %1623 = vmatprep.subr.bf16.mxu0 %v1309
    %1624 = vmatpush1.bf16.msra.mxu0 %v1308
    %1625 = vmatprep.subr.bf16.mxu0 %v1313
    %1626 = vmatpush1.bf16.msra.mxu0 %v1312
    %1627 = vmatprep.subr.bf16.mxu0 %v1317
    %1628 = vmatpush1.bf16.msra.mxu0 %v1316
    %1629 = vmatprep.subr.bf16.mxu0 %v1321
    %1630 = vmatpush1.bf16.msra.mxu0 %v1320
    %1631 = vmatprep.subr.bf16.mxu0 %v1325
    %1632 = vmatpush1.bf16.msra.mxu0 %v1324
    %1633 = vmatprep.subr.bf16.mxu0 %v1329
    %1634 = vmatpush1.bf16.msra.mxu0 %v1328
    %1635 = vmatprep.subr.bf16.mxu0 %v1333
    %1636 = vmatpush1.bf16.msra.mxu0 %v1332
    %1637 = vmatprep.subr.bf16.mxu0 %v1337
    %1638 = vmatpush1.bf16.msra.mxu0 %v1336
    %1639 = vmatprep.subr.bf16.mxu0 %v1341
    %1640 = vmatpush1.bf16.msra.mxu0 %v1340
    %1641 = vmatprep.subr.bf16.mxu0 %v1345
    %1642 = vmatpush1.bf16.msra.mxu0 %v1344
    %1643 = vmatprep.subr.bf16.mxu0 %v1349
    %1644 = vmatpush1.bf16.msra.mxu0 %v1348
    %1645 = vmatprep.subr.bf16.mxu0 %v1353
    %1646 = vmatpush1.bf16.msra.mxu0 %v1352
    %1647 = vmatprep.subr.bf16.mxu0 %v1357
    %1648 = vmatpush1.bf16.msra.mxu0 %v1356
    %1649 = vmatprep.subr.bf16.mxu0 %v1361
    %1650 = vmatpush1.bf16.msra.mxu0 %v1360
    %1651 = vmatprep.mubr.bf16.mxu0 %v699
    %1652 = vmatmul.mubr.bf16.gmra.mrb[0].mxu0 %v698
    %v1653 = vpop.f32.mrb[0].mxu0
    %v1654 = vadd.f32 %v1611, %v1653
    %v1655 = vpop.f32.mrb[0].mxu0
    %v1656 = vadd.f32 %v1613, %v1655
    %v1657 = vpop.f32.mrb[0].mxu0
    %v1658 = vadd.f32 %v1615, %v1657
    %v1659 = vpop.f32.mrb[0].mxu0
    %v1660 = vadd.f32 %v1617, %v1659
    %1661 = vdwg.mxu0
    %v1662 = vadd.f32 %v1568, %v1570
    %v1663 = vadd.f32 %v1662, %v1654
    %v1664 = vadd.f32 %v1663, %v1656
    %1665 = vadd.xlane.f32.xlu0 %v1664
    %v1666 = vpop.xlane.xlu0 %1665
    %v1667 = vadd.f32 %v1572, %v1574
    %v1668 = vadd.f32 %v1667, %v1658
    %v1669 = vadd.f32 %v1668, %v1660
    %1670 = vadd.xlane.f32.xlu0 %v1669
    %v1671 = vpop.xlane.xlu0 %1670
    %v1672 = vmul.f32 %v1666, 0.00390625
    %v1673 = vmul.f32 %v1671, 0.00390625
    %v1674 = vmul.f32 %v1568, %v1568
    %v1675 = vmul.f32 %v1570, %v1570
    %v1676 = vmul.f32 %v1654, %v1654
    %v1677 = vmul.f32 %v1656, %v1656
    %v1678 = vmul.f32 %v1572, %v1572
    %v1679 = vmul.f32 %v1574, %v1574
    %v1680 = vmul.f32 %v1658, %v1658
    %v1681 = vmul.f32 %v1660, %v1660
    %v1682 = vadd.f32 %v1674, %v1675
    %v1683 = vadd.f32 %v1682, %v1676
    %v1684 = vadd.f32 %v1683, %v1677
    %1685 = vadd.xlane.f32.xlu0 %v1684
    %v1686 = vpop.xlane.xlu0 %1685
    %v1687 = vadd.f32 %v1678, %v1679
    %v1688 = vadd.f32 %v1687, %v1680
    %v1689 = vadd.f32 %v1688, %v1681
    %1690 = vadd.xlane.f32.xlu0 %v1689
    %v1691 = vpop.xlane.xlu0 %1690
    %v1692 = vmul.f32 %v1686, 0.00390625
    %v1693 = vmul.f32 %v1691, 0.00390625
    %v1694 = vmul.f32 %v1672, %v1672
    %v1695 = vmul.f32 %v1673, %v1673
    %v1696 = vsub.f32 %v1692, %v1694
    %v1697 = vsub.f32 %v1693, %v1695
    %v1698 = vmax.f32 %v1696, 0.0
    %v1699 = vmax.f32 %v1697, 0.0
    %v1700 = vsub.f32 %v1568, %v1672
    %v1701 = vsub.f32 %v1570, %v1672
    %v1702 = vsub.f32 %v1654, %v1672
    %v1703 = vsub.f32 %v1656, %v1672
    %v1704 = vsub.f32 %v1572, %v1673
    %v1705 = vsub.f32 %v1574, %v1673
    %v1706 = vsub.f32 %v1658, %v1673
    %v1707 = vsub.f32 %v1660, %v1673
    %v1708 = vadd.f32 %v1698, 1e-05
    %v1709 = vadd.f32 %v1699, 1e-05
    %v1710 = vrsqrt.pop %v1708
    %v1711 = vrsqrt.pop %v1709
    %v1712 = vmul.f32 %v1700, %v1710
    %v1713 = vmul.f32 %v1701, %v1710
    %v1714 = vmul.f32 %v1702, %v1710
    %v1715 = vmul.f32 %v1703, %v1710
    %v1716 = vmul.f32 %v1704, %v1711
    %v1717 = vmul.f32 %v1705, %v1711
    %v1718 = vmul.f32 %v1706, %v1711
    %v1719 = vmul.f32 %v1707, %v1711
    %v1720 = vld [vmem:[#allocation16] sm:$0xf]
    %v1722 = vlaneseq
    %v1723 = vshrl.u32 %v1722, 7
    %v1724 = vsub.s32 0, %v1723
    %v1725 = vrot.slane %v1720, %v1724
    %v1726 = vlaneseq
    %v1727 = vshrl.u32 %v1726, 7
    %v1728 = vsub.s32 1, %v1727
    %v1729 = vrot.slane %v1720, %v1728
    %v1730 = vlaneseq
    %v1731 = vshrl.u32 %v1730, 7
    %v1732 = vsub.s32 2, %v1731
    %v1733 = vrot.slane %v1720, %v1732
    %v1734 = vlaneseq
    %v1735 = vshrl.u32 %v1734, 7
    %v1736 = vsub.s32 3, %v1735
    %v1737 = vrot.slane %v1720, %v1736
    %v1742 = vmul.f32 %v1712, %v1725
    %v1743 = vmul.f32 %v1713, %v1729
    %v1744 = vmul.f32 %v1714, %v1733
    %v1745 = vmul.f32 %v1715, %v1737
    %v1746 = vmul.f32 %v1716, %v1725
    %v1747 = vmul.f32 %v1717, %v1729
    %v1748 = vmul.f32 %v1718, %v1733
    %v1749 = vmul.f32 %v1719, %v1737
    %v1750 = vld [vmem:[#allocation18] sm:$0xf]
    %v1752 = vlaneseq
    %v1753 = vshrl.u32 %v1752, 7
    %v1754 = vsub.s32 0, %v1753
    %v1755 = vrot.slane %v1750, %v1754
    %v1756 = vlaneseq
    %v1757 = vshrl.u32 %v1756, 7
    %v1758 = vsub.s32 1, %v1757
    %v1759 = vrot.slane %v1750, %v1758
    %v1760 = vlaneseq
    %v1761 = vshrl.u32 %v1760, 7
    %v1762 = vsub.s32 2, %v1761
    %v1763 = vrot.slane %v1750, %v1762
    %v1764 = vlaneseq
    %v1765 = vshrl.u32 %v1764, 7
    %v1766 = vsub.s32 3, %v1765
    %v1767 = vrot.slane %v1750, %v1766
    %v1772 = vadd.f32 %v1742, %v1755
    %v1773 = vadd.f32 %v1743, %v1759
    %v1774 = vadd.f32 %v1744, %v1763
    %v1775 = vadd.f32 %v1745, %v1767
    %v1776 = vadd.f32 %v1746, %v1755
    %v1777 = vadd.f32 %v1747, %v1759
    %v1778 = vadd.f32 %v1748, %v1763
    %v1779 = vadd.f32 %v1749, %v1767
    %vm1780 = vcmp.ge.f32.partialorder %v1772, 0.0
    %vm1781 = vcmp.ge.f32.partialorder %v1773, 0.0
    %vm1782 = vcmp.ge.f32.partialorder %v1774, 0.0
    %vm1783 = vcmp.ge.f32.partialorder %v1775, 0.0
    %vm1784 = vcmp.ge.f32.partialorder %v1776, 0.0
    %vm1785 = vcmp.ge.f32.partialorder %v1777, 0.0
    %vm1786 = vcmp.ge.f32.partialorder %v1778, 0.0
    %vm1787 = vcmp.ge.f32.partialorder %v1779, 0.0
    %v1788 = vstv %s242
    %v1789 = vmul.f32 %v1788, %v1772
    %v1790 = vmul.f32 %v1788, %v1773
    %v1791 = vmul.f32 %v1788, %v1774
    %v1792 = vmul.f32 %v1788, %v1775
    %v1793 = vmul.f32 %v1788, %v1776
    %v1794 = vmul.f32 %v1788, %v1777
    %v1795 = vmul.f32 %v1788, %v1778
    %v1796 = vmul.f32 %v1788, %v1779
    %v1797 = vsel %vm1780, %v1772, %v1789
    %v1798 = vsel %vm1781, %v1773, %v1790
    %v1799 = vsel %vm1782, %v1774, %v1791
    %v1800 = vsel %vm1783, %v1775, %v1792
    %v1801 = vsel %vm1784, %v1776, %v1793
    %v1802 = vsel %vm1785, %v1777, %v1794
    %v1803 = vsel %vm1786, %v1778, %v1795
    %v1804 = vsel %vm1787, %v1779, %v1796
    %v1805 = vpack.c.bf16 %v1801, %v1797
    %v1806 = vpack.c.bf16 %v1802, %v1798
    %v1807 = vpack.c.bf16 %v1803, %v1799
    %v1808 = vpack.c.bf16 %v1804, %v1800
    %v1809 = vld [vmem:[#allocation19] sm:$0xff]
    %v1810 = vld [vmem:[#allocation19 + $0x8] sm:$0xff]
    %v1811 = vld [vmem:[#allocation19 + $0x10] sm:$0xff]
    %v1812 = vld [vmem:[#allocation19 + $0x18] sm:$0xff]
    %v1813 = vld [vmem:[#allocation19 + $0x20] sm:$0xff]
    %v1814 = vld [vmem:[#allocation19 + $0x28] sm:$0xff]
    %v1815 = vld [vmem:[#allocation19 + $0x30] sm:$0xff]
    %v1816 = vld [vmem:[#allocation19 + $0x38] sm:$0xff]
    %v1817 = vld [vmem:[#allocation19 + $0x40] sm:$0xff]
    %v1818 = vld [vmem:[#allocation19 + $0x48] sm:$0xff]
    %v1819 = vld [vmem:[#allocation19 + $0x50] sm:$0xff]
    %v1820 = vld [vmem:[#allocation19 + $0x58] sm:$0xff]
    %v1821 = vld [vmem:[#allocation19 + $0x60] sm:$0xff]
    %v1822 = vld [vmem:[#allocation19 + $0x68] sm:$0xff]
    %v1823 = vld [vmem:[#allocation19 + $0x70] sm:$0xff]
    %v1824 = vld [vmem:[#allocation19 + $0x78] sm:$0xff]
    %v1825 = vld [vmem:[#allocation19 + $0x80] sm:$0xff]
    %v1826 = vld [vmem:[#allocation19 + $0x88] sm:$0xff]
    %v1827 = vld [vmem:[#allocation19 + $0x90] sm:$0xff]
    %v1828 = vld [vmem:[#allocation19 + $0x98] sm:$0xff]
    %v1829 = vld [vmem:[#allocation19 + $0xa0] sm:$0xff]
    %v1830 = vld [vmem:[#allocation19 + $0xa8] sm:$0xff]
    %v1831 = vld [vmem:[#allocation19 + $0xb0] sm:$0xff]
    %v1832 = vld [vmem:[#allocation19 + $0xb8] sm:$0xff]
    %v1833 = vld [vmem:[#allocation19 + $0xc0] sm:$0xff]
    %v1834 = vld [vmem:[#allocation19 + $0xc8] sm:$0xff]
    %v1835 = vld [vmem:[#allocation19 + $0xd0] sm:$0xff]
    %v1836 = vld [vmem:[#allocation19 + $0xd8] sm:$0xff]
    %v1837 = vld [vmem:[#allocation19 + $0xe0] sm:$0xff]
    %v1838 = vld [vmem:[#allocation19 + $0xe8] sm:$0xff]
    %v1839 = vld [vmem:[#allocation19 + $0xf0] sm:$0xff]
    %v1840 = vld [vmem:[#allocation19 + $0xf8] sm:$0xff]
    %v1841 = vld [vmem:[#allocation19 + $0x100] sm:$0xff]
    %v1842 = vld [vmem:[#allocation19 + $0x108] sm:$0xff]
    %v1843 = vld [vmem:[#allocation19 + $0x110] sm:$0xff]
    %v1844 = vld [vmem:[#allocation19 + $0x118] sm:$0xff]
    %v1845 = vld [vmem:[#allocation19 + $0x120] sm:$0xff]
    %v1846 = vld [vmem:[#allocation19 + $0x128] sm:$0xff]
    %v1847 = vld [vmem:[#allocation19 + $0x130] sm:$0xff]
    %v1848 = vld [vmem:[#allocation19 + $0x138] sm:$0xff]
    %v1849 = vld [vmem:[#allocation19 + $0x140] sm:$0xff]
    %v1850 = vld [vmem:[#allocation19 + $0x148] sm:$0xff]
    %v1851 = vld [vmem:[#allocation19 + $0x150] sm:$0xff]
    %v1852 = vld [vmem:[#allocation19 + $0x158] sm:$0xff]
    %v1853 = vld [vmem:[#allocation19 + $0x160] sm:$0xff]
    %v1854 = vld [vmem:[#allocation19 + $0x168] sm:$0xff]
    %v1855 = vld [vmem:[#allocation19 + $0x170] sm:$0xff]
    %v1856 = vld [vmem:[#allocation19 + $0x178] sm:$0xff]
    %v1857 = vld [vmem:[#allocation19 + $0x180] sm:$0xff]
    %v1858 = vld [vmem:[#allocation19 + $0x188] sm:$0xff]
    %v1859 = vld [vmem:[#allocation19 + $0x190] sm:$0xff]
    %v1860 = vld [vmem:[#allocation19 + $0x198] sm:$0xff]
    %v1861 = vld [vmem:[#allocation19 + $0x1a0] sm:$0xff]
    %v1862 = vld [vmem:[#allocation19 + $0x1a8] sm:$0xff]
    %v1863 = vld [vmem:[#allocation19 + $0x1b0] sm:$0xff]
    %v1864 = vld [vmem:[#allocation19 + $0x1b8] sm:$0xff]
    %v1865 = vld [vmem:[#allocation19 + $0x1c0] sm:$0xff]
    %v1866 = vld [vmem:[#allocation19 + $0x1c8] sm:$0xff]
    %v1867 = vld [vmem:[#allocation19 + $0x1d0] sm:$0xff]
    %v1868 = vld [vmem:[#allocation19 + $0x1d8] sm:$0xff]
    %v1869 = vld [vmem:[#allocation19 + $0x1e0] sm:$0xff]
    %v1870 = vld [vmem:[#allocation19 + $0x1e8] sm:$0xff]
    %v1871 = vld [vmem:[#allocation19 + $0x1f0] sm:$0xff]
    %v1872 = vld [vmem:[#allocation19 + $0x1f8] sm:$0xff]
    %v1873 = vld [vmem:[#allocation19 + $0x200] sm:$0xff]
    %v1874 = vld [vmem:[#allocation19 + $0x208] sm:$0xff]
    %v1875 = vld [vmem:[#allocation19 + $0x210] sm:$0xff]
    %v1876 = vld [vmem:[#allocation19 + $0x218] sm:$0xff]
    %v1877 = vld [vmem:[#allocation19 + $0x220] sm:$0xff]
    %v1878 = vld [vmem:[#allocation19 + $0x228] sm:$0xff]
    %v1879 = vld [vmem:[#allocation19 + $0x230] sm:$0xff]
    %v1880 = vld [vmem:[#allocation19 + $0x238] sm:$0xff]
    %v1881 = vld [vmem:[#allocation19 + $0x240] sm:$0xff]
    %v1882 = vld [vmem:[#allocation19 + $0x248] sm:$0xff]
    %v1883 = vld [vmem:[#allocation19 + $0x250] sm:$0xff]
    %v1884 = vld [vmem:[#allocation19 + $0x258] sm:$0xff]
    %v1885 = vld [vmem:[#allocation19 + $0x260] sm:$0xff]
    %v1886 = vld [vmem:[#allocation19 + $0x268] sm:$0xff]
    %v1887 = vld [vmem:[#allocation19 + $0x270] sm:$0xff]
    %v1888 = vld [vmem:[#allocation19 + $0x278] sm:$0xff]
    %v1889 = vld [vmem:[#allocation19 + $0x280] sm:$0xff]
    %v1890 = vld [vmem:[#allocation19 + $0x288] sm:$0xff]
    %v1891 = vld [vmem:[#allocation19 + $0x290] sm:$0xff]
    %v1892 = vld [vmem:[#allocation19 + $0x298] sm:$0xff]
    %v1893 = vld [vmem:[#allocation19 + $0x2a0] sm:$0xff]
    %v1894 = vld [vmem:[#allocation19 + $0x2a8] sm:$0xff]
    %v1895 = vld [vmem:[#allocation19 + $0x2b0] sm:$0xff]
    %v1896 = vld [vmem:[#allocation19 + $0x2b8] sm:$0xff]
    %v1897 = vld [vmem:[#allocation19 + $0x2c0] sm:$0xff]
    %v1898 = vld [vmem:[#allocation19 + $0x2c8] sm:$0xff]
    %v1899 = vld [vmem:[#allocation19 + $0x2d0] sm:$0xff]
    %v1900 = vld [vmem:[#allocation19 + $0x2d8] sm:$0xff]
    %v1901 = vld [vmem:[#allocation19 + $0x2e0] sm:$0xff]
    %v1902 = vld [vmem:[#allocation19 + $0x2e8] sm:$0xff]
    %v1903 = vld [vmem:[#allocation19 + $0x2f0] sm:$0xff]
    %v1904 = vld [vmem:[#allocation19 + $0x2f8] sm:$0xff]
    %v1905 = vld [vmem:[#allocation19 + $0x300] sm:$0xff]
    %v1906 = vld [vmem:[#allocation19 + $0x308] sm:$0xff]
    %v1907 = vld [vmem:[#allocation19 + $0x310] sm:$0xff]
    %v1908 = vld [vmem:[#allocation19 + $0x318] sm:$0xff]
    %v1909 = vld [vmem:[#allocation19 + $0x320] sm:$0xff]
    %v1910 = vld [vmem:[#allocation19 + $0x328] sm:$0xff]
    %v1911 = vld [vmem:[#allocation19 + $0x330] sm:$0xff]
    %v1912 = vld [vmem:[#allocation19 + $0x338] sm:$0xff]
    %v1913 = vld [vmem:[#allocation19 + $0x340] sm:$0xff]
    %v1914 = vld [vmem:[#allocation19 + $0x348] sm:$0xff]
    %v1915 = vld [vmem:[#allocation19 + $0x350] sm:$0xff]
    %v1916 = vld [vmem:[#allocation19 + $0x358] sm:$0xff]
    %v1917 = vld [vmem:[#allocation19 + $0x360] sm:$0xff]
    %v1918 = vld [vmem:[#allocation19 + $0x368] sm:$0xff]
    %v1919 = vld [vmem:[#allocation19 + $0x370] sm:$0xff]
    %v1920 = vld [vmem:[#allocation19 + $0x378] sm:$0xff]
    %v1921 = vld [vmem:[#allocation19 + $0x380] sm:$0xff]
    %v1922 = vld [vmem:[#allocation19 + $0x388] sm:$0xff]
    %v1923 = vld [vmem:[#allocation19 + $0x390] sm:$0xff]
    %v1924 = vld [vmem:[#allocation19 + $0x398] sm:$0xff]
    %v1925 = vld [vmem:[#allocation19 + $0x3a0] sm:$0xff]
    %v1926 = vld [vmem:[#allocation19 + $0x3a8] sm:$0xff]
    %v1927 = vld [vmem:[#allocation19 + $0x3b0] sm:$0xff]
    %v1928 = vld [vmem:[#allocation19 + $0x3b8] sm:$0xff]
    %v1929 = vld [vmem:[#allocation19 + $0x3c0] sm:$0xff]
    %v1930 = vld [vmem:[#allocation19 + $0x3c8] sm:$0xff]
    %v1931 = vld [vmem:[#allocation19 + $0x3d0] sm:$0xff]
    %v1932 = vld [vmem:[#allocation19 + $0x3d8] sm:$0xff]
    %v1933 = vld [vmem:[#allocation19 + $0x3e0] sm:$0xff]
    %v1934 = vld [vmem:[#allocation19 + $0x3e8] sm:$0xff]
    %v1935 = vld [vmem:[#allocation19 + $0x3f0] sm:$0xff]
    %v1936 = vld [vmem:[#allocation19 + $0x3f8] sm:$0xff]
    %v1937 = vld [vmem:[#allocation19 + $0x400] sm:$0xff]
    %v1938 = vld [vmem:[#allocation19 + $0x408] sm:$0xff]
    %v1939 = vld [vmem:[#allocation19 + $0x410] sm:$0xff]
    %v1940 = vld [vmem:[#allocation19 + $0x418] sm:$0xff]
    %v1941 = vld [vmem:[#allocation19 + $0x420] sm:$0xff]
    %v1942 = vld [vmem:[#allocation19 + $0x428] sm:$0xff]
    %v1943 = vld [vmem:[#allocation19 + $0x430] sm:$0xff]
    %v1944 = vld [vmem:[#allocation19 + $0x438] sm:$0xff]
    %v1945 = vld [vmem:[#allocation19 + $0x440] sm:$0xff]
    %v1946 = vld [vmem:[#allocation19 + $0x448] sm:$0xff]
    %v1947 = vld [vmem:[#allocation19 + $0x450] sm:$0xff]
    %v1948 = vld [vmem:[#allocation19 + $0x458] sm:$0xff]
    %v1949 = vld [vmem:[#allocation19 + $0x460] sm:$0xff]
    %v1950 = vld [vmem:[#allocation19 + $0x468] sm:$0xff]
    %v1951 = vld [vmem:[#allocation19 + $0x470] sm:$0xff]
    %v1952 = vld [vmem:[#allocation19 + $0x478] sm:$0xff]
    %v1953 = vld [vmem:[#allocation19 + $0x480] sm:$0xff]
    %v1954 = vld [vmem:[#allocation19 + $0x488] sm:$0xff]
    %v1955 = vld [vmem:[#allocation19 + $0x490] sm:$0xff]
    %v1956 = vld [vmem:[#allocation19 + $0x498] sm:$0xff]
    %v1957 = vld [vmem:[#allocation19 + $0x4a0] sm:$0xff]
    %v1958 = vld [vmem:[#allocation19 + $0x4a8] sm:$0xff]
    %v1959 = vld [vmem:[#allocation19 + $0x4b0] sm:$0xff]
    %v1960 = vld [vmem:[#allocation19 + $0x4b8] sm:$0xff]
    %v1961 = vld [vmem:[#allocation19 + $0x4c0] sm:$0xff]
    %v1962 = vld [vmem:[#allocation19 + $0x4c8] sm:$0xff]
    %v1963 = vld [vmem:[#allocation19 + $0x4d0] sm:$0xff]
    %v1964 = vld [vmem:[#allocation19 + $0x4d8] sm:$0xff]
    %v1965 = vld [vmem:[#allocation19 + $0x4e0] sm:$0xff]
    %v1966 = vld [vmem:[#allocation19 + $0x4e8] sm:$0xff]
    %v1967 = vld [vmem:[#allocation19 + $0x4f0] sm:$0xff]
    %v1968 = vld [vmem:[#allocation19 + $0x4f8] sm:$0xff]
    %v1969 = vld [vmem:[#allocation19 + $0x500] sm:$0xff]
    %v1970 = vld [vmem:[#allocation19 + $0x508] sm:$0xff]
    %v1971 = vld [vmem:[#allocation19 + $0x510] sm:$0xff]
    %v1972 = vld [vmem:[#allocation19 + $0x518] sm:$0xff]
    %v1973 = vld [vmem:[#allocation19 + $0x520] sm:$0xff]
    %v1974 = vld [vmem:[#allocation19 + $0x528] sm:$0xff]
    %v1975 = vld [vmem:[#allocation19 + $0x530] sm:$0xff]
    %v1976 = vld [vmem:[#allocation19 + $0x538] sm:$0xff]
    %v1977 = vld [vmem:[#allocation19 + $0x540] sm:$0xff]
    %v1978 = vld [vmem:[#allocation19 + $0x548] sm:$0xff]
    %v1979 = vld [vmem:[#allocation19 + $0x550] sm:$0xff]
    %v1980 = vld [vmem:[#allocation19 + $0x558] sm:$0xff]
    %v1981 = vld [vmem:[#allocation19 + $0x560] sm:$0xff]
    %v1982 = vld [vmem:[#allocation19 + $0x568] sm:$0xff]
    %v1983 = vld [vmem:[#allocation19 + $0x570] sm:$0xff]
    %v1984 = vld [vmem:[#allocation19 + $0x578] sm:$0xff]
    %v1985 = vld [vmem:[#allocation19 + $0x580] sm:$0xff]
    %v1986 = vld [vmem:[#allocation19 + $0x588] sm:$0xff]
    %v1987 = vld [vmem:[#allocation19 + $0x590] sm:$0xff]
    %v1988 = vld [vmem:[#allocation19 + $0x598] sm:$0xff]
    %v1989 = vld [vmem:[#allocation19 + $0x5a0] sm:$0xff]
    %v1990 = vld [vmem:[#allocation19 + $0x5a8] sm:$0xff]
    %v1991 = vld [vmem:[#allocation19 + $0x5b0] sm:$0xff]
    %v1992 = vld [vmem:[#allocation19 + $0x5b8] sm:$0xff]
    %v1993 = vld [vmem:[#allocation19 + $0x5c0] sm:$0xff]
    %v1994 = vld [vmem:[#allocation19 + $0x5c8] sm:$0xff]
    %v1995 = vld [vmem:[#allocation19 + $0x5d0] sm:$0xff]
    %v1996 = vld [vmem:[#allocation19 + $0x5d8] sm:$0xff]
    %v1997 = vld [vmem:[#allocation19 + $0x5e0] sm:$0xff]
    %v1998 = vld [vmem:[#allocation19 + $0x5e8] sm:$0xff]
    %v1999 = vld [vmem:[#allocation19 + $0x5f0] sm:$0xff]
    %v2000 = vld [vmem:[#allocation19 + $0x5f8] sm:$0xff]
    %v2001 = vld [vmem:[#allocation19 + $0x600] sm:$0xff]
    %v2002 = vld [vmem:[#allocation19 + $0x608] sm:$0xff]
    %v2003 = vld [vmem:[#allocation19 + $0x610] sm:$0xff]
    %v2004 = vld [vmem:[#allocation19 + $0x618] sm:$0xff]
    %v2005 = vld [vmem:[#allocation19 + $0x620] sm:$0xff]
    %v2006 = vld [vmem:[#allocation19 + $0x628] sm:$0xff]
    %v2007 = vld [vmem:[#allocation19 + $0x630] sm:$0xff]
    %v2008 = vld [vmem:[#allocation19 + $0x638] sm:$0xff]
    %v2009 = vld [vmem:[#allocation19 + $0x640] sm:$0xff]
    %v2010 = vld [vmem:[#allocation19 + $0x648] sm:$0xff]
    %v2011 = vld [vmem:[#allocation19 + $0x650] sm:$0xff]
    %v2012 = vld [vmem:[#allocation19 + $0x658] sm:$0xff]
    %v2013 = vld [vmem:[#allocation19 + $0x660] sm:$0xff]
    %v2014 = vld [vmem:[#allocation19 + $0x668] sm:$0xff]
    %v2015 = vld [vmem:[#allocation19 + $0x670] sm:$0xff]
    %v2016 = vld [vmem:[#allocation19 + $0x678] sm:$0xff]
    %v2017 = vld [vmem:[#allocation19 + $0x680] sm:$0xff]
    %v2018 = vld [vmem:[#allocation19 + $0x688] sm:$0xff]
    %v2019 = vld [vmem:[#allocation19 + $0x690] sm:$0xff]
    %v2020 = vld [vmem:[#allocation19 + $0x698] sm:$0xff]
    %v2021 = vld [vmem:[#allocation19 + $0x6a0] sm:$0xff]
    %v2022 = vld [vmem:[#allocation19 + $0x6a8] sm:$0xff]
    %v2023 = vld [vmem:[#allocation19 + $0x6b0] sm:$0xff]
    %v2024 = vld [vmem:[#allocation19 + $0x6b8] sm:$0xff]
    %v2025 = vld [vmem:[#allocation19 + $0x6c0] sm:$0xff]
    %v2026 = vld [vmem:[#allocation19 + $0x6c8] sm:$0xff]
    %v2027 = vld [vmem:[#allocation19 + $0x6d0] sm:$0xff]
    %v2028 = vld [vmem:[#allocation19 + $0x6d8] sm:$0xff]
    %v2029 = vld [vmem:[#allocation19 + $0x6e0] sm:$0xff]
    %v2030 = vld [vmem:[#allocation19 + $0x6e8] sm:$0xff]
    %v2031 = vld [vmem:[#allocation19 + $0x6f0] sm:$0xff]
    %v2032 = vld [vmem:[#allocation19 + $0x6f8] sm:$0xff]
    %v2033 = vld [vmem:[#allocation19 + $0x700] sm:$0xff]
    %v2034 = vld [vmem:[#allocation19 + $0x708] sm:$0xff]
    %v2035 = vld [vmem:[#allocation19 + $0x710] sm:$0xff]
    %v2036 = vld [vmem:[#allocation19 + $0x718] sm:$0xff]
    %v2037 = vld [vmem:[#allocation19 + $0x720] sm:$0xff]
    %v2038 = vld [vmem:[#allocation19 + $0x728] sm:$0xff]
    %v2039 = vld [vmem:[#allocation19 + $0x730] sm:$0xff]
    %v2040 = vld [vmem:[#allocation19 + $0x738] sm:$0xff]
    %v2041 = vld [vmem:[#allocation19 + $0x740] sm:$0xff]
    %v2042 = vld [vmem:[#allocation19 + $0x748] sm:$0xff]
    %v2043 = vld [vmem:[#allocation19 + $0x750] sm:$0xff]
    %v2044 = vld [vmem:[#allocation19 + $0x758] sm:$0xff]
    %v2045 = vld [vmem:[#allocation19 + $0x760] sm:$0xff]
    %v2046 = vld [vmem:[#allocation19 + $0x768] sm:$0xff]
    %v2047 = vld [vmem:[#allocation19 + $0x770] sm:$0xff]
    %v2048 = vld [vmem:[#allocation19 + $0x778] sm:$0xff]
    %v2049 = vld [vmem:[#allocation19 + $0x780] sm:$0xff]
    %v2050 = vld [vmem:[#allocation19 + $0x788] sm:$0xff]
    %v2051 = vld [vmem:[#allocation19 + $0x790] sm:$0xff]
    %v2052 = vld [vmem:[#allocation19 + $0x798] sm:$0xff]
    %v2053 = vld [vmem:[#allocation19 + $0x7a0] sm:$0xff]
    %v2054 = vld [vmem:[#allocation19 + $0x7a8] sm:$0xff]
    %v2055 = vld [vmem:[#allocation19 + $0x7b0] sm:$0xff]
    %v2056 = vld [vmem:[#allocation19 + $0x7b8] sm:$0xff]
    %v2057 = vld [vmem:[#allocation19 + $0x7c0] sm:$0xff]
    %v2058 = vld [vmem:[#allocation19 + $0x7c8] sm:$0xff]
    %v2059 = vld [vmem:[#allocation19 + $0x7d0] sm:$0xff]
    %v2060 = vld [vmem:[#allocation19 + $0x7d8] sm:$0xff]
    %v2061 = vld [vmem:[#allocation19 + $0x7e0] sm:$0xff]
    %v2062 = vld [vmem:[#allocation19 + $0x7e8] sm:$0xff]
    %v2063 = vld [vmem:[#allocation19 + $0x7f0] sm:$0xff]
    %v2064 = vld [vmem:[#allocation19 + $0x7f8] sm:$0xff]
    %v2065 = vld [vmem:[#allocation19 + $0x800] sm:$0xff]
    %v2066 = vld [vmem:[#allocation19 + $0x808] sm:$0xff]
    %v2067 = vld [vmem:[#allocation19 + $0x810] sm:$0xff]
    %v2068 = vld [vmem:[#allocation19 + $0x818] sm:$0xff]
    %v2069 = vld [vmem:[#allocation19 + $0x820] sm:$0xff]
    %v2070 = vld [vmem:[#allocation19 + $0x828] sm:$0xff]
    %v2071 = vld [vmem:[#allocation19 + $0x830] sm:$0xff]
    %v2072 = vld [vmem:[#allocation19 + $0x838] sm:$0xff]
    %v2073 = vld [vmem:[#allocation19 + $0x840] sm:$0xff]
    %v2074 = vld [vmem:[#allocation19 + $0x848] sm:$0xff]
    %v2075 = vld [vmem:[#allocation19 + $0x850] sm:$0xff]
    %v2076 = vld [vmem:[#allocation19 + $0x858] sm:$0xff]
    %v2077 = vld [vmem:[#allocation19 + $0x860] sm:$0xff]
    %v2078 = vld [vmem:[#allocation19 + $0x868] sm:$0xff]
    %v2079 = vld [vmem:[#allocation19 + $0x870] sm:$0xff]
    %v2080 = vld [vmem:[#allocation19 + $0x878] sm:$0xff]
    %v2081 = vld [vmem:[#allocation19 + $0x880] sm:$0xff]
    %v2082 = vld [vmem:[#allocation19 + $0x888] sm:$0xff]
    %v2083 = vld [vmem:[#allocation19 + $0x890] sm:$0xff]
    %v2084 = vld [vmem:[#allocation19 + $0x898] sm:$0xff]
    %v2085 = vld [vmem:[#allocation19 + $0x8a0] sm:$0xff]
    %v2086 = vld [vmem:[#allocation19 + $0x8a8] sm:$0xff]
    %v2087 = vld [vmem:[#allocation19 + $0x8b0] sm:$0xff]
    %v2088 = vld [vmem:[#allocation19 + $0x8b8] sm:$0xff]
    %v2089 = vld [vmem:[#allocation19 + $0x8c0] sm:$0xff]
    %v2090 = vld [vmem:[#allocation19 + $0x8c8] sm:$0xff]
    %v2091 = vld [vmem:[#allocation19 + $0x8d0] sm:$0xff]
    %v2092 = vld [vmem:[#allocation19 + $0x8d8] sm:$0xff]
    %v2093 = vld [vmem:[#allocation19 + $0x8e0] sm:$0xff]
    %v2094 = vld [vmem:[#allocation19 + $0x8e8] sm:$0xff]
    %v2095 = vld [vmem:[#allocation19 + $0x8f0] sm:$0xff]
    %v2096 = vld [vmem:[#allocation19 + $0x8f8] sm:$0xff]
    %v2097 = vld [vmem:[#allocation19 + $0x900] sm:$0xff]
    %v2098 = vld [vmem:[#allocation19 + $0x908] sm:$0xff]
    %v2099 = vld [vmem:[#allocation19 + $0x910] sm:$0xff]
    %v2100 = vld [vmem:[#allocation19 + $0x918] sm:$0xff]
    %v2101 = vld [vmem:[#allocation19 + $0x920] sm:$0xff]
    %v2102 = vld [vmem:[#allocation19 + $0x928] sm:$0xff]
    %v2103 = vld [vmem:[#allocation19 + $0x930] sm:$0xff]
    %v2104 = vld [vmem:[#allocation19 + $0x938] sm:$0xff]
    %v2105 = vld [vmem:[#allocation19 + $0x940] sm:$0xff]
    %v2106 = vld [vmem:[#allocation19 + $0x948] sm:$0xff]
    %v2107 = vld [vmem:[#allocation19 + $0x950] sm:$0xff]
    %v2108 = vld [vmem:[#allocation19 + $0x958] sm:$0xff]
    %v2109 = vld [vmem:[#allocation19 + $0x960] sm:$0xff]
    %v2110 = vld [vmem:[#allocation19 + $0x968] sm:$0xff]
    %v2111 = vld [vmem:[#allocation19 + $0x970] sm:$0xff]
    %v2112 = vld [vmem:[#allocation19 + $0x978] sm:$0xff]
    %v2113 = vld [vmem:[#allocation19 + $0x980] sm:$0xff]
    %v2114 = vld [vmem:[#allocation19 + $0x988] sm:$0xff]
    %v2115 = vld [vmem:[#allocation19 + $0x990] sm:$0xff]
    %v2116 = vld [vmem:[#allocation19 + $0x998] sm:$0xff]
    %v2117 = vld [vmem:[#allocation19 + $0x9a0] sm:$0xff]
    %v2118 = vld [vmem:[#allocation19 + $0x9a8] sm:$0xff]
    %v2119 = vld [vmem:[#allocation19 + $0x9b0] sm:$0xff]
    %v2120 = vld [vmem:[#allocation19 + $0x9b8] sm:$0xff]
    %v2121 = vld [vmem:[#allocation19 + $0x9c0] sm:$0xff]
    %v2122 = vld [vmem:[#allocation19 + $0x9c8] sm:$0xff]
    %v2123 = vld [vmem:[#allocation19 + $0x9d0] sm:$0xff]
    %v2124 = vld [vmem:[#allocation19 + $0x9d8] sm:$0xff]
    %v2125 = vld [vmem:[#allocation19 + $0x9e0] sm:$0xff]
    %v2126 = vld [vmem:[#allocation19 + $0x9e8] sm:$0xff]
    %v2127 = vld [vmem:[#allocation19 + $0x9f0] sm:$0xff]
    %v2128 = vld [vmem:[#allocation19 + $0x9f8] sm:$0xff]
    %v2129 = vld [vmem:[#allocation19 + $0xa00] sm:$0xff]
    %v2130 = vld [vmem:[#allocation19 + $0xa08] sm:$0xff]
    %v2131 = vld [vmem:[#allocation19 + $0xa10] sm:$0xff]
    %v2132 = vld [vmem:[#allocation19 + $0xa18] sm:$0xff]
    %v2133 = vld [vmem:[#allocation19 + $0xa20] sm:$0xff]
    %v2134 = vld [vmem:[#allocation19 + $0xa28] sm:$0xff]
    %v2135 = vld [vmem:[#allocation19 + $0xa30] sm:$0xff]
    %v2136 = vld [vmem:[#allocation19 + $0xa38] sm:$0xff]
    %v2137 = vld [vmem:[#allocation19 + $0xa40] sm:$0xff]
    %v2138 = vld [vmem:[#allocation19 + $0xa48] sm:$0xff]
    %v2139 = vld [vmem:[#allocation19 + $0xa50] sm:$0xff]
    %v2140 = vld [vmem:[#allocation19 + $0xa58] sm:$0xff]
    %v2141 = vld [vmem:[#allocation19 + $0xa60] sm:$0xff]
    %v2142 = vld [vmem:[#allocation19 + $0xa68] sm:$0xff]
    %v2143 = vld [vmem:[#allocation19 + $0xa70] sm:$0xff]
    %v2144 = vld [vmem:[#allocation19 + $0xa78] sm:$0xff]
    %v2145 = vld [vmem:[#allocation19 + $0xa80] sm:$0xff]
    %v2146 = vld [vmem:[#allocation19 + $0xa88] sm:$0xff]
    %v2147 = vld [vmem:[#allocation19 + $0xa90] sm:$0xff]
    %v2148 = vld [vmem:[#allocation19 + $0xa98] sm:$0xff]
    %v2149 = vld [vmem:[#allocation19 + $0xaa0] sm:$0xff]
    %v2150 = vld [vmem:[#allocation19 + $0xaa8] sm:$0xff]
    %v2151 = vld [vmem:[#allocation19 + $0xab0] sm:$0xff]
    %v2152 = vld [vmem:[#allocation19 + $0xab8] sm:$0xff]
    %v2153 = vld [vmem:[#allocation19 + $0xac0] sm:$0xff]
    %v2154 = vld [vmem:[#allocation19 + $0xac8] sm:$0xff]
    %v2155 = vld [vmem:[#allocation19 + $0xad0] sm:$0xff]
    %v2156 = vld [vmem:[#allocation19 + $0xad8] sm:$0xff]
    %v2157 = vld [vmem:[#allocation19 + $0xae0] sm:$0xff]
    %v2158 = vld [vmem:[#allocation19 + $0xae8] sm:$0xff]
    %v2159 = vld [vmem:[#allocation19 + $0xaf0] sm:$0xff]
    %v2160 = vld [vmem:[#allocation19 + $0xaf8] sm:$0xff]
    %v2161 = vld [vmem:[#allocation19 + $0xb00] sm:$0xff]
    %v2162 = vld [vmem:[#allocation19 + $0xb08] sm:$0xff]
    %v2163 = vld [vmem:[#allocation19 + $0xb10] sm:$0xff]
    %v2164 = vld [vmem:[#allocation19 + $0xb18] sm:$0xff]
    %v2165 = vld [vmem:[#allocation19 + $0xb20] sm:$0xff]
    %v2166 = vld [vmem:[#allocation19 + $0xb28] sm:$0xff]
    %v2167 = vld [vmem:[#allocation19 + $0xb30] sm:$0xff]
    %v2168 = vld [vmem:[#allocation19 + $0xb38] sm:$0xff]
    %v2169 = vld [vmem:[#allocation19 + $0xb40] sm:$0xff]
    %v2170 = vld [vmem:[#allocation19 + $0xb48] sm:$0xff]
    %v2171 = vld [vmem:[#allocation19 + $0xb50] sm:$0xff]
    %v2172 = vld [vmem:[#allocation19 + $0xb58] sm:$0xff]
    %v2173 = vld [vmem:[#allocation19 + $0xb60] sm:$0xff]
    %v2174 = vld [vmem:[#allocation19 + $0xb68] sm:$0xff]
    %v2175 = vld [vmem:[#allocation19 + $0xb70] sm:$0xff]
    %v2176 = vld [vmem:[#allocation19 + $0xb78] sm:$0xff]
    %v2177 = vld [vmem:[#allocation19 + $0xb80] sm:$0xff]
    %v2178 = vld [vmem:[#allocation19 + $0xb88] sm:$0xff]
    %v2179 = vld [vmem:[#allocation19 + $0xb90] sm:$0xff]
    %v2180 = vld [vmem:[#allocation19 + $0xb98] sm:$0xff]
    %v2181 = vld [vmem:[#allocation19 + $0xba0] sm:$0xff]
    %v2182 = vld [vmem:[#allocation19 + $0xba8] sm:$0xff]
    %v2183 = vld [vmem:[#allocation19 + $0xbb0] sm:$0xff]
    %v2184 = vld [vmem:[#allocation19 + $0xbb8] sm:$0xff]
    %v2185 = vld [vmem:[#allocation19 + $0xbc0] sm:$0xff]
    %v2186 = vld [vmem:[#allocation19 + $0xbc8] sm:$0xff]
    %v2187 = vld [vmem:[#allocation19 + $0xbd0] sm:$0xff]
    %v2188 = vld [vmem:[#allocation19 + $0xbd8] sm:$0xff]
    %v2189 = vld [vmem:[#allocation19 + $0xbe0] sm:$0xff]
    %v2190 = vld [vmem:[#allocation19 + $0xbe8] sm:$0xff]
    %v2191 = vld [vmem:[#allocation19 + $0xbf0] sm:$0xff]
    %v2192 = vld [vmem:[#allocation19 + $0xbf8] sm:$0xff]
    %v2577 = vunpack.c.l.b16 %v1809
    %v2578 = vunpack.c.h.b16 %v1809
    %v2579 = vunpack.c.l.b16 %v1810
    %v2580 = vunpack.c.h.b16 %v1810
    %v2581 = vunpack.c.l.b16 %v1811
    %v2582 = vunpack.c.h.b16 %v1811
    %v2583 = vunpack.c.l.b16 %v1812
    %v2584 = vunpack.c.h.b16 %v1812
    %v2585 = vunpack.c.l.b16 %v1813
    %v2586 = vunpack.c.h.b16 %v1813
    %v2587 = vunpack.c.l.b16 %v1814
    %v2588 = vunpack.c.h.b16 %v1814
    %v2589 = vunpack.c.l.b16 %v1815
    %v2590 = vunpack.c.h.b16 %v1815
    %v2591 = vunpack.c.l.b16 %v1816
    %v2592 = vunpack.c.h.b16 %v1816
    %v2593 = vunpack.c.l.b16 %v1817
    %v2594 = vunpack.c.h.b16 %v1817
    %v2595 = vunpack.c.l.b16 %v1818
    %v2596 = vunpack.c.h.b16 %v1818
    %v2597 = vunpack.c.l.b16 %v1819
    %v2598 = vunpack.c.h.b16 %v1819
    %v2599 = vunpack.c.l.b16 %v1820
    %v2600 = vunpack.c.h.b16 %v1820
    %v2601 = vunpack.c.l.b16 %v1821
    %v2602 = vunpack.c.h.b16 %v1821
    %v2603 = vunpack.c.l.b16 %v1822
    %v2604 = vunpack.c.h.b16 %v1822
    %v2605 = vunpack.c.l.b16 %v1823
    %v2606 = vunpack.c.h.b16 %v1823
    %v2607 = vunpack.c.l.b16 %v1824
    %v2608 = vunpack.c.h.b16 %v1824
    %v2609 = vunpack.c.l.b16 %v1825
    %v2610 = vunpack.c.h.b16 %v1825
    %v2611 = vunpack.c.l.b16 %v1826
    %v2612 = vunpack.c.h.b16 %v1826
    %v2613 = vunpack.c.l.b16 %v1827
    %v2614 = vunpack.c.h.b16 %v1827
    %v2615 = vunpack.c.l.b16 %v1828
    %v2616 = vunpack.c.h.b16 %v1828
    %v2617 = vunpack.c.l.b16 %v1829
    %v2618 = vunpack.c.h.b16 %v1829
    %v2619 = vunpack.c.l.b16 %v1830
    %v2620 = vunpack.c.h.b16 %v1830
    %v2621 = vunpack.c.l.b16 %v1831
    %v2622 = vunpack.c.h.b16 %v1831
    %v2623 = vunpack.c.l.b16 %v1832
    %v2624 = vunpack.c.h.b16 %v1832
    %v2625 = vunpack.c.l.b16 %v1833
    %v2626 = vunpack.c.h.b16 %v1833
    %v2627 = vunpack.c.l.b16 %v1834
    %v2628 = vunpack.c.h.b16 %v1834
    %v2629 = vunpack.c.l.b16 %v1835
    %v2630 = vunpack.c.h.b16 %v1835
    %v2631 = vunpack.c.l.b16 %v1836
    %v2632 = vunpack.c.h.b16 %v1836
    %v2633 = vunpack.c.l.b16 %v1837
    %v2634 = vunpack.c.h.b16 %v1837
    %v2635 = vunpack.c.l.b16 %v1838
    %v2636 = vunpack.c.h.b16 %v1838
    %v2637 = vunpack.c.l.b16 %v1839
    %v2638 = vunpack.c.h.b16 %v1839
    %v2639 = vunpack.c.l.b16 %v1840
    %v2640 = vunpack.c.h.b16 %v1840
    %v2641 = vunpack.c.l.b16 %v1841
    %v2642 = vunpack.c.h.b16 %v1841
    %v2643 = vunpack.c.l.b16 %v1842
    %v2644 = vunpack.c.h.b16 %v1842
    %v2645 = vunpack.c.l.b16 %v1843
    %v2646 = vunpack.c.h.b16 %v1843
    %v2647 = vunpack.c.l.b16 %v1844
    %v2648 = vunpack.c.h.b16 %v1844
    %v2649 = vunpack.c.l.b16 %v1845
    %v2650 = vunpack.c.h.b16 %v1845
    %v2651 = vunpack.c.l.b16 %v1846
    %v2652 = vunpack.c.h.b16 %v1846
    %v2653 = vunpack.c.l.b16 %v1847
    %v2654 = vunpack.c.h.b16 %v1847
    %v2655 = vunpack.c.l.b16 %v1848
    %v2656 = vunpack.c.h.b16 %v1848
    %v2657 = vunpack.c.l.b16 %v1849
    %v2658 = vunpack.c.h.b16 %v1849
    %v2659 = vunpack.c.l.b16 %v1850
    %v2660 = vunpack.c.h.b16 %v1850
    %v2661 = vunpack.c.l.b16 %v1851
    %v2662 = vunpack.c.h.b16 %v1851
    %v2663 = vunpack.c.l.b16 %v1852
    %v2664 = vunpack.c.h.b16 %v1852
    %v2665 = vunpack.c.l.b16 %v1853
    %v2666 = vunpack.c.h.b16 %v1853
    %v2667 = vunpack.c.l.b16 %v1854
    %v2668 = vunpack.c.h.b16 %v1854
    %v2669 = vunpack.c.l.b16 %v1855
    %v2670 = vunpack.c.h.b16 %v1855
    %v2671 = vunpack.c.l.b16 %v1856
    %v2672 = vunpack.c.h.b16 %v1856
    %v2673 = vunpack.c.l.b16 %v1857
    %v2674 = vunpack.c.h.b16 %v1857
    %v2675 = vunpack.c.l.b16 %v1858
    %v2676 = vunpack.c.h.b16 %v1858
    %v2677 = vunpack.c.l.b16 %v1859
    %v2678 = vunpack.c.h.b16 %v1859
    %v2679 = vunpack.c.l.b16 %v1860
    %v2680 = vunpack.c.h.b16 %v1860
    %v2681 = vunpack.c.l.b16 %v1861
    %v2682 = vunpack.c.h.b16 %v1861
    %v2683 = vunpack.c.l.b16 %v1862
    %v2684 = vunpack.c.h.b16 %v1862
    %v2685 = vunpack.c.l.b16 %v1863
    %v2686 = vunpack.c.h.b16 %v1863
    %v2687 = vunpack.c.l.b16 %v1864
    %v2688 = vunpack.c.h.b16 %v1864
    %v2689 = vunpack.c.l.b16 %v1865
    %v2690 = vunpack.c.h.b16 %v1865
    %v2691 = vunpack.c.l.b16 %v1866
    %v2692 = vunpack.c.h.b16 %v1866
    %v2693 = vunpack.c.l.b16 %v1867
    %v2694 = vunpack.c.h.b16 %v1867
    %v2695 = vunpack.c.l.b16 %v1868
    %v2696 = vunpack.c.h.b16 %v1868
    %v2697 = vunpack.c.l.b16 %v1869
    %v2698 = vunpack.c.h.b16 %v1869
    %v2699 = vunpack.c.l.b16 %v1870
    %v2700 = vunpack.c.h.b16 %v1870
    %v2701 = vunpack.c.l.b16 %v1871
    %v2702 = vunpack.c.h.b16 %v1871
    %v2703 = vunpack.c.l.b16 %v1872
    %v2704 = vunpack.c.h.b16 %v1872
    %v2705 = vunpack.c.l.b16 %v1873
    %v2706 = vunpack.c.h.b16 %v1873
    %v2707 = vunpack.c.l.b16 %v1874
    %v2708 = vunpack.c.h.b16 %v1874
    %v2709 = vunpack.c.l.b16 %v1875
    %v2710 = vunpack.c.h.b16 %v1875
    %v2711 = vunpack.c.l.b16 %v1876
    %v2712 = vunpack.c.h.b16 %v1876
    %v2713 = vunpack.c.l.b16 %v1877
    %v2714 = vunpack.c.h.b16 %v1877
    %v2715 = vunpack.c.l.b16 %v1878
    %v2716 = vunpack.c.h.b16 %v1878
    %v2717 = vunpack.c.l.b16 %v1879
    %v2718 = vunpack.c.h.b16 %v1879
    %v2719 = vunpack.c.l.b16 %v1880
    %v2720 = vunpack.c.h.b16 %v1880
    %v2721 = vunpack.c.l.b16 %v1881
    %v2722 = vunpack.c.h.b16 %v1881
    %v2723 = vunpack.c.l.b16 %v1882
    %v2724 = vunpack.c.h.b16 %v1882
    %v2725 = vunpack.c.l.b16 %v1883
    %v2726 = vunpack.c.h.b16 %v1883
    %v2727 = vunpack.c.l.b16 %v1884
    %v2728 = vunpack.c.h.b16 %v1884
    %v2729 = vunpack.c.l.b16 %v1885
    %v2730 = vunpack.c.h.b16 %v1885
    %v2731 = vunpack.c.l.b16 %v1886
    %v2732 = vunpack.c.h.b16 %v1886
    %v2733 = vunpack.c.l.b16 %v1887
    %v2734 = vunpack.c.h.b16 %v1887
    %v2735 = vunpack.c.l.b16 %v1888
    %v2736 = vunpack.c.h.b16 %v1888
    %v2737 = vunpack.c.l.b16 %v1889
    %v2738 = vunpack.c.h.b16 %v1889
    %v2739 = vunpack.c.l.b16 %v1890
    %v2740 = vunpack.c.h.b16 %v1890
    %v2741 = vunpack.c.l.b16 %v1891
    %v2742 = vunpack.c.h.b16 %v1891
    %v2743 = vunpack.c.l.b16 %v1892
    %v2744 = vunpack.c.h.b16 %v1892
    %v2745 = vunpack.c.l.b16 %v1893
    %v2746 = vunpack.c.h.b16 %v1893
    %v2747 = vunpack.c.l.b16 %v1894
    %v2748 = vunpack.c.h.b16 %v1894
    %v2749 = vunpack.c.l.b16 %v1895
    %v2750 = vunpack.c.h.b16 %v1895
    %v2751 = vunpack.c.l.b16 %v1896
    %v2752 = vunpack.c.h.b16 %v1896
    %v2753 = vunpack.c.l.b16 %v1897
    %v2754 = vunpack.c.h.b16 %v1897
    %v2755 = vunpack.c.l.b16 %v1898
    %v2756 = vunpack.c.h.b16 %v1898
    %v2757 = vunpack.c.l.b16 %v1899
    %v2758 = vunpack.c.h.b16 %v1899
    %v2759 = vunpack.c.l.b16 %v1900
    %v2760 = vunpack.c.h.b16 %v1900
    %v2761 = vunpack.c.l.b16 %v1901
    %v2762 = vunpack.c.h.b16 %v1901
    %v2763 = vunpack.c.l.b16 %v1902
    %v2764 = vunpack.c.h.b16 %v1902
    %v2765 = vunpack.c.l.b16 %v1903
    %v2766 = vunpack.c.h.b16 %v1903
    %v2767 = vunpack.c.l.b16 %v1904
    %v2768 = vunpack.c.h.b16 %v1904
    %v2769 = vunpack.c.l.b16 %v1905
    %v2770 = vunpack.c.h.b16 %v1905
    %v2771 = vunpack.c.l.b16 %v1906
    %v2772 = vunpack.c.h.b16 %v1906
    %v2773 = vunpack.c.l.b16 %v1907
    %v2774 = vunpack.c.h.b16 %v1907
    %v2775 = vunpack.c.l.b16 %v1908
    %v2776 = vunpack.c.h.b16 %v1908
    %v2777 = vunpack.c.l.b16 %v1909
    %v2778 = vunpack.c.h.b16 %v1909
    %v2779 = vunpack.c.l.b16 %v1910
    %v2780 = vunpack.c.h.b16 %v1910
    %v2781 = vunpack.c.l.b16 %v1911
    %v2782 = vunpack.c.h.b16 %v1911
    %v2783 = vunpack.c.l.b16 %v1912
    %v2784 = vunpack.c.h.b16 %v1912
    %v2785 = vunpack.c.l.b16 %v1913
    %v2786 = vunpack.c.h.b16 %v1913
    %v2787 = vunpack.c.l.b16 %v1914
    %v2788 = vunpack.c.h.b16 %v1914
    %v2789 = vunpack.c.l.b16 %v1915
    %v2790 = vunpack.c.h.b16 %v1915
    %v2791 = vunpack.c.l.b16 %v1916
    %v2792 = vunpack.c.h.b16 %v1916
    %v2793 = vunpack.c.l.b16 %v1917
    %v2794 = vunpack.c.h.b16 %v1917
    %v2795 = vunpack.c.l.b16 %v1918
    %v2796 = vunpack.c.h.b16 %v1918
    %v2797 = vunpack.c.l.b16 %v1919
    %v2798 = vunpack.c.h.b16 %v1919
    %v2799 = vunpack.c.l.b16 %v1920
    %v2800 = vunpack.c.h.b16 %v1920
    %v2801 = vunpack.c.l.b16 %v1921
    %v2802 = vunpack.c.h.b16 %v1921
    %v2803 = vunpack.c.l.b16 %v1922
    %v2804 = vunpack.c.h.b16 %v1922
    %v2805 = vunpack.c.l.b16 %v1923
    %v2806 = vunpack.c.h.b16 %v1923
    %v2807 = vunpack.c.l.b16 %v1924
    %v2808 = vunpack.c.h.b16 %v1924
    %v2809 = vunpack.c.l.b16 %v1925
    %v2810 = vunpack.c.h.b16 %v1925
    %v2811 = vunpack.c.l.b16 %v1926
    %v2812 = vunpack.c.h.b16 %v1926
    %v2813 = vunpack.c.l.b16 %v1927
    %v2814 = vunpack.c.h.b16 %v1927
    %v2815 = vunpack.c.l.b16 %v1928
    %v2816 = vunpack.c.h.b16 %v1928
    %v2817 = vunpack.c.l.b16 %v1929
    %v2818 = vunpack.c.h.b16 %v1929
    %v2819 = vunpack.c.l.b16 %v1930
    %v2820 = vunpack.c.h.b16 %v1930
    %v2821 = vunpack.c.l.b16 %v1931
    %v2822 = vunpack.c.h.b16 %v1931
    %v2823 = vunpack.c.l.b16 %v1932
    %v2824 = vunpack.c.h.b16 %v1932
    %v2825 = vunpack.c.l.b16 %v1933
    %v2826 = vunpack.c.h.b16 %v1933
    %v2827 = vunpack.c.l.b16 %v1934
    %v2828 = vunpack.c.h.b16 %v1934
    %v2829 = vunpack.c.l.b16 %v1935
    %v2830 = vunpack.c.h.b16 %v1935
    %v2831 = vunpack.c.l.b16 %v1936
    %v2832 = vunpack.c.h.b16 %v1936
    %v2833 = vunpack.c.l.b16 %v1937
    %v2834 = vunpack.c.h.b16 %v1937
    %v2835 = vunpack.c.l.b16 %v1938
    %v2836 = vunpack.c.h.b16 %v1938
    %v2837 = vunpack.c.l.b16 %v1939
    %v2838 = vunpack.c.h.b16 %v1939
    %v2839 = vunpack.c.l.b16 %v1940
    %v2840 = vunpack.c.h.b16 %v1940
    %v2841 = vunpack.c.l.b16 %v1941
    %v2842 = vunpack.c.h.b16 %v1941
    %v2843 = vunpack.c.l.b16 %v1942
    %v2844 = vunpack.c.h.b16 %v1942
    %v2845 = vunpack.c.l.b16 %v1943
    %v2846 = vunpack.c.h.b16 %v1943
    %v2847 = vunpack.c.l.b16 %v1944
    %v2848 = vunpack.c.h.b16 %v1944
    %v2849 = vunpack.c.l.b16 %v1945
    %v2850 = vunpack.c.h.b16 %v1945
    %v2851 = vunpack.c.l.b16 %v1946
    %v2852 = vunpack.c.h.b16 %v1946
    %v2853 = vunpack.c.l.b16 %v1947
    %v2854 = vunpack.c.h.b16 %v1947
    %v2855 = vunpack.c.l.b16 %v1948
    %v2856 = vunpack.c.h.b16 %v1948
    %v2857 = vunpack.c.l.b16 %v1949
    %v2858 = vunpack.c.h.b16 %v1949
    %v2859 = vunpack.c.l.b16 %v1950
    %v2860 = vunpack.c.h.b16 %v1950
    %v2861 = vunpack.c.l.b16 %v1951
    %v2862 = vunpack.c.h.b16 %v1951
    %v2863 = vunpack.c.l.b16 %v1952
    %v2864 = vunpack.c.h.b16 %v1952
    %v2865 = vunpack.c.l.b16 %v1953
    %v2866 = vunpack.c.h.b16 %v1953
    %v2867 = vunpack.c.l.b16 %v1954
    %v2868 = vunpack.c.h.b16 %v1954
    %v2869 = vunpack.c.l.b16 %v1955
    %v2870 = vunpack.c.h.b16 %v1955
    %v2871 = vunpack.c.l.b16 %v1956
    %v2872 = vunpack.c.h.b16 %v1956
    %v2873 = vunpack.c.l.b16 %v1957
    %v2874 = vunpack.c.h.b16 %v1957
    %v2875 = vunpack.c.l.b16 %v1958
    %v2876 = vunpack.c.h.b16 %v1958
    %v2877 = vunpack.c.l.b16 %v1959
    %v2878 = vunpack.c.h.b16 %v1959
    %v2879 = vunpack.c.l.b16 %v1960
    %v2880 = vunpack.c.h.b16 %v1960
    %v2881 = vunpack.c.l.b16 %v1961
    %v2882 = vunpack.c.h.b16 %v1961
    %v2883 = vunpack.c.l.b16 %v1962
    %v2884 = vunpack.c.h.b16 %v1962
    %v2885 = vunpack.c.l.b16 %v1963
    %v2886 = vunpack.c.h.b16 %v1963
    %v2887 = vunpack.c.l.b16 %v1964
    %v2888 = vunpack.c.h.b16 %v1964
    %v2889 = vunpack.c.l.b16 %v1965
    %v2890 = vunpack.c.h.b16 %v1965
    %v2891 = vunpack.c.l.b16 %v1966
    %v2892 = vunpack.c.h.b16 %v1966
    %v2893 = vunpack.c.l.b16 %v1967
    %v2894 = vunpack.c.h.b16 %v1967
    %v2895 = vunpack.c.l.b16 %v1968
    %v2896 = vunpack.c.h.b16 %v1968
    %v2897 = vunpack.c.l.b16 %v1969
    %v2898 = vunpack.c.h.b16 %v1969
    %v2899 = vunpack.c.l.b16 %v1970
    %v2900 = vunpack.c.h.b16 %v1970
    %v2901 = vunpack.c.l.b16 %v1971
    %v2902 = vunpack.c.h.b16 %v1971
    %v2903 = vunpack.c.l.b16 %v1972
    %v2904 = vunpack.c.h.b16 %v1972
    %v2905 = vunpack.c.l.b16 %v1973
    %v2906 = vunpack.c.h.b16 %v1973
    %v2907 = vunpack.c.l.b16 %v1974
    %v2908 = vunpack.c.h.b16 %v1974
    %v2909 = vunpack.c.l.b16 %v1975
    %v2910 = vunpack.c.h.b16 %v1975
    %v2911 = vunpack.c.l.b16 %v1976
    %v2912 = vunpack.c.h.b16 %v1976
    %v2913 = vunpack.c.l.b16 %v1977
    %v2914 = vunpack.c.h.b16 %v1977
    %v2915 = vunpack.c.l.b16 %v1978
    %v2916 = vunpack.c.h.b16 %v1978
    %v2917 = vunpack.c.l.b16 %v1979
    %v2918 = vunpack.c.h.b16 %v1979
    %v2919 = vunpack.c.l.b16 %v1980
    %v2920 = vunpack.c.h.b16 %v1980
    %v2921 = vunpack.c.l.b16 %v1981
    %v2922 = vunpack.c.h.b16 %v1981
    %v2923 = vunpack.c.l.b16 %v1982
    %v2924 = vunpack.c.h.b16 %v1982
    %v2925 = vunpack.c.l.b16 %v1983
    %v2926 = vunpack.c.h.b16 %v1983
    %v2927 = vunpack.c.l.b16 %v1984
    %v2928 = vunpack.c.h.b16 %v1984
    %v2929 = vunpack.c.l.b16 %v1985
    %v2930 = vunpack.c.h.b16 %v1985
    %v2931 = vunpack.c.l.b16 %v1986
    %v2932 = vunpack.c.h.b16 %v1986
    %v2933 = vunpack.c.l.b16 %v1987
    %v2934 = vunpack.c.h.b16 %v1987
    %v2935 = vunpack.c.l.b16 %v1988
    %v2936 = vunpack.c.h.b16 %v1988
    %v2937 = vunpack.c.l.b16 %v1989
    %v2938 = vunpack.c.h.b16 %v1989
    %v2939 = vunpack.c.l.b16 %v1990
    %v2940 = vunpack.c.h.b16 %v1990
    %v2941 = vunpack.c.l.b16 %v1991
    %v2942 = vunpack.c.h.b16 %v1991
    %v2943 = vunpack.c.l.b16 %v1992
    %v2944 = vunpack.c.h.b16 %v1992
    %v2945 = vunpack.c.l.b16 %v1993
    %v2946 = vunpack.c.h.b16 %v1993
    %v2947 = vunpack.c.l.b16 %v1994
    %v2948 = vunpack.c.h.b16 %v1994
    %v2949 = vunpack.c.l.b16 %v1995
    %v2950 = vunpack.c.h.b16 %v1995
    %v2951 = vunpack.c.l.b16 %v1996
    %v2952 = vunpack.c.h.b16 %v1996
    %v2953 = vunpack.c.l.b16 %v1997
    %v2954 = vunpack.c.h.b16 %v1997
    %v2955 = vunpack.c.l.b16 %v1998
    %v2956 = vunpack.c.h.b16 %v1998
    %v2957 = vunpack.c.l.b16 %v1999
    %v2958 = vunpack.c.h.b16 %v1999
    %v2959 = vunpack.c.l.b16 %v2000
    %v2960 = vunpack.c.h.b16 %v2000
    %v2961 = vunpack.c.l.b16 %v2001
    %v2962 = vunpack.c.h.b16 %v2001
    %v2963 = vunpack.c.l.b16 %v2002
    %v2964 = vunpack.c.h.b16 %v2002
    %v2965 = vunpack.c.l.b16 %v2003
    %v2966 = vunpack.c.h.b16 %v2003
    %v2967 = vunpack.c.l.b16 %v2004
    %v2968 = vunpack.c.h.b16 %v2004
    %v2969 = vunpack.c.l.b16 %v2005
    %v2970 = vunpack.c.h.b16 %v2005
    %v2971 = vunpack.c.l.b16 %v2006
    %v2972 = vunpack.c.h.b16 %v2006
    %v2973 = vunpack.c.l.b16 %v2007
    %v2974 = vunpack.c.h.b16 %v2007
    %v2975 = vunpack.c.l.b16 %v2008
    %v2976 = vunpack.c.h.b16 %v2008
    %v2977 = vunpack.c.l.b16 %v2009
    %v2978 = vunpack.c.h.b16 %v2009
    %v2979 = vunpack.c.l.b16 %v2010
    %v2980 = vunpack.c.h.b16 %v2010
    %v2981 = vunpack.c.l.b16 %v2011
    %v2982 = vunpack.c.h.b16 %v2011
    %v2983 = vunpack.c.l.b16 %v2012
    %v2984 = vunpack.c.h.b16 %v2012
    %v2985 = vunpack.c.l.b16 %v2013
    %v2986 = vunpack.c.h.b16 %v2013
    %v2987 = vunpack.c.l.b16 %v2014
    %v2988 = vunpack.c.h.b16 %v2014
    %v2989 = vunpack.c.l.b16 %v2015
    %v2990 = vunpack.c.h.b16 %v2015
    %v2991 = vunpack.c.l.b16 %v2016
    %v2992 = vunpack.c.h.b16 %v2016
    %v2993 = vunpack.c.l.b16 %v2017
    %v2994 = vunpack.c.h.b16 %v2017
    %v2995 = vunpack.c.l.b16 %v2018
    %v2996 = vunpack.c.h.b16 %v2018
    %v2997 = vunpack.c.l.b16 %v2019
    %v2998 = vunpack.c.h.b16 %v2019
    %v2999 = vunpack.c.l.b16 %v2020
    %v3000 = vunpack.c.h.b16 %v2020
    %v3001 = vunpack.c.l.b16 %v2021
    %v3002 = vunpack.c.h.b16 %v2021
    %v3003 = vunpack.c.l.b16 %v2022
    %v3004 = vunpack.c.h.b16 %v2022
    %v3005 = vunpack.c.l.b16 %v2023
    %v3006 = vunpack.c.h.b16 %v2023
    %v3007 = vunpack.c.l.b16 %v2024
    %v3008 = vunpack.c.h.b16 %v2024
    %v3009 = vunpack.c.l.b16 %v2025
    %v3010 = vunpack.c.h.b16 %v2025
    %v3011 = vunpack.c.l.b16 %v2026
    %v3012 = vunpack.c.h.b16 %v2026
    %v3013 = vunpack.c.l.b16 %v2027
    %v3014 = vunpack.c.h.b16 %v2027
    %v3015 = vunpack.c.l.b16 %v2028
    %v3016 = vunpack.c.h.b16 %v2028
    %v3017 = vunpack.c.l.b16 %v2029
    %v3018 = vunpack.c.h.b16 %v2029
    %v3019 = vunpack.c.l.b16 %v2030
    %v3020 = vunpack.c.h.b16 %v2030
    %v3021 = vunpack.c.l.b16 %v2031
    %v3022 = vunpack.c.h.b16 %v2031
    %v3023 = vunpack.c.l.b16 %v2032
    %v3024 = vunpack.c.h.b16 %v2032
    %v3025 = vunpack.c.l.b16 %v2033
    %v3026 = vunpack.c.h.b16 %v2033
    %v3027 = vunpack.c.l.b16 %v2034
    %v3028 = vunpack.c.h.b16 %v2034
    %v3029 = vunpack.c.l.b16 %v2035
    %v3030 = vunpack.c.h.b16 %v2035
    %v3031 = vunpack.c.l.b16 %v2036
    %v3032 = vunpack.c.h.b16 %v2036
    %v3033 = vunpack.c.l.b16 %v2037
    %v3034 = vunpack.c.h.b16 %v2037
    %v3035 = vunpack.c.l.b16 %v2038
    %v3036 = vunpack.c.h.b16 %v2038
    %v3037 = vunpack.c.l.b16 %v2039
    %v3038 = vunpack.c.h.b16 %v2039
    %v3039 = vunpack.c.l.b16 %v2040
    %v3040 = vunpack.c.h.b16 %v2040
    %v3041 = vunpack.c.l.b16 %v2041
    %v3042 = vunpack.c.h.b16 %v2041
    %v3043 = vunpack.c.l.b16 %v2042
    %v3044 = vunpack.c.h.b16 %v2042
    %v3045 = vunpack.c.l.b16 %v2043
    %v3046 = vunpack.c.h.b16 %v2043
    %v3047 = vunpack.c.l.b16 %v2044
    %v3048 = vunpack.c.h.b16 %v2044
    %v3049 = vunpack.c.l.b16 %v2045
    %v3050 = vunpack.c.h.b16 %v2045
    %v3051 = vunpack.c.l.b16 %v2046
    %v3052 = vunpack.c.h.b16 %v2046
    %v3053 = vunpack.c.l.b16 %v2047
    %v3054 = vunpack.c.h.b16 %v2047
    %v3055 = vunpack.c.l.b16 %v2048
    %v3056 = vunpack.c.h.b16 %v2048
    %v3057 = vunpack.c.l.b16 %v2049
    %v3058 = vunpack.c.h.b16 %v2049
    %v3059 = vunpack.c.l.b16 %v2050
    %v3060 = vunpack.c.h.b16 %v2050
    %v3061 = vunpack.c.l.b16 %v2051
    %v3062 = vunpack.c.h.b16 %v2051
    %v3063 = vunpack.c.l.b16 %v2052
    %v3064 = vunpack.c.h.b16 %v2052
    %v3065 = vunpack.c.l.b16 %v2053
    %v3066 = vunpack.c.h.b16 %v2053
    %v3067 = vunpack.c.l.b16 %v2054
    %v3068 = vunpack.c.h.b16 %v2054
    %v3069 = vunpack.c.l.b16 %v2055
    %v3070 = vunpack.c.h.b16 %v2055
    %v3071 = vunpack.c.l.b16 %v2056
    %v3072 = vunpack.c.h.b16 %v2056
    %v3073 = vunpack.c.l.b16 %v2057
    %v3074 = vunpack.c.h.b16 %v2057
    %v3075 = vunpack.c.l.b16 %v2058
    %v3076 = vunpack.c.h.b16 %v2058
    %v3077 = vunpack.c.l.b16 %v2059
    %v3078 = vunpack.c.h.b16 %v2059
    %v3079 = vunpack.c.l.b16 %v2060
    %v3080 = vunpack.c.h.b16 %v2060
    %v3081 = vunpack.c.l.b16 %v2061
    %v3082 = vunpack.c.h.b16 %v2061
    %v3083 = vunpack.c.l.b16 %v2062
    %v3084 = vunpack.c.h.b16 %v2062
    %v3085 = vunpack.c.l.b16 %v2063
    %v3086 = vunpack.c.h.b16 %v2063
    %v3087 = vunpack.c.l.b16 %v2064
    %v3088 = vunpack.c.h.b16 %v2064
    %v3089 = vunpack.c.l.b16 %v2065
    %v3090 = vunpack.c.h.b16 %v2065
    %v3091 = vunpack.c.l.b16 %v2066
    %v3092 = vunpack.c.h.b16 %v2066
    %v3093 = vunpack.c.l.b16 %v2067
    %v3094 = vunpack.c.h.b16 %v2067
    %v3095 = vunpack.c.l.b16 %v2068
    %v3096 = vunpack.c.h.b16 %v2068
    %v3097 = vunpack.c.l.b16 %v2069
    %v3098 = vunpack.c.h.b16 %v2069
    %v3099 = vunpack.c.l.b16 %v2070
    %v3100 = vunpack.c.h.b16 %v2070
    %v3101 = vunpack.c.l.b16 %v2071
    %v3102 = vunpack.c.h.b16 %v2071
    %v3103 = vunpack.c.l.b16 %v2072
    %v3104 = vunpack.c.h.b16 %v2072
    %v3105 = vunpack.c.l.b16 %v2073
    %v3106 = vunpack.c.h.b16 %v2073
    %v3107 = vunpack.c.l.b16 %v2074
    %v3108 = vunpack.c.h.b16 %v2074
    %v3109 = vunpack.c.l.b16 %v2075
    %v3110 = vunpack.c.h.b16 %v2075
    %v3111 = vunpack.c.l.b16 %v2076
    %v3112 = vunpack.c.h.b16 %v2076
    %v3113 = vunpack.c.l.b16 %v2077
    %v3114 = vunpack.c.h.b16 %v2077
    %v3115 = vunpack.c.l.b16 %v2078
    %v3116 = vunpack.c.h.b16 %v2078
    %v3117 = vunpack.c.l.b16 %v2079
    %v3118 = vunpack.c.h.b16 %v2079
    %v3119 = vunpack.c.l.b16 %v2080
    %v3120 = vunpack.c.h.b16 %v2080
    %v3121 = vunpack.c.l.b16 %v2081
    %v3122 = vunpack.c.h.b16 %v2081
    %v3123 = vunpack.c.l.b16 %v2082
    %v3124 = vunpack.c.h.b16 %v2082
    %v3125 = vunpack.c.l.b16 %v2083
    %v3126 = vunpack.c.h.b16 %v2083
    %v3127 = vunpack.c.l.b16 %v2084
    %v3128 = vunpack.c.h.b16 %v2084
    %v3129 = vunpack.c.l.b16 %v2085
    %v3130 = vunpack.c.h.b16 %v2085
    %v3131 = vunpack.c.l.b16 %v2086
    %v3132 = vunpack.c.h.b16 %v2086
    %v3133 = vunpack.c.l.b16 %v2087
    %v3134 = vunpack.c.h.b16 %v2087
    %v3135 = vunpack.c.l.b16 %v2088
    %v3136 = vunpack.c.h.b16 %v2088
    %v3137 = vunpack.c.l.b16 %v2089
    %v3138 = vunpack.c.h.b16 %v2089
    %v3139 = vunpack.c.l.b16 %v2090
    %v3140 = vunpack.c.h.b16 %v2090
    %v3141 = vunpack.c.l.b16 %v2091
    %v3142 = vunpack.c.h.b16 %v2091
    %v3143 = vunpack.c.l.b16 %v2092
    %v3144 = vunpack.c.h.b16 %v2092
    %v3145 = vunpack.c.l.b16 %v2093
    %v3146 = vunpack.c.h.b16 %v2093
    %v3147 = vunpack.c.l.b16 %v2094
    %v3148 = vunpack.c.h.b16 %v2094
    %v3149 = vunpack.c.l.b16 %v2095
    %v3150 = vunpack.c.h.b16 %v2095
    %v3151 = vunpack.c.l.b16 %v2096
    %v3152 = vunpack.c.h.b16 %v2096
    %v3153 = vunpack.c.l.b16 %v2097
    %v3154 = vunpack.c.h.b16 %v2097
    %v3155 = vunpack.c.l.b16 %v2098
    %v3156 = vunpack.c.h.b16 %v2098
    %v3157 = vunpack.c.l.b16 %v2099
    %v3158 = vunpack.c.h.b16 %v2099
    %v3159 = vunpack.c.l.b16 %v2100
    %v3160 = vunpack.c.h.b16 %v2100
    %v3161 = vunpack.c.l.b16 %v2101
    %v3162 = vunpack.c.h.b16 %v2101
    %v3163 = vunpack.c.l.b16 %v2102
    %v3164 = vunpack.c.h.b16 %v2102
    %v3165 = vunpack.c.l.b16 %v2103
    %v3166 = vunpack.c.h.b16 %v2103
    %v3167 = vunpack.c.l.b16 %v2104
    %v3168 = vunpack.c.h.b16 %v2104
    %v3169 = vunpack.c.l.b16 %v2105
    %v3170 = vunpack.c.h.b16 %v2105
    %v3171 = vunpack.c.l.b16 %v2106
    %v3172 = vunpack.c.h.b16 %v2106
    %v3173 = vunpack.c.l.b16 %v2107
    %v3174 = vunpack.c.h.b16 %v2107
    %v3175 = vunpack.c.l.b16 %v2108
    %v3176 = vunpack.c.h.b16 %v2108
    %v3177 = vunpack.c.l.b16 %v2109
    %v3178 = vunpack.c.h.b16 %v2109
    %v3179 = vunpack.c.l.b16 %v2110
    %v3180 = vunpack.c.h.b16 %v2110
    %v3181 = vunpack.c.l.b16 %v2111
    %v3182 = vunpack.c.h.b16 %v2111
    %v3183 = vunpack.c.l.b16 %v2112
    %v3184 = vunpack.c.h.b16 %v2112
    %v3185 = vunpack.c.l.b16 %v2113
    %v3186 = vunpack.c.h.b16 %v2113
    %v3187 = vunpack.c.l.b16 %v2114
    %v3188 = vunpack.c.h.b16 %v2114
    %v3189 = vunpack.c.l.b16 %v2115
    %v3190 = vunpack.c.h.b16 %v2115
    %v3191 = vunpack.c.l.b16 %v2116
    %v3192 = vunpack.c.h.b16 %v2116
    %v3193 = vunpack.c.l.b16 %v2117
    %v3194 = vunpack.c.h.b16 %v2117
    %v3195 = vunpack.c.l.b16 %v2118
    %v3196 = vunpack.c.h.b16 %v2118
    %v3197 = vunpack.c.l.b16 %v2119
    %v3198 = vunpack.c.h.b16 %v2119
    %v3199 = vunpack.c.l.b16 %v2120
    %v3200 = vunpack.c.h.b16 %v2120
    %v3201 = vunpack.c.l.b16 %v2121
    %v3202 = vunpack.c.h.b16 %v2121
    %v3203 = vunpack.c.l.b16 %v2122
    %v3204 = vunpack.c.h.b16 %v2122
    %v3205 = vunpack.c.l.b16 %v2123
    %v3206 = vunpack.c.h.b16 %v2123
    %v3207 = vunpack.c.l.b16 %v2124
    %v3208 = vunpack.c.h.b16 %v2124
    %v3209 = vunpack.c.l.b16 %v2125
    %v3210 = vunpack.c.h.b16 %v2125
    %v3211 = vunpack.c.l.b16 %v2126
    %v3212 = vunpack.c.h.b16 %v2126
    %v3213 = vunpack.c.l.b16 %v2127
    %v3214 = vunpack.c.h.b16 %v2127
    %v3215 = vunpack.c.l.b16 %v2128
    %v3216 = vunpack.c.h.b16 %v2128
    %v3217 = vunpack.c.l.b16 %v2129
    %v3218 = vunpack.c.h.b16 %v2129
    %v3219 = vunpack.c.l.b16 %v2130
    %v3220 = vunpack.c.h.b16 %v2130
    %v3221 = vunpack.c.l.b16 %v2131
    %v3222 = vunpack.c.h.b16 %v2131
    %v3223 = vunpack.c.l.b16 %v2132
    %v3224 = vunpack.c.h.b16 %v2132
    %v3225 = vunpack.c.l.b16 %v2133
    %v3226 = vunpack.c.h.b16 %v2133
    %v3227 = vunpack.c.l.b16 %v2134
    %v3228 = vunpack.c.h.b16 %v2134
    %v3229 = vunpack.c.l.b16 %v2135
    %v3230 = vunpack.c.h.b16 %v2135
    %v3231 = vunpack.c.l.b16 %v2136
    %v3232 = vunpack.c.h.b16 %v2136
    %v3233 = vunpack.c.l.b16 %v2137
    %v3234 = vunpack.c.h.b16 %v2137
    %v3235 = vunpack.c.l.b16 %v2138
    %v3236 = vunpack.c.h.b16 %v2138
    %v3237 = vunpack.c.l.b16 %v2139
    %v3238 = vunpack.c.h.b16 %v2139
    %v3239 = vunpack.c.l.b16 %v2140
    %v3240 = vunpack.c.h.b16 %v2140
    %v3241 = vunpack.c.l.b16 %v2141
    %v3242 = vunpack.c.h.b16 %v2141
    %v3243 = vunpack.c.l.b16 %v2142
    %v3244 = vunpack.c.h.b16 %v2142
    %v3245 = vunpack.c.l.b16 %v2143
    %v3246 = vunpack.c.h.b16 %v2143
    %v3247 = vunpack.c.l.b16 %v2144
    %v3248 = vunpack.c.h.b16 %v2144
    %v3249 = vunpack.c.l.b16 %v2145
    %v3250 = vunpack.c.h.b16 %v2145
    %v3251 = vunpack.c.l.b16 %v2146
    %v3252 = vunpack.c.h.b16 %v2146
    %v3253 = vunpack.c.l.b16 %v2147
    %v3254 = vunpack.c.h.b16 %v2147
    %v3255 = vunpack.c.l.b16 %v2148
    %v3256 = vunpack.c.h.b16 %v2148
    %v3257 = vunpack.c.l.b16 %v2149
    %v3258 = vunpack.c.h.b16 %v2149
    %v3259 = vunpack.c.l.b16 %v2150
    %v3260 = vunpack.c.h.b16 %v2150
    %v3261 = vunpack.c.l.b16 %v2151
    %v3262 = vunpack.c.h.b16 %v2151
    %v3263 = vunpack.c.l.b16 %v2152
    %v3264 = vunpack.c.h.b16 %v2152
    %v3265 = vunpack.c.l.b16 %v2153
    %v3266 = vunpack.c.h.b16 %v2153
    %v3267 = vunpack.c.l.b16 %v2154
    %v3268 = vunpack.c.h.b16 %v2154
    %v3269 = vunpack.c.l.b16 %v2155
    %v3270 = vunpack.c.h.b16 %v2155
    %v3271 = vunpack.c.l.b16 %v2156
    %v3272 = vunpack.c.h.b16 %v2156
    %v3273 = vunpack.c.l.b16 %v2157
    %v3274 = vunpack.c.h.b16 %v2157
    %v3275 = vunpack.c.l.b16 %v2158
    %v3276 = vunpack.c.h.b16 %v2158
    %v3277 = vunpack.c.l.b16 %v2159
    %v3278 = vunpack.c.h.b16 %v2159
    %v3279 = vunpack.c.l.b16 %v2160
    %v3280 = vunpack.c.h.b16 %v2160
    %v3281 = vunpack.c.l.b16 %v2161
    %v3282 = vunpack.c.h.b16 %v2161
    %v3283 = vunpack.c.l.b16 %v2162
    %v3284 = vunpack.c.h.b16 %v2162
    %v3285 = vunpack.c.l.b16 %v2163
    %v3286 = vunpack.c.h.b16 %v2163
    %v3287 = vunpack.c.l.b16 %v2164
    %v3288 = vunpack.c.h.b16 %v2164
    %v3289 = vunpack.c.l.b16 %v2165
    %v3290 = vunpack.c.h.b16 %v2165
    %v3291 = vunpack.c.l.b16 %v2166
    %v3292 = vunpack.c.h.b16 %v2166
    %v3293 = vunpack.c.l.b16 %v2167
    %v3294 = vunpack.c.h.b16 %v2167
    %v3295 = vunpack.c.l.b16 %v2168
    %v3296 = vunpack.c.h.b16 %v2168
    %v3297 = vunpack.c.l.b16 %v2169
    %v3298 = vunpack.c.h.b16 %v2169
    %v3299 = vunpack.c.l.b16 %v2170
    %v3300 = vunpack.c.h.b16 %v2170
    %v3301 = vunpack.c.l.b16 %v2171
    %v3302 = vunpack.c.h.b16 %v2171
    %v3303 = vunpack.c.l.b16 %v2172
    %v3304 = vunpack.c.h.b16 %v2172
    %v3305 = vunpack.c.l.b16 %v2173
    %v3306 = vunpack.c.h.b16 %v2173
    %v3307 = vunpack.c.l.b16 %v2174
    %v3308 = vunpack.c.h.b16 %v2174
    %v3309 = vunpack.c.l.b16 %v2175
    %v3310 = vunpack.c.h.b16 %v2175
    %v3311 = vunpack.c.l.b16 %v2176
    %v3312 = vunpack.c.h.b16 %v2176
    %v3313 = vunpack.c.l.b16 %v2177
    %v3314 = vunpack.c.h.b16 %v2177
    %v3315 = vunpack.c.l.b16 %v2178
    %v3316 = vunpack.c.h.b16 %v2178
    %v3317 = vunpack.c.l.b16 %v2179
    %v3318 = vunpack.c.h.b16 %v2179
    %v3319 = vunpack.c.l.b16 %v2180
    %v3320 = vunpack.c.h.b16 %v2180
    %v3321 = vunpack.c.l.b16 %v2181
    %v3322 = vunpack.c.h.b16 %v2181
    %v3323 = vunpack.c.l.b16 %v2182
    %v3324 = vunpack.c.h.b16 %v2182
    %v3325 = vunpack.c.l.b16 %v2183
    %v3326 = vunpack.c.h.b16 %v2183
    %v3327 = vunpack.c.l.b16 %v2184
    %v3328 = vunpack.c.h.b16 %v2184
    %v3329 = vunpack.c.l.b16 %v2185
    %v3330 = vunpack.c.h.b16 %v2185
    %v3331 = vunpack.c.l.b16 %v2186
    %v3332 = vunpack.c.h.b16 %v2186
    %v3333 = vunpack.c.l.b16 %v2187
    %v3334 = vunpack.c.h.b16 %v2187
    %v3335 = vunpack.c.l.b16 %v2188
    %v3336 = vunpack.c.h.b16 %v2188
    %v3337 = vunpack.c.l.b16 %v2189
    %v3338 = vunpack.c.h.b16 %v2189
    %v3339 = vunpack.c.l.b16 %v2190
    %v3340 = vunpack.c.h.b16 %v2190
    %v3341 = vunpack.c.l.b16 %v2191
    %v3342 = vunpack.c.h.b16 %v2191
    %v3343 = vunpack.c.l.b16 %v2192
    %v3344 = vunpack.c.h.b16 %v2192
    %v3345 = vpack.c.b16 %v2589, %v2577
    %v3346 = vpack.c.b16 %v2590, %v2578
    %v3347 = vpack.c.b16 %v2591, %v2579
    %v3348 = vpack.c.b16 %v2592, %v2580
    %v3349 = vpack.c.b16 %v2593, %v2581
    %v3350 = vpack.c.b16 %v2594, %v2582
    %v3351 = vpack.c.b16 %v2595, %v2583
    %v3352 = vpack.c.b16 %v2596, %v2584
    %v3353 = vpack.c.b16 %v2597, %v2585
    %v3354 = vpack.c.b16 %v2598, %v2586
    %v3355 = vpack.c.b16 %v2599, %v2587
    %v3356 = vpack.c.b16 %v2600, %v2588
    %v3357 = vpack.c.b16 %v2613, %v2601
    %v3358 = vpack.c.b16 %v2614, %v2602
    %v3359 = vpack.c.b16 %v2615, %v2603
    %v3360 = vpack.c.b16 %v2616, %v2604
    %v3361 = vpack.c.b16 %v2617, %v2605
    %v3362 = vpack.c.b16 %v2618, %v2606
    %v3363 = vpack.c.b16 %v2619, %v2607
    %v3364 = vpack.c.b16 %v2620, %v2608
    %v3365 = vpack.c.b16 %v2621, %v2609
    %v3366 = vpack.c.b16 %v2622, %v2610
    %v3367 = vpack.c.b16 %v2623, %v2611
    %v3368 = vpack.c.b16 %v2624, %v2612
    %v3369 = vpack.c.b16 %v2637, %v2625
    %v3370 = vpack.c.b16 %v2638, %v2626
    %v3371 = vpack.c.b16 %v2639, %v2627
    %v3372 = vpack.c.b16 %v2640, %v2628
    %v3373 = vpack.c.b16 %v2641, %v2629
    %v3374 = vpack.c.b16 %v2642, %v2630
    %v3375 = vpack.c.b16 %v2643, %v2631
    %v3376 = vpack.c.b16 %v2644, %v2632
    %v3377 = vpack.c.b16 %v2645, %v2633
    %v3378 = vpack.c.b16 %v2646, %v2634
    %v3379 = vpack.c.b16 %v2647, %v2635
    %v3380 = vpack.c.b16 %v2648, %v2636
    %v3381 = vpack.c.b16 %v2661, %v2649
    %v3382 = vpack.c.b16 %v2662, %v2650
    %v3383 = vpack.c.b16 %v2663, %v2651
    %v3384 = vpack.c.b16 %v2664, %v2652
    %v3385 = vpack.c.b16 %v2665, %v2653
    %v3386 = vpack.c.b16 %v2666, %v2654
    %v3387 = vpack.c.b16 %v2667, %v2655
    %v3388 = vpack.c.b16 %v2668, %v2656
    %v3389 = vpack.c.b16 %v2669, %v2657
    %v3390 = vpack.c.b16 %v2670, %v2658
    %v3391 = vpack.c.b16 %v2671, %v2659
    %v3392 = vpack.c.b16 %v2672, %v2660
    %v3393 = vpack.c.b16 %v2685, %v2673
    %v3394 = vpack.c.b16 %v2686, %v2674
    %v3395 = vpack.c.b16 %v2687, %v2675
    %v3396 = vpack.c.b16 %v2688, %v2676
    %v3397 = vpack.c.b16 %v2689, %v2677
    %v3398 = vpack.c.b16 %v2690, %v2678
    %v3399 = vpack.c.b16 %v2691, %v2679
    %v3400 = vpack.c.b16 %v2692, %v2680
    %v3401 = vpack.c.b16 %v2693, %v2681
    %v3402 = vpack.c.b16 %v2694, %v2682
    %v3403 = vpack.c.b16 %v2695, %v2683
    %v3404 = vpack.c.b16 %v2696, %v2684
    %v3405 = vpack.c.b16 %v2709, %v2697
    %v3406 = vpack.c.b16 %v2710, %v2698
    %v3407 = vpack.c.b16 %v2711, %v2699
    %v3408 = vpack.c.b16 %v2712, %v2700
    %v3409 = vpack.c.b16 %v2713, %v2701
    %v3410 = vpack.c.b16 %v2714, %v2702
    %v3411 = vpack.c.b16 %v2715, %v2703
    %v3412 = vpack.c.b16 %v2716, %v2704
    %v3413 = vpack.c.b16 %v2717, %v2705
    %v3414 = vpack.c.b16 %v2718, %v2706
    %v3415 = vpack.c.b16 %v2719, %v2707
    %v3416 = vpack.c.b16 %v2720, %v2708
    %v3417 = vpack.c.b16 %v2733, %v2721
    %v3418 = vpack.c.b16 %v2734, %v2722
    %v3419 = vpack.c.b16 %v2735, %v2723
    %v3420 = vpack.c.b16 %v2736, %v2724
    %v3421 = vpack.c.b16 %v2737, %v2725
    %v3422 = vpack.c.b16 %v2738, %v2726
    %v3423 = vpack.c.b16 %v2739, %v2727
    %v3424 = vpack.c.b16 %v2740, %v2728
    %v3425 = vpack.c.b16 %v2741, %v2729
    %v3426 = vpack.c.b16 %v2742, %v2730
    %v3427 = vpack.c.b16 %v2743, %v2731
    %v3428 = vpack.c.b16 %v2744, %v2732
    %v3429 = vpack.c.b16 %v2757, %v2745
    %v3430 = vpack.c.b16 %v2758, %v2746
    %v3431 = vpack.c.b16 %v2759, %v2747
    %v3432 = vpack.c.b16 %v2760, %v2748
    %v3433 = vpack.c.b16 %v2761, %v2749
    %v3434 = vpack.c.b16 %v2762, %v2750
    %v3435 = vpack.c.b16 %v2763, %v2751
    %v3436 = vpack.c.b16 %v2764, %v2752
    %v3437 = vpack.c.b16 %v2765, %v2753
    %v3438 = vpack.c.b16 %v2766, %v2754
    %v3439 = vpack.c.b16 %v2767, %v2755
    %v3440 = vpack.c.b16 %v2768, %v2756
    %v3441 = vpack.c.b16 %v2781, %v2769
    %v3442 = vpack.c.b16 %v2782, %v2770
    %v3443 = vpack.c.b16 %v2783, %v2771
    %v3444 = vpack.c.b16 %v2784, %v2772
    %v3445 = vpack.c.b16 %v2785, %v2773
    %v3446 = vpack.c.b16 %v2786, %v2774
    %v3447 = vpack.c.b16 %v2787, %v2775
    %v3448 = vpack.c.b16 %v2788, %v2776
    %v3449 = vpack.c.b16 %v2789, %v2777
    %v3450 = vpack.c.b16 %v2790, %v2778
    %v3451 = vpack.c.b16 %v2791, %v2779
    %v3452 = vpack.c.b16 %v2792, %v2780
    %v3453 = vpack.c.b16 %v2805, %v2793
    %v3454 = vpack.c.b16 %v2806, %v2794
    %v3455 = vpack.c.b16 %v2807, %v2795
    %v3456 = vpack.c.b16 %v2808, %v2796
    %v3457 = vpack.c.b16 %v2809, %v2797
    %v3458 = vpack.c.b16 %v2810, %v2798
    %v3459 = vpack.c.b16 %v2811, %v2799
    %v3460 = vpack.c.b16 %v2812, %v2800
    %v3461 = vpack.c.b16 %v2813, %v2801
    %v3462 = vpack.c.b16 %v2814, %v2802
    %v3463 = vpack.c.b16 %v2815, %v2803
    %v3464 = vpack.c.b16 %v2816, %v2804
    %v3465 = vpack.c.b16 %v2829, %v2817
    %v3466 = vpack.c.b16 %v2830, %v2818
    %v3467 = vpack.c.b16 %v2831, %v2819
    %v3468 = vpack.c.b16 %v2832, %v2820
    %v3469 = vpack.c.b16 %v2833, %v2821
    %v3470 = vpack.c.b16 %v2834, %v2822
    %v3471 = vpack.c.b16 %v2835, %v2823
    %v3472 = vpack.c.b16 %v2836, %v2824
    %v3473 = vpack.c.b16 %v2837, %v2825
    %v3474 = vpack.c.b16 %v2838, %v2826
    %v3475 = vpack.c.b16 %v2839, %v2827
    %v3476 = vpack.c.b16 %v2840, %v2828
    %v3477 = vpack.c.b16 %v2853, %v2841
    %v3478 = vpack.c.b16 %v2854, %v2842
    %v3479 = vpack.c.b16 %v2855, %v2843
    %v3480 = vpack.c.b16 %v2856, %v2844
    %v3481 = vpack.c.b16 %v2857, %v2845
    %v3482 = vpack.c.b16 %v2858, %v2846
    %v3483 = vpack.c.b16 %v2859, %v2847
    %v3484 = vpack.c.b16 %v2860, %v2848
    %v3485 = vpack.c.b16 %v2861, %v2849
    %v3486 = vpack.c.b16 %v2862, %v2850
    %v3487 = vpack.c.b16 %v2863, %v2851
    %v3488 = vpack.c.b16 %v2864, %v2852
    %v3489 = vpack.c.b16 %v2877, %v2865
    %v3490 = vpack.c.b16 %v2878, %v2866
    %v3491 = vpack.c.b16 %v2879, %v2867
    %v3492 = vpack.c.b16 %v2880, %v2868
    %v3493 = vpack.c.b16 %v2881, %v2869
    %v3494 = vpack.c.b16 %v2882, %v2870
    %v3495 = vpack.c.b16 %v2883, %v2871
    %v3496 = vpack.c.b16 %v2884, %v2872
    %v3497 = vpack.c.b16 %v2885, %v2873
    %v3498 = vpack.c.b16 %v2886, %v2874
    %v3499 = vpack.c.b16 %v2887, %v2875
    %v3500 = vpack.c.b16 %v2888, %v2876
    %v3501 = vpack.c.b16 %v2901, %v2889
    %v3502 = vpack.c.b16 %v2902, %v2890
    %v3503 = vpack.c.b16 %v2903, %v2891
    %v3504 = vpack.c.b16 %v2904, %v2892
    %v3505 = vpack.c.b16 %v2905, %v2893
    %v3506 = vpack.c.b16 %v2906, %v2894
    %v3507 = vpack.c.b16 %v2907, %v2895
    %v3508 = vpack.c.b16 %v2908, %v2896
    %v3509 = vpack.c.b16 %v2909, %v2897
    %v3510 = vpack.c.b16 %v2910, %v2898
    %v3511 = vpack.c.b16 %v2911, %v2899
    %v3512 = vpack.c.b16 %v2912, %v2900
    %v3513 = vpack.c.b16 %v2925, %v2913
    %v3514 = vpack.c.b16 %v2926, %v2914
    %v3515 = vpack.c.b16 %v2927, %v2915
    %v3516 = vpack.c.b16 %v2928, %v2916
    %v3517 = vpack.c.b16 %v2929, %v2917
    %v3518 = vpack.c.b16 %v2930, %v2918
    %v3519 = vpack.c.b16 %v2931, %v2919
    %v3520 = vpack.c.b16 %v2932, %v2920
    %v3521 = vpack.c.b16 %v2933, %v2921
    %v3522 = vpack.c.b16 %v2934, %v2922
    %v3523 = vpack.c.b16 %v2935, %v2923
    %v3524 = vpack.c.b16 %v2936, %v2924
    %v3525 = vpack.c.b16 %v2949, %v2937
    %v3526 = vpack.c.b16 %v2950, %v2938
    %v3527 = vpack.c.b16 %v2951, %v2939
    %v3528 = vpack.c.b16 %v2952, %v2940
    %v3529 = vpack.c.b16 %v2953, %v2941
    %v3530 = vpack.c.b16 %v2954, %v2942
    %v3531 = vpack.c.b16 %v2955, %v2943
    %v3532 = vpack.c.b16 %v2956, %v2944
    %v3533 = vpack.c.b16 %v2957, %v2945
    %v3534 = vpack.c.b16 %v2958, %v2946
    %v3535 = vpack.c.b16 %v2959, %v2947
    %v3536 = vpack.c.b16 %v2960, %v2948
    %v3537 = vpack.c.b16 %v2973, %v2961
    %v3538 = vpack.c.b16 %v2974, %v2962
    %v3539 = vpack.c.b16 %v2975, %v2963
    %v3540 = vpack.c.b16 %v2976, %v2964
    %v3541 = vpack.c.b16 %v2977, %v2965
    %v3542 = vpack.c.b16 %v2978, %v2966
    %v3543 = vpack.c.b16 %v2979, %v2967
    %v3544 = vpack.c.b16 %v2980, %v2968
    %v3545 = vpack.c.b16 %v2981, %v2969
    %v3546 = vpack.c.b16 %v2982, %v2970
    %v3547 = vpack.c.b16 %v2983, %v2971
    %v3548 = vpack.c.b16 %v2984, %v2972
    %v3549 = vpack.c.b16 %v2997, %v2985
    %v3550 = vpack.c.b16 %v2998, %v2986
    %v3551 = vpack.c.b16 %v2999, %v2987
    %v3552 = vpack.c.b16 %v3000, %v2988
    %v3553 = vpack.c.b16 %v3001, %v2989
    %v3554 = vpack.c.b16 %v3002, %v2990
    %v3555 = vpack.c.b16 %v3003, %v2991
    %v3556 = vpack.c.b16 %v3004, %v2992
    %v3557 = vpack.c.b16 %v3005, %v2993
    %v3558 = vpack.c.b16 %v3006, %v2994
    %v3559 = vpack.c.b16 %v3007, %v2995
    %v3560 = vpack.c.b16 %v3008, %v2996
    %v3561 = vpack.c.b16 %v3021, %v3009
    %v3562 = vpack.c.b16 %v3022, %v3010
    %v3563 = vpack.c.b16 %v3023, %v3011
    %v3564 = vpack.c.b16 %v3024, %v3012
    %v3565 = vpack.c.b16 %v3025, %v3013
    %v3566 = vpack.c.b16 %v3026, %v3014
    %v3567 = vpack.c.b16 %v3027, %v3015
    %v3568 = vpack.c.b16 %v3028, %v3016
    %v3569 = vpack.c.b16 %v3029, %v3017
    %v3570 = vpack.c.b16 %v3030, %v3018
    %v3571 = vpack.c.b16 %v3031, %v3019
    %v3572 = vpack.c.b16 %v3032, %v3020
    %v3573 = vpack.c.b16 %v3045, %v3033
    %v3574 = vpack.c.b16 %v3046, %v3034
    %v3575 = vpack.c.b16 %v3047, %v3035
    %v3576 = vpack.c.b16 %v3048, %v3036
    %v3577 = vpack.c.b16 %v3049, %v3037
    %v3578 = vpack.c.b16 %v3050, %v3038
    %v3579 = vpack.c.b16 %v3051, %v3039
    %v3580 = vpack.c.b16 %v3052, %v3040
    %v3581 = vpack.c.b16 %v3053, %v3041
    %v3582 = vpack.c.b16 %v3054, %v3042
    %v3583 = vpack.c.b16 %v3055, %v3043
    %v3584 = vpack.c.b16 %v3056, %v3044
    %v3585 = vpack.c.b16 %v3069, %v3057
    %v3586 = vpack.c.b16 %v3070, %v3058
    %v3587 = vpack.c.b16 %v3071, %v3059
    %v3588 = vpack.c.b16 %v3072, %v3060
    %v3589 = vpack.c.b16 %v3073, %v3061
    %v3590 = vpack.c.b16 %v3074, %v3062
    %v3591 = vpack.c.b16 %v3075, %v3063
    %v3592 = vpack.c.b16 %v3076, %v3064
    %v3593 = vpack.c.b16 %v3077, %v3065
    %v3594 = vpack.c.b16 %v3078, %v3066
    %v3595 = vpack.c.b16 %v3079, %v3067
    %v3596 = vpack.c.b16 %v3080, %v3068
    %v3597 = vpack.c.b16 %v3093, %v3081
    %v3598 = vpack.c.b16 %v3094, %v3082
    %v3599 = vpack.c.b16 %v3095, %v3083
    %v3600 = vpack.c.b16 %v3096, %v3084
    %v3601 = vpack.c.b16 %v3097, %v3085
    %v3602 = vpack.c.b16 %v3098, %v3086
    %v3603 = vpack.c.b16 %v3099, %v3087
    %v3604 = vpack.c.b16 %v3100, %v3088
    %v3605 = vpack.c.b16 %v3101, %v3089
    %v3606 = vpack.c.b16 %v3102, %v3090
    %v3607 = vpack.c.b16 %v3103, %v3091
    %v3608 = vpack.c.b16 %v3104, %v3092
    %v3609 = vpack.c.b16 %v3117, %v3105
    %v3610 = vpack.c.b16 %v3118, %v3106
    %v3611 = vpack.c.b16 %v3119, %v3107
    %v3612 = vpack.c.b16 %v3120, %v3108
    %v3613 = vpack.c.b16 %v3121, %v3109
    %v3614 = vpack.c.b16 %v3122, %v3110
    %v3615 = vpack.c.b16 %v3123, %v3111
    %v3616 = vpack.c.b16 %v3124, %v3112
    %v3617 = vpack.c.b16 %v3125, %v3113
    %v3618 = vpack.c.b16 %v3126, %v3114
    %v3619 = vpack.c.b16 %v3127, %v3115
    %v3620 = vpack.c.b16 %v3128, %v3116
    %v3621 = vpack.c.b16 %v3141, %v3129
    %v3622 = vpack.c.b16 %v3142, %v3130
    %v3623 = vpack.c.b16 %v3143, %v3131
    %v3624 = vpack.c.b16 %v3144, %v3132
    %v3625 = vpack.c.b16 %v3145, %v3133
    %v3626 = vpack.c.b16 %v3146, %v3134
    %v3627 = vpack.c.b16 %v3147, %v3135
    %v3628 = vpack.c.b16 %v3148, %v3136
    %v3629 = vpack.c.b16 %v3149, %v3137
    %v3630 = vpack.c.b16 %v3150, %v3138
    %v3631 = vpack.c.b16 %v3151, %v3139
    %v3632 = vpack.c.b16 %v3152, %v3140
    %v3633 = vpack.c.b16 %v3165, %v3153
    %v3634 = vpack.c.b16 %v3166, %v3154
    %v3635 = vpack.c.b16 %v3167, %v3155
    %v3636 = vpack.c.b16 %v3168, %v3156
    %v3637 = vpack.c.b16 %v3169, %v3157
    %v3638 = vpack.c.b16 %v3170, %v3158
    %v3639 = vpack.c.b16 %v3171, %v3159
    %v3640 = vpack.c.b16 %v3172, %v3160
    %v3641 = vpack.c.b16 %v3173, %v3161
    %v3642 = vpack.c.b16 %v3174, %v3162
    %v3643 = vpack.c.b16 %v3175, %v3163
    %v3644 = vpack.c.b16 %v3176, %v3164
    %v3645 = vpack.c.b16 %v3189, %v3177
    %v3646 = vpack.c.b16 %v3190, %v3178
    %v3647 = vpack.c.b16 %v3191, %v3179
    %v3648 = vpack.c.b16 %v3192, %v3180
    %v3649 = vpack.c.b16 %v3193, %v3181
    %v3650 = vpack.c.b16 %v3194, %v3182
    %v3651 = vpack.c.b16 %v3195, %v3183
    %v3652 = vpack.c.b16 %v3196, %v3184
    %v3653 = vpack.c.b16 %v3197, %v3185
    %v3654 = vpack.c.b16 %v3198, %v3186
    %v3655 = vpack.c.b16 %v3199, %v3187
    %v3656 = vpack.c.b16 %v3200, %v3188
    %v3657 = vpack.c.b16 %v3213, %v3201
    %v3658 = vpack.c.b16 %v3214, %v3202
    %v3659 = vpack.c.b16 %v3215, %v3203
    %v3660 = vpack.c.b16 %v3216, %v3204
    %v3661 = vpack.c.b16 %v3217, %v3205
    %v3662 = vpack.c.b16 %v3218, %v3206
    %v3663 = vpack.c.b16 %v3219, %v3207
    %v3664 = vpack.c.b16 %v3220, %v3208
    %v3665 = vpack.c.b16 %v3221, %v3209
    %v3666 = vpack.c.b16 %v3222, %v3210
    %v3667 = vpack.c.b16 %v3223, %v3211
    %v3668 = vpack.c.b16 %v3224, %v3212
    %v3669 = vpack.c.b16 %v3237, %v3225
    %v3670 = vpack.c.b16 %v3238, %v3226
    %v3671 = vpack.c.b16 %v3239, %v3227
    %v3672 = vpack.c.b16 %v3240, %v3228
    %v3673 = vpack.c.b16 %v3241, %v3229
    %v3674 = vpack.c.b16 %v3242, %v3230
    %v3675 = vpack.c.b16 %v3243, %v3231
    %v3676 = vpack.c.b16 %v3244, %v3232
    %v3677 = vpack.c.b16 %v3245, %v3233
    %v3678 = vpack.c.b16 %v3246, %v3234
    %v3679 = vpack.c.b16 %v3247, %v3235
    %v3680 = vpack.c.b16 %v3248, %v3236
    %v3681 = vpack.c.b16 %v3261, %v3249
    %v3682 = vpack.c.b16 %v3262, %v3250
    %v3683 = vpack.c.b16 %v3263, %v3251
    %v3684 = vpack.c.b16 %v3264, %v3252
    %v3685 = vpack.c.b16 %v3265, %v3253
    %v3686 = vpack.c.b16 %v3266, %v3254
    %v3687 = vpack.c.b16 %v3267, %v3255
    %v3688 = vpack.c.b16 %v3268, %v3256
    %v3689 = vpack.c.b16 %v3269, %v3257
    %v3690 = vpack.c.b16 %v3270, %v3258
    %v3691 = vpack.c.b16 %v3271, %v3259
    %v3692 = vpack.c.b16 %v3272, %v3260
    %v3693 = vpack.c.b16 %v3285, %v3273
    %v3694 = vpack.c.b16 %v3286, %v3274
    %v3695 = vpack.c.b16 %v3287, %v3275
    %v3696 = vpack.c.b16 %v3288, %v3276
    %v3697 = vpack.c.b16 %v3289, %v3277
    %v3698 = vpack.c.b16 %v3290, %v3278
    %v3699 = vpack.c.b16 %v3291, %v3279
    %v3700 = vpack.c.b16 %v3292, %v3280
    %v3701 = vpack.c.b16 %v3293, %v3281
    %v3702 = vpack.c.b16 %v3294, %v3282
    %v3703 = vpack.c.b16 %v3295, %v3283
    %v3704 = vpack.c.b16 %v3296, %v3284
    %v3705 = vpack.c.b16 %v3309, %v3297
    %v3706 = vpack.c.b16 %v3310, %v3298
    %v3707 = vpack.c.b16 %v3311, %v3299
    %v3708 = vpack.c.b16 %v3312, %v3300
    %v3709 = vpack.c.b16 %v3313, %v3301
    %v3710 = vpack.c.b16 %v3314, %v3302
    %v3711 = vpack.c.b16 %v3315, %v3303
    %v3712 = vpack.c.b16 %v3316, %v3304
    %v3713 = vpack.c.b16 %v3317, %v3305
    %v3714 = vpack.c.b16 %v3318, %v3306
    %v3715 = vpack.c.b16 %v3319, %v3307
    %v3716 = vpack.c.b16 %v3320, %v3308
    %v3717 = vpack.c.b16 %v3333, %v3321
    %v3718 = vpack.c.b16 %v3334, %v3322
    %v3719 = vpack.c.b16 %v3335, %v3323
    %v3720 = vpack.c.b16 %v3336, %v3324
    %v3721 = vpack.c.b16 %v3337, %v3325
    %v3722 = vpack.c.b16 %v3338, %v3326
    %v3723 = vpack.c.b16 %v3339, %v3327
    %v3724 = vpack.c.b16 %v3340, %v3328
    %v3725 = vpack.c.b16 %v3341, %v3329
    %v3726 = vpack.c.b16 %v3342, %v3330
    %v3727 = vpack.c.b16 %v3343, %v3331
    %v3728 = vpack.c.b16 %v3344, %v3332
    %4113 = vmatprep.subr.bf16.mxu0 %v3346
    %4114 = vmatpush1.bf16.msra.mxu0 %v3345
    %4115 = vmatprep.subr.bf16.mxu0 %v3358
    %4116 = vmatpush1.bf16.msra.mxu0 %v3357
    %4117 = vmatprep.subr.bf16.mxu0 %v3370
    %4118 = vmatpush1.bf16.msra.mxu0 %v3369
    %4119 = vmatprep.subr.bf16.mxu0 %v3382
    %4120 = vmatpush1.bf16.msra.mxu0 %v3381
    %4121 = vmatprep.subr.bf16.mxu0 %v3394
    %4122 = vmatpush1.bf16.msra.mxu0 %v3393
    %4123 = vmatprep.subr.bf16.mxu0 %v3406
    %4124 = vmatpush1.bf16.msra.mxu0 %v3405
    %4125 = vmatprep.subr.bf16.mxu0 %v3418
    %4126 = vmatpush1.bf16.msra.mxu0 %v3417
    %4127 = vmatprep.subr.bf16.mxu0 %v3430
    %4128 = vmatpush1.bf16.msra.mxu0 %v3429
    %4129 = vmatprep.subr.bf16.mxu0 %v3442
    %4130 = vmatpush1.bf16.msra.mxu0 %v3441
    %4131 = vmatprep.subr.bf16.mxu0 %v3454
    %4132 = vmatpush1.bf16.msra.mxu0 %v3453
    %4133 = vmatprep.subr.bf16.mxu0 %v3466
    %4134 = vmatpush1.bf16.msra.mxu0 %v3465
    %4135 = vmatprep.subr.bf16.mxu0 %v3478
    %4136 = vmatpush1.bf16.msra.mxu0 %v3477
    %4137 = vmatprep.subr.bf16.mxu0 %v3490
    %4138 = vmatpush1.bf16.msra.mxu0 %v3489
    %4139 = vmatprep.subr.bf16.mxu0 %v3502
    %4140 = vmatpush1.bf16.msra.mxu0 %v3501
    %4141 = vmatprep.subr.bf16.mxu0 %v3514
    %4142 = vmatpush1.bf16.msra.mxu0 %v3513
    %4143 = vmatprep.subr.bf16.mxu0 %v3526
    %4144 = vmatpush1.bf16.msra.mxu0 %v3525
    %4145 = vmatprep.mubr.bf16.mxu0 %v1806
    %4146 = vmatmul.mubr.bf16.gmra.mrb[0].mxu0 %v1805
    %v4147 = vpop.f32.mrb[0].mxu0
    %v4148 = vadd.f32 0.0, %v4147
    %v4149 = vpop.f32.mrb[0].mxu0
    %v4150 = vadd.f32 0.0, %v4149
    %v4151 = vpop.f32.mrb[0].mxu0
    %v4152 = vadd.f32 0.0, %v4151
    %v4153 = vpop.f32.mrb[0].mxu0
    %v4154 = vadd.f32 0.0, %v4153
    %4155 = vdwg.mxu0
    %4156 = vmatprep.subr.bf16.mxu0 %v3538
    %4157 = vmatpush1.bf16.msra.mxu0 %v3537
    %4158 = vmatprep.subr.bf16.mxu0 %v3550
    %4159 = vmatpush1.bf16.msra.mxu0 %v3549
    %4160 = vmatprep.subr.bf16.mxu0 %v3562
    %4161 = vmatpush1.bf16.msra.mxu0 %v3561
    %4162 = vmatprep.subr.bf16.mxu0 %v3574
    %4163 = vmatpush1.bf16.msra.mxu0 %v3573
    %4164 = vmatprep.subr.bf16.mxu0 %v3586
    %4165 = vmatpush1.bf16.msra.mxu0 %v3585
    %4166 = vmatprep.subr.bf16.mxu0 %v3598
    %4167 = vmatpush1.bf16.msra.mxu0 %v3597
    %4168 = vmatprep.subr.bf16.mxu0 %v3610
    %4169 = vmatpush1.bf16.msra.mxu0 %v3609
    %4170 = vmatprep.subr.bf16.mxu0 %v3622
    %4171 = vmatpush1.bf16.msra.mxu0 %v3621
    %4172 = vmatprep.subr.bf16.mxu0 %v3634
    %4173 = vmatpush1.bf16.msra.mxu0 %v3633
    %4174 = vmatprep.subr.bf16.mxu0 %v3646
    %4175 = vmatpush1.bf16.msra.mxu0 %v3645
    %4176 = vmatprep.subr.bf16.mxu0 %v3658
    %4177 = vmatpush1.bf16.msra.mxu0 %v3657
    %4178 = vmatprep.subr.bf16.mxu0 %v3670
    %4179 = vmatpush1.bf16.msra.mxu0 %v3669
    %4180 = vmatprep.subr.bf16.mxu0 %v3682
    %4181 = vmatpush1.bf16.msra.mxu0 %v3681
    %4182 = vmatprep.subr.bf16.mxu0 %v3694
    %4183 = vmatpush1.bf16.msra.mxu0 %v3693
    %4184 = vmatprep.subr.bf16.mxu0 %v3706
    %4185 = vmatpush1.bf16.msra.mxu0 %v3705
    %4186 = vmatprep.subr.bf16.mxu0 %v3718
    %4187 = vmatpush1.bf16.msra.mxu0 %v3717
    %4188 = vmatprep.mubr.bf16.mxu0 %v1808
    %4189 = vmatmul.mubr.bf16.gmra.mrb[0].mxu0 %v1807
    %v4190 = vpop.f32.mrb[0].mxu0
    %v4191 = vadd.f32 %v4148, %v4190
    %v4192 = vpop.f32.mrb[0].mxu0
    %v4193 = vadd.f32 %v4150, %v4192
    %v4194 = vpop.f32.mrb[0].mxu0
    %v4195 = vadd.f32 %v4152, %v4194
    %v4196 = vpop.f32.mrb[0].mxu0
    %v4197 = vadd.f32 %v4154, %v4196
    %4198 = vdwg.mxu0
    %4199 = vmatprep.subr.bf16.mxu0 %v3348
    %4200 = vmatpush1.bf16.msra.mxu0 %v3347
    %4201 = vmatprep.subr.bf16.mxu0 %v3360
    %4202 = vmatpush1.bf16.msra.mxu0 %v3359
    %4203 = vmatprep.subr.bf16.mxu0 %v3372
    %4204 = vmatpush1.bf16.msra.mxu0 %v3371
    %4205 = vmatprep.subr.bf16.mxu0 %v3384
    %4206 = vmatpush1.bf16.msra.mxu0 %v3383
    %4207 = vmatprep.subr.bf16.mxu0 %v3396
    %4208 = vmatpush1.bf16.msra.mxu0 %v3395
    %4209 = vmatprep.subr.bf16.mxu0 %v3408
    %4210 = vmatpush1.bf16.msra.mxu0 %v3407
    %4211 = vmatprep.subr.bf16.mxu0 %v3420
    %4212 = vmatpush1.bf16.msra.mxu0 %v3419
    %4213 = vmatprep.subr.bf16.mxu0 %v3432
    %4214 = vmatpush1.bf16.msra.mxu0 %v3431
    %4215 = vmatprep.subr.bf16.mxu0 %v3444
    %4216 = vmatpush1.bf16.msra.mxu0 %v3443
    %4217 = vmatprep.subr.bf16.mxu0 %v3456
    %4218 = vmatpush1.bf16.msra.mxu0 %v3455
    %4219 = vmatprep.subr.bf16.mxu0 %v3468
    %4220 = vmatpush1.bf16.msra.mxu0 %v3467
    %4221 = vmatprep.subr.bf16.mxu0 %v3480
    %4222 = vmatpush1.bf16.msra.mxu0 %v3479
    %4223 = vmatprep.subr.bf16.mxu0 %v3492
    %4224 = vmatpush1.bf16.msra.mxu0 %v3491
    %4225 = vmatprep.subr.bf16.mxu0 %v3504
    %4226 = vmatpush1.bf16.msra.mxu0 %v3503
    %4227 = vmatprep.subr.bf16.mxu0 %v3516
    %4228 = vmatpush1.bf16.msra.mxu0 %v3515
    %4229 = vmatprep.subr.bf16.mxu0 %v3528
    %4230 = vmatpush1.bf16.msra.mxu0 %v3527
    %4231 = vmatprep.mubr.bf16.mxu0 %v1806
    %4232 = vmatmul.mubr.bf16.gmra.mrb[0].mxu0 %v1805
    %v4233 = vpop.f32.mrb[0].mxu0
    %v4234 = vadd.f32 0.0, %v4233
    %v4235 = vpop.f32.mrb[0].mxu0
    %v4236 = vadd.f32 0.0, %v4235
    %v4237 = vpop.f32.mrb[0].mxu0
    %v4238 = vadd.f32 0.0, %v4237
    %v4239 = vpop.f32.mrb[0].mxu0
    %v4240 = vadd.f32 0.0, %v4239
    %4241 = vdwg.mxu0
    %4242 = vmatprep.subr.bf16.mxu0 %v3540
    %4243 = vmatpush1.bf16.msra.mxu0 %v3539
    %4244 = vmatprep.subr.bf16.mxu0 %v3552
    %4245 = vmatpush1.bf16.msra.mxu0 %v3551
    %4246 = vmatprep.subr.bf16.mxu0 %v3564
    %4247 = vmatpush1.bf16.msra.mxu0 %v3563
    %4248 = vmatprep.subr.bf16.mxu0 %v3576
    %4249 = vmatpush1.bf16.msra.mxu0 %v3575
    %4250 = vmatprep.subr.bf16.mxu0 %v3588
    %4251 = vmatpush1.bf16.msra.mxu0 %v3587
    %4252 = vmatprep.subr.bf16.mxu0 %v3600
    %4253 = vmatpush1.bf16.msra.mxu0 %v3599
    %4254 = vmatprep.subr.bf16.mxu0 %v3612
    %4255 = vmatpush1.bf16.msra.mxu0 %v3611
    %4256 = vmatprep.subr.bf16.mxu0 %v3624
    %4257 = vmatpush1.bf16.msra.mxu0 %v3623
    %4258 = vmatprep.subr.bf16.mxu0 %v3636
    %4259 = vmatpush1.bf16.msra.mxu0 %v3635
    %4260 = vmatprep.subr.bf16.mxu0 %v3648
    %4261 = vmatpush1.bf16.msra.mxu0 %v3647
    %4262 = vmatprep.subr.bf16.mxu0 %v3660
    %4263 = vmatpush1.bf16.msra.mxu0 %v3659
    %4264 = vmatprep.subr.bf16.mxu0 %v3672
    %4265 = vmatpush1.bf16.msra.mxu0 %v3671
    %4266 = vmatprep.subr.bf16.mxu0 %v3684
    %4267 = vmatpush1.bf16.msra.mxu0 %v3683
    %4268 = vmatprep.subr.bf16.mxu0 %v3696
    %4269 = vmatpush1.bf16.msra.mxu0 %v3695
    %4270 = vmatprep.subr.bf16.mxu0 %v3708
    %4271 = vmatpush1.bf16.msra.mxu0 %v3707
    %4272 = vmatprep.subr.bf16.mxu0 %v3720
    %4273 = vmatpush1.bf16.msra.mxu0 %v3719
    %4274 = vmatprep.mubr.bf16.mxu0 %v1808
    %4275 = vmatmul.mubr.bf16.gmra.mrb[0].mxu0 %v1807
    %v4276 = vpop.f32.mrb[0].mxu0
    %v4277 = vadd.f32 %v4234, %v4276
    %v4278 = vpop.f32.mrb[0].mxu0
    %v4279 = vadd.f32 %v4236, %v4278
    %v4280 = vpop.f32.mrb[0].mxu0
    %v4281 = vadd.f32 %v4238, %v4280
    %v4282 = vpop.f32.mrb[0].mxu0
    %v4283 = vadd.f32 %v4240, %v4282
    %4284 = vdwg.mxu0
    %4285 = vmatprep.subr.bf16.mxu0 %v3350
    %4286 = vmatpush1.bf16.msra.mxu0 %v3349
    %4287 = vmatprep.subr.bf16.mxu0 %v3362
    %4288 = vmatpush1.bf16.msra.mxu0 %v3361
    %4289 = vmatprep.subr.bf16.mxu0 %v3374
    %4290 = vmatpush1.bf16.msra.mxu0 %v3373
    %4291 = vmatprep.subr.bf16.mxu0 %v3386
    %4292 = vmatpush1.bf16.msra.mxu0 %v3385
    %4293 = vmatprep.subr.bf16.mxu0 %v3398
    %4294 = vmatpush1.bf16.msra.mxu0 %v3397
    %4295 = vmatprep.subr.bf16.mxu0 %v3410
    %4296 = vmatpush1.bf16.msra.mxu0 %v3409
    %4297 = vmatprep.subr.bf16.mxu0 %v3422
    %4298 = vmatpush1.bf16.msra.mxu0 %v3421
    %4299 = vmatprep.subr.bf16.mxu0 %v3434
    %4300 = vmatpush1.bf16.msra.mxu0 %v3433
    %4301 = vmatprep.subr.bf16.mxu0 %v3446
    %4302 = vmatpush1.bf16.msra.mxu0 %v3445
    %4303 = vmatprep.subr.bf16.mxu0 %v3458
    %4304 = vmatpush1.bf16.msra.mxu0 %v3457
    %4305 = vmatprep.subr.bf16.mxu0 %v3470
    %4306 = vmatpush1.bf16.msra.mxu0 %v3469
    %4307 = vmatprep.subr.bf16.mxu0 %v3482
    %4308 = vmatpush1.bf16.msra.mxu0 %v3481
    %4309 = vmatprep.subr.bf16.mxu0 %v3494
    %4310 = vmatpush1.bf16.msra.mxu0 %v3493
    %4311 = vmatprep.subr.bf16.mxu0 %v3506
    %4312 = vmatpush1.bf16.msra.mxu0 %v3505
    %4313 = vmatprep.subr.bf16.mxu0 %v3518
    %4314 = vmatpush1.bf16.msra.mxu0 %v3517
    %4315 = vmatprep.subr.bf16.mxu0 %v3530
    %4316 = vmatpush1.bf16.msra.mxu0 %v3529
    %4317 = vmatprep.mubr.bf16.mxu0 %v1806
    %4318 = vmatmul.mubr.bf16.gmra.mrb[0].mxu0 %v1805
    %v4319 = vpop.f32.mrb[0].mxu0
    %v4320 = vadd.f32 0.0, %v4319
    %v4321 = vpop.f32.mrb[0].mxu0
    %v4322 = vadd.f32 0.0, %v4321
    %v4323 = vpop.f32.mrb[0].mxu0
    %v4324 = vadd.f32 0.0, %v4323
    %v4325 = vpop.f32.mrb[0].mxu0
    %v4326 = vadd.f32 0.0, %v4325
    %4327 = vdwg.mxu0
    %4328 = vmatprep.subr.bf16.mxu0 %v3542
    %4329 = vmatpush1.bf16.msra.mxu0 %v3541
    %4330 = vmatprep.subr.bf16.mxu0 %v3554
    %4331 = vmatpush1.bf16.msra.mxu0 %v3553
    %4332 = vmatprep.subr.bf16.mxu0 %v3566
    %4333 = vmatpush1.bf16.msra.mxu0 %v3565
    %4334 = vmatprep.subr.bf16.mxu0 %v3578
    %4335 = vmatpush1.bf16.msra.mxu0 %v3577
    %4336 = vmatprep.subr.bf16.mxu0 %v3590
    %4337 = vmatpush1.bf16.msra.mxu0 %v3589
    %4338 = vmatprep.subr.bf16.mxu0 %v3602
    %4339 = vmatpush1.bf16.msra.mxu0 %v3601
    %4340 = vmatprep.subr.bf16.mxu0 %v3614
    %4341 = vmatpush1.bf16.msra.mxu0 %v3613
    %4342 = vmatprep.subr.bf16.mxu0 %v3626
    %4343 = vmatpush1.bf16.msra.mxu0 %v3625
    %4344 = vmatprep.subr.bf16.mxu0 %v3638
    %4345 = vmatpush1.bf16.msra.mxu0 %v3637
    %4346 = vmatprep.subr.bf16.mxu0 %v3650
    %4347 = vmatpush1.bf16.msra.mxu0 %v3649
    %4348 = vmatprep.subr.bf16.mxu0 %v3662
    %4349 = vmatpush1.bf16.msra.mxu0 %v3661
    %4350 = vmatprep.subr.bf16.mxu0 %v3674
    %4351 = vmatpush1.bf16.msra.mxu0 %v3673
    %4352 = vmatprep.subr.bf16.mxu0 %v3686
    %4353 = vmatpush1.bf16.msra.mxu0 %v3685
    %4354 = vmatprep.subr.bf16.mxu0 %v3698
    %4355 = vmatpush1.bf16.msra.mxu0 %v3697
    %4356 = vmatprep.subr.bf16.mxu0 %v3710
    %4357 = vmatpush1.bf16.msra.mxu0 %v3709
    %4358 = vmatprep.subr.bf16.mxu0 %v3722
    %4359 = vmatpush1.bf16.msra.mxu0 %v3721
    %4360 = vmatprep.mubr.bf16.mxu0 %v1808
    %4361 = vmatmul.mubr.bf16.gmra.mrb[0].mxu0 %v1807
    %v4362 = vpop.f32.mrb[0].mxu0
    %v4363 = vadd.f32 %v4320, %v4362
    %v4364 = vpop.f32.mrb[0].mxu0
    %v4365 = vadd.f32 %v4322, %v4364
    %v4366 = vpop.f32.mrb[0].mxu0
    %v4367 = vadd.f32 %v4324, %v4366
    %v4368 = vpop.f32.mrb[0].mxu0
    %v4369 = vadd.f32 %v4326, %v4368
    %4370 = vdwg.mxu0
    %4371 = vmatprep.subr.bf16.mxu0 %v3352
    %4372 = vmatpush1.bf16.msra.mxu0 %v3351
    %4373 = vmatprep.subr.bf16.mxu0 %v3364
    %4374 = vmatpush1.bf16.msra.mxu0 %v3363
    %4375 = vmatprep.subr.bf16.mxu0 %v3376
    %4376 = vmatpush1.bf16.msra.mxu0 %v3375
    %4377 = vmatprep.subr.bf16.mxu0 %v3388
    %4378 = vmatpush1.bf16.msra.mxu0 %v3387
    %4379 = vmatprep.subr.bf16.mxu0 %v3400
    %4380 = vmatpush1.bf16.msra.mxu0 %v3399
    %4381 = vmatprep.subr.bf16.mxu0 %v3412
    %4382 = vmatpush1.bf16.msra.mxu0 %v3411
    %4383 = vmatprep.subr.bf16.mxu0 %v3424
    %4384 = vmatpush1.bf16.msra.mxu0 %v3423
    %4385 = vmatprep.subr.bf16.mxu0 %v3436
    %4386 = vmatpush1.bf16.msra.mxu0 %v3435
    %4387 = vmatprep.subr.bf16.mxu0 %v3448
    %4388 = vmatpush1.bf16.msra.mxu0 %v3447
    %4389 = vmatprep.subr.bf16.mxu0 %v3460
    %4390 = vmatpush1.bf16.msra.mxu0 %v3459
    %4391 = vmatprep.subr.bf16.mxu0 %v3472
    %4392 = vmatpush1.bf16.msra.mxu0 %v3471
    %4393 = vmatprep.subr.bf16.mxu0 %v3484
    %4394 = vmatpush1.bf16.msra.mxu0 %v3483
    %4395 = vmatprep.subr.bf16.mxu0 %v3496
    %4396 = vmatpush1.bf16.msra.mxu0 %v3495
    %4397 = vmatprep.subr.bf16.mxu0 %v3508
    %4398 = vmatpush1.bf16.msra.mxu0 %v3507
    %4399 = vmatprep.subr.bf16.mxu0 %v3520
    %4400 = vmatpush1.bf16.msra.mxu0 %v3519
    %4401 = vmatprep.subr.bf16.mxu0 %v3532
    %4402 = vmatpush1.bf16.msra.mxu0 %v3531
    %4403 = vmatprep.mubr.bf16.mxu0 %v1806
    %4404 = vmatmul.mubr.bf16.gmra.mrb[0].mxu0 %v1805
    %v4405 = vpop.f32.mrb[0].mxu0
    %v4406 = vadd.f32 0.0, %v4405
    %v4407 = vpop.f32.mrb[0].mxu0
    %v4408 = vadd.f32 0.0, %v4407
    %v4409 = vpop.f32.mrb[0].mxu0
    %v4410 = vadd.f32 0.0, %v4409
    %v4411 = vpop.f32.mrb[0].mxu0
    %v4412 = vadd.f32 0.0, %v4411
    %4413 = vdwg.mxu0
    %4414 = vmatprep.subr.bf16.mxu0 %v3544
    %4415 = vmatpush1.bf16.msra.mxu0 %v3543
    %4416 = vmatprep.subr.bf16.mxu0 %v3556
    %4417 = vmatpush1.bf16.msra.mxu0 %v3555
    %4418 = vmatprep.subr.bf16.mxu0 %v3568
    %4419 = vmatpush1.bf16.msra.mxu0 %v3567
    %4420 = vmatprep.subr.bf16.mxu0 %v3580
    %4421 = vmatpush1.bf16.msra.mxu0 %v3579
    %4422 = vmatprep.subr.bf16.mxu0 %v3592
    %4423 = vmatpush1.bf16.msra.mxu0 %v3591
    %4424 = vmatprep.subr.bf16.mxu0 %v3604
    %4425 = vmatpush1.bf16.msra.mxu0 %v3603
    %4426 = vmatprep.subr.bf16.mxu0 %v3616
    %4427 = vmatpush1.bf16.msra.mxu0 %v3615
    %4428 = vmatprep.subr.bf16.mxu0 %v3628
    %4429 = vmatpush1.bf16.msra.mxu0 %v3627
    %4430 = vmatprep.subr.bf16.mxu0 %v3640
    %4431 = vmatpush1.bf16.msra.mxu0 %v3639
    %4432 = vmatprep.subr.bf16.mxu0 %v3652
    %4433 = vmatpush1.bf16.msra.mxu0 %v3651
    %4434 = vmatprep.subr.bf16.mxu0 %v3664
    %4435 = vmatpush1.bf16.msra.mxu0 %v3663
    %4436 = vmatprep.subr.bf16.mxu0 %v3676
    %4437 = vmatpush1.bf16.msra.mxu0 %v3675
    %4438 = vmatprep.subr.bf16.mxu0 %v3688
    %4439 = vmatpush1.bf16.msra.mxu0 %v3687
    %4440 = vmatprep.subr.bf16.mxu0 %v3700
    %4441 = vmatpush1.bf16.msra.mxu0 %v3699
    %4442 = vmatprep.subr.bf16.mxu0 %v3712
    %4443 = vmatpush1.bf16.msra.mxu0 %v3711
    %4444 = vmatprep.subr.bf16.mxu0 %v3724
    %4445 = vmatpush1.bf16.msra.mxu0 %v3723
    %4446 = vmatprep.mubr.bf16.mxu0 %v1808
    %4447 = vmatmul.mubr.bf16.gmra.mrb[0].mxu0 %v1807
    %v4448 = vpop.f32.mrb[0].mxu0
    %v4449 = vadd.f32 %v4406, %v4448
    %v4450 = vpop.f32.mrb[0].mxu0
    %v4451 = vadd.f32 %v4408, %v4450
    %v4452 = vpop.f32.mrb[0].mxu0
    %v4453 = vadd.f32 %v4410, %v4452
    %v4454 = vpop.f32.mrb[0].mxu0
    %v4455 = vadd.f32 %v4412, %v4454
    %4456 = vdwg.mxu0
    %4457 = vmatprep.subr.bf16.mxu0 %v3354
    %4458 = vmatpush1.bf16.msra.mxu0 %v3353
    %4459 = vmatprep.subr.bf16.mxu0 %v3366
    %4460 = vmatpush1.bf16.msra.mxu0 %v3365
    %4461 = vmatprep.subr.bf16.mxu0 %v3378
    %4462 = vmatpush1.bf16.msra.mxu0 %v3377
    %4463 = vmatprep.subr.bf16.mxu0 %v3390
    %4464 = vmatpush1.bf16.msra.mxu0 %v3389
    %4465 = vmatprep.subr.bf16.mxu0 %v3402
    %4466 = vmatpush1.bf16.msra.mxu0 %v3401
    %4467 = vmatprep.subr.bf16.mxu0 %v3414
    %4468 = vmatpush1.bf16.msra.mxu0 %v3413
    %4469 = vmatprep.subr.bf16.mxu0 %v3426
    %4470 = vmatpush1.bf16.msra.mxu0 %v3425
    %4471 = vmatprep.subr.bf16.mxu0 %v3438
    %4472 = vmatpush1.bf16.msra.mxu0 %v3437
    %4473 = vmatprep.subr.bf16.mxu0 %v3450
    %4474 = vmatpush1.bf16.msra.mxu0 %v3449
    %4475 = vmatprep.subr.bf16.mxu0 %v3462
    %4476 = vmatpush1.bf16.msra.mxu0 %v3461
    %4477 = vmatprep.subr.bf16.mxu0 %v3474
    %4478 = vmatpush1.bf16.msra.mxu0 %v3473
    %4479 = vmatprep.subr.bf16.mxu0 %v3486
    %4480 = vmatpush1.bf16.msra.mxu0 %v3485
    %4481 = vmatprep.subr.bf16.mxu0 %v3498
    %4482 = vmatpush1.bf16.msra.mxu0 %v3497
    %4483 = vmatprep.subr.bf16.mxu0 %v3510
    %4484 = vmatpush1.bf16.msra.mxu0 %v3509
    %4485 = vmatprep.subr.bf16.mxu0 %v3522
    %4486 = vmatpush1.bf16.msra.mxu0 %v3521
    %4487 = vmatprep.subr.bf16.mxu0 %v3534
    %4488 = vmatpush1.bf16.msra.mxu0 %v3533
    %4489 = vmatprep.mubr.bf16.mxu0 %v1806
    %4490 = vmatmul.mubr.bf16.gmra.mrb[0].mxu0 %v1805
    %v4491 = vpop.f32.mrb[0].mxu0
    %v4492 = vadd.f32 0.0, %v4491
    %v4493 = vpop.f32.mrb[0].mxu0
    %v4494 = vadd.f32 0.0, %v4493
    %v4495 = vpop.f32.mrb[0].mxu0
    %v4496 = vadd.f32 0.0, %v4495
    %v4497 = vpop.f32.mrb[0].mxu0
    %v4498 = vadd.f32 0.0, %v4497
    %4499 = vdwg.mxu0
    %4500 = vmatprep.subr.bf16.mxu0 %v3546
    %4501 = vmatpush1.bf16.msra.mxu0 %v3545
    %4502 = vmatprep.subr.bf16.mxu0 %v3558
    %4503 = vmatpush1.bf16.msra.mxu0 %v3557
    %4504 = vmatprep.subr.bf16.mxu0 %v3570
    %4505 = vmatpush1.bf16.msra.mxu0 %v3569
    %4506 = vmatprep.subr.bf16.mxu0 %v3582
    %4507 = vmatpush1.bf16.msra.mxu0 %v3581
    %4508 = vmatprep.subr.bf16.mxu0 %v3594
    %4509 = vmatpush1.bf16.msra.mxu0 %v3593
    %4510 = vmatprep.subr.bf16.mxu0 %v3606
    %4511 = vmatpush1.bf16.msra.mxu0 %v3605
    %4512 = vmatprep.subr.bf16.mxu0 %v3618
    %4513 = vmatpush1.bf16.msra.mxu0 %v3617
    %4514 = vmatprep.subr.bf16.mxu0 %v3630
    %4515 = vmatpush1.bf16.msra.mxu0 %v3629
    %4516 = vmatprep.subr.bf16.mxu0 %v3642
    %4517 = vmatpush1.bf16.msra.mxu0 %v3641
    %4518 = vmatprep.subr.bf16.mxu0 %v3654
    %4519 = vmatpush1.bf16.msra.mxu0 %v3653
    %4520 = vmatprep.subr.bf16.mxu0 %v3666
    %4521 = vmatpush1.bf16.msra.mxu0 %v3665
    %4522 = vmatprep.subr.bf16.mxu0 %v3678
    %4523 = vmatpush1.bf16.msra.mxu0 %v3677
    %4524 = vmatprep.subr.bf16.mxu0 %v3690
    %4525 = vmatpush1.bf16.msra.mxu0 %v3689
    %4526 = vmatprep.subr.bf16.mxu0 %v3702
    %4527 = vmatpush1.bf16.msra.mxu0 %v3701
    %4528 = vmatprep.subr.bf16.mxu0 %v3714
    %4529 = vmatpush1.bf16.msra.mxu0 %v3713
    %4530 = vmatprep.subr.bf16.mxu0 %v3726
    %4531 = vmatpush1.bf16.msra.mxu0 %v3725
    %4532 = vmatprep.mubr.bf16.mxu0 %v1808
    %4533 = vmatmul.mubr.bf16.gmra.mrb[0].mxu0 %v1807
    %v4534 = vpop.f32.mrb[0].mxu0
    %v4535 = vadd.f32 %v4492, %v4534
    %v4536 = vpop.f32.mrb[0].mxu0
    %v4537 = vadd.f32 %v4494, %v4536
    %v4538 = vpop.f32.mrb[0].mxu0
    %v4539 = vadd.f32 %v4496, %v4538
    %v4540 = vpop.f32.mrb[0].mxu0
    %v4541 = vadd.f32 %v4498, %v4540
    %4542 = vdwg.mxu0
    %4543 = vmatprep.subr.bf16.mxu0 %v3356
    %4544 = vmatpush1.bf16.msra.mxu0 %v3355
    %4545 = vmatprep.subr.bf16.mxu0 %v3368
    %4546 = vmatpush1.bf16.msra.mxu0 %v3367
    %4547 = vmatprep.subr.bf16.mxu0 %v3380
    %4548 = vmatpush1.bf16.msra.mxu0 %v3379
    %4549 = vmatprep.subr.bf16.mxu0 %v3392
    %4550 = vmatpush1.bf16.msra.mxu0 %v3391
    %4551 = vmatprep.subr.bf16.mxu0 %v3404
    %4552 = vmatpush1.bf16.msra.mxu0 %v3403
    %4553 = vmatprep.subr.bf16.mxu0 %v3416
    %4554 = vmatpush1.bf16.msra.mxu0 %v3415
    %4555 = vmatprep.subr.bf16.mxu0 %v3428
    %4556 = vmatpush1.bf16.msra.mxu0 %v3427
    %4557 = vmatprep.subr.bf16.mxu0 %v3440
    %4558 = vmatpush1.bf16.msra.mxu0 %v3439
    %4559 = vmatprep.subr.bf16.mxu0 %v3452
    %4560 = vmatpush1.bf16.msra.mxu0 %v3451
    %4561 = vmatprep.subr.bf16.mxu0 %v3464
    %4562 = vmatpush1.bf16.msra.mxu0 %v3463
    %4563 = vmatprep.subr.bf16.mxu0 %v3476
    %4564 = vmatpush1.bf16.msra.mxu0 %v3475
    %4565 = vmatprep.subr.bf16.mxu0 %v3488
    %4566 = vmatpush1.bf16.msra.mxu0 %v3487
    %4567 = vmatprep.subr.bf16.mxu0 %v3500
    %4568 = vmatpush1.bf16.msra.mxu0 %v3499
    %4569 = vmatprep.subr.bf16.mxu0 %v3512
    %4570 = vmatpush1.bf16.msra.mxu0 %v3511
    %4571 = vmatprep.subr.bf16.mxu0 %v3524
    %4572 = vmatpush1.bf16.msra.mxu0 %v3523
    %4573 = vmatprep.subr.bf16.mxu0 %v3536
    %4574 = vmatpush1.bf16.msra.mxu0 %v3535
    %4575 = vmatprep.mubr.bf16.mxu0 %v1806
    %4576 = vmatmul.mubr.bf16.gmra.mrb[0].mxu0 %v1805
    %v4577 = vpop.f32.mrb[0].mxu0
    %v4578 = vadd.f32 0.0, %v4577
    %v4579 = vpop.f32.mrb[0].mxu0
    %v4580 = vadd.f32 0.0, %v4579
    %v4581 = vpop.f32.mrb[0].mxu0
    %v4582 = vadd.f32 0.0, %v4581
    %v4583 = vpop.f32.mrb[0].mxu0
    %v4584 = vadd.f32 0.0, %v4583
    %4585 = vdwg.mxu0
    %4586 = vmatprep.subr.bf16.mxu0 %v3548
    %4587 = vmatpush1.bf16.msra.mxu0 %v3547
    %4588 = vmatprep.subr.bf16.mxu0 %v3560
    %4589 = vmatpush1.bf16.msra.mxu0 %v3559
    %4590 = vmatprep.subr.bf16.mxu0 %v3572
    %4591 = vmatpush1.bf16.msra.mxu0 %v3571
    %4592 = vmatprep.subr.bf16.mxu0 %v3584
    %4593 = vmatpush1.bf16.msra.mxu0 %v3583
    %4594 = vmatprep.subr.bf16.mxu0 %v3596
    %4595 = vmatpush1.bf16.msra.mxu0 %v3595
    %4596 = vmatprep.subr.bf16.mxu0 %v3608
    %4597 = vmatpush1.bf16.msra.mxu0 %v3607
    %4598 = vmatprep.subr.bf16.mxu0 %v3620
    %4599 = vmatpush1.bf16.msra.mxu0 %v3619
    %4600 = vmatprep.subr.bf16.mxu0 %v3632
    %4601 = vmatpush1.bf16.msra.mxu0 %v3631
    %4602 = vmatprep.subr.bf16.mxu0 %v3644
    %4603 = vmatpush1.bf16.msra.mxu0 %v3643
    %4604 = vmatprep.subr.bf16.mxu0 %v3656
    %4605 = vmatpush1.bf16.msra.mxu0 %v3655
    %4606 = vmatprep.subr.bf16.mxu0 %v3668
    %4607 = vmatpush1.bf16.msra.mxu0 %v3667
    %4608 = vmatprep.subr.bf16.mxu0 %v3680
    %4609 = vmatpush1.bf16.msra.mxu0 %v3679
    %4610 = vmatprep.subr.bf16.mxu0 %v3692
    %4611 = vmatpush1.bf16.msra.mxu0 %v3691
    %4612 = vmatprep.subr.bf16.mxu0 %v3704
    %4613 = vmatpush1.bf16.msra.mxu0 %v3703
    %4614 = vmatprep.subr.bf16.mxu0 %v3716
    %4615 = vmatpush1.bf16.msra.mxu0 %v3715
    %4616 = vmatprep.subr.bf16.mxu0 %v3728
    %4617 = vmatpush1.bf16.msra.mxu0 %v3727
    %4618 = vmatprep.mubr.bf16.mxu0 %v1808
    %4619 = vmatmul.mubr.bf16.gmra.mrb[0].mxu0 %v1807
    %v4620 = vpop.f32.mrb[0].mxu0
    %v4621 = vadd.f32 %v4578, %v4620
    %v4622 = vpop.f32.mrb[0].mxu0
    %v4623 = vadd.f32 %v4580, %v4622
    %v4624 = vpop.f32.mrb[0].mxu0
    %v4625 = vadd.f32 %v4582, %v4624
    %v4626 = vpop.f32.mrb[0].mxu0
    %v4627 = vadd.f32 %v4584, %v4626
    %4628 = vdwg.mxu0
    %v4629 = vmul.f32 %v4191, %v4363
    %v4630 = vmul.f32 %v4195, %v4367
    %4631 = vadd.xlane.f32.xlu0 %v4629
    %v4632 = vpop.xlane.xlu0 %4631
    %4633 = vadd.xlane.f32.xlu0 %v4630
    %v4634 = vpop.xlane.xlu0 %4633
    %v4635 = vmul.f32 %v4191, %v4365
    %v4636 = vmul.f32 %v4195, %v4369
    %4637 = vadd.xlane.f32.xlu0 %v4635
    %v4638 = vpop.xlane.xlu0 %4637
    %4639 = vadd.xlane.f32.xlu0 %v4636
    %v4640 = vpop.xlane.xlu0 %4639
    %v4641 = vmul.f32 %v4191, %v4449
    %v4642 = vmul.f32 %v4195, %v4453
    %4643 = vadd.xlane.f32.xlu0 %v4641
    %v4644 = vpop.xlane.xlu0 %4643
    %4645 = vadd.xlane.f32.xlu0 %v4642
    %v4646 = vpop.xlane.xlu0 %4645
    %v4647 = vmul.f32 %v4191, %v4451
    %v4648 = vmul.f32 %v4195, %v4455
    %4649 = vadd.xlane.f32.xlu0 %v4647
    %v4650 = vpop.xlane.xlu0 %4649
    %4651 = vadd.xlane.f32.xlu0 %v4648
    %v4652 = vpop.xlane.xlu0 %4651
    %v4653 = vmul.f32 %v4193, %v4363
    %v4654 = vmul.f32 %v4197, %v4367
    %4655 = vadd.xlane.f32.xlu0 %v4653
    %v4656 = vpop.xlane.xlu0 %4655
    %4657 = vadd.xlane.f32.xlu0 %v4654
    %v4658 = vpop.xlane.xlu0 %4657
    %v4659 = vmul.f32 %v4193, %v4365
    %v4660 = vmul.f32 %v4197, %v4369
    %4661 = vadd.xlane.f32.xlu0 %v4659
    %v4662 = vpop.xlane.xlu0 %4661
    %4663 = vadd.xlane.f32.xlu0 %v4660
    %v4664 = vpop.xlane.xlu0 %4663
    %v4665 = vmul.f32 %v4193, %v4449
    %v4666 = vmul.f32 %v4197, %v4453
    %4667 = vadd.xlane.f32.xlu0 %v4665
    %v4668 = vpop.xlane.xlu0 %4667
    %4669 = vadd.xlane.f32.xlu0 %v4666
    %v4670 = vpop.xlane.xlu0 %4669
    %v4671 = vmul.f32 %v4193, %v4451
    %v4672 = vmul.f32 %v4197, %v4455
    %4673 = vadd.xlane.f32.xlu0 %v4671
    %v4674 = vpop.xlane.xlu0 %4673
    %4675 = vadd.xlane.f32.xlu0 %v4672
    %v4676 = vpop.xlane.xlu0 %4675
    %v4677 = vmul.f32 %v4277, %v4363
    %v4678 = vmul.f32 %v4281, %v4367
    %4679 = vadd.xlane.f32.xlu0 %v4677
    %v4680 = vpop.xlane.xlu0 %4679
    %4681 = vadd.xlane.f32.xlu0 %v4678
    %v4682 = vpop.xlane.xlu0 %4681
    %v4683 = vmul.f32 %v4277, %v4365
    %v4684 = vmul.f32 %v4281, %v4369
    %4685 = vadd.xlane.f32.xlu0 %v4683
    %v4686 = vpop.xlane.xlu0 %4685
    %4687 = vadd.xlane.f32.xlu0 %v4684
    %v4688 = vpop.xlane.xlu0 %4687
    %v4689 = vmul.f32 %v4277, %v4449
    %v4690 = vmul.f32 %v4281, %v4453
    %4691 = vadd.xlane.f32.xlu0 %v4689
    %v4692 = vpop.xlane.xlu0 %4691
    %4693 = vadd.xlane.f32.xlu0 %v4690
    %v4694 = vpop.xlane.xlu0 %4693
    %v4695 = vmul.f32 %v4277, %v4451
    %v4696 = vmul.f32 %v4281, %v4455
    %4697 = vadd.xlane.f32.xlu0 %v4695
    %v4698 = vpop.xlane.xlu0 %4697
    %4699 = vadd.xlane.f32.xlu0 %v4696
    %v4700 = vpop.xlane.xlu0 %4699
    %v4701 = vmul.f32 %v4279, %v4363
    %v4702 = vmul.f32 %v4283, %v4367
    %4703 = vadd.xlane.f32.xlu0 %v4701
    %v4704 = vpop.xlane.xlu0 %4703
    %4705 = vadd.xlane.f32.xlu0 %v4702
    %v4706 = vpop.xlane.xlu0 %4705
    %v4707 = vmul.f32 %v4279, %v4365
    %v4708 = vmul.f32 %v4283, %v4369
    %4709 = vadd.xlane.f32.xlu0 %v4707
    %v4710 = vpop.xlane.xlu0 %4709
    %4711 = vadd.xlane.f32.xlu0 %v4708
    %v4712 = vpop.xlane.xlu0 %4711
    %v4713 = vmul.f32 %v4279, %v4449
    %v4714 = vmul.f32 %v4283, %v4453
    %4715 = vadd.xlane.f32.xlu0 %v4713
    %v4716 = vpop.xlane.xlu0 %4715
    %4717 = vadd.xlane.f32.xlu0 %v4714
    %v4718 = vpop.xlane.xlu0 %4717
    %v4719 = vmul.f32 %v4279, %v4451
    %v4720 = vmul.f32 %v4283, %v4455
    %4721 = vadd.xlane.f32.xlu0 %v4719
    %v4722 = vpop.xlane.xlu0 %4721
    %4723 = vadd.xlane.f32.xlu0 %v4720
    %v4724 = vpop.xlane.xlu0 %4723
    %v4725 = vmax.f32 %v4632, %v4656
    %v4726 = vmax.f32 %v4634, %v4658
    %v4727 = vmax.f32 %v4725, %v4680
    %v4728 = vmax.f32 %v4726, %v4682
    %v4729 = vmax.f32 %v4727, %v4704
    %v4730 = vmax.f32 %v4728, %v4706
    %v4731 = vsub.f32 %v4632, %v4729
    %v4732 = vsub.f32 %v4634, %v4730
    %v4733 = vmul.f32 %v4731, 1.442695
    %v4734 = vpow.pop %v4733
    %v4735 = vmul.f32 %v4732, 1.442695
    %v4736 = vpow.pop %v4735
    %v4737 = vsub.f32 %v4656, %v4729
    %v4738 = vsub.f32 %v4658, %v4730
    %v4739 = vmul.f32 %v4737, 1.442695
    %v4740 = vpow.pop %v4739
    %v4741 = vmul.f32 %v4738, 1.442695
    %v4742 = vpow.pop %v4741
    %v4743 = vsub.f32 %v4680, %v4729
    %v4744 = vsub.f32 %v4682, %v4730
    %v4745 = vmul.f32 %v4743, 1.442695
    %v4746 = vpow.pop %v4745
    %v4747 = vmul.f32 %v4744, 1.442695
    %v4748 = vpow.pop %v4747
    %v4749 = vsub.f32 %v4704, %v4729
    %v4750 = vsub.f32 %v4706, %v4730
    %v4751 = vmul.f32 %v4749, 1.442695
    %v4752 = vpow.pop %v4751
    %v4753 = vmul.f32 %v4750, 1.442695
    %v4754 = vpow.pop %v4753
    %v4755 = vadd.f32 %v4734, %v4740
    %v4756 = vadd.f32 %v4736, %v4742
    %v4757 = vadd.f32 %v4755, %v4746
    %v4758 = vadd.f32 %v4756, %v4748
    %v4759 = vadd.f32 %v4757, %v4752
    %v4760 = vadd.f32 %v4758, %v4754
    %v4761 = vrcp.pop %v4759
    %v4762 = vrcp.pop %v4760
    %v4763 = vmul.f32 %v4734, %v4761
    %v4764 = vmul.f32 %v4736, %v4762
    %v4765 = vmul.f32 %v4763, %v4535
    %v4766 = vmul.f32 %v4764, %v4539
    %v4767 = vmul.f32 %v4740, %v4761
    %v4768 = vmul.f32 %v4742, %v4762
    %v4769 = vmul.f32 %v4767, %v4537
    %v4770 = vmul.f32 %v4768, %v4541
    %v4771 = vadd.f32 %v4765, %v4769
    %v4772 = vadd.f32 %v4766, %v4770
    %v4773 = vmul.f32 %v4746, %v4761
    %v4774 = vmul.f32 %v4748, %v4762
    %v4775 = vmul.f32 %v4773, %v4621
    %v4776 = vmul.f32 %v4774, %v4625
    %v4777 = vadd.f32 %v4771, %v4775
    %v4778 = vadd.f32 %v4772, %v4776
    %v4779 = vmul.f32 %v4752, %v4761
    %v4780 = vmul.f32 %v4754, %v4762
    %v4781 = vmul.f32 %v4779, %v4623
    %v4782 = vmul.f32 %v4780, %v4627
    %v4783 = vadd.f32 %v4777, %v4781
    %v4784 = vadd.f32 %v4778, %v4782
    %v4785 = vstv %s243
    %v4786 = vmul.f32 %v4785, %v4783
    %v4787 = vmul.f32 %v4785, %v4784
    %v4788 = vadd.f32 %v4786, %v1797
    %v4789 = vadd.f32 %v4787, %v1801
    %v4790 = vmax.f32 %v4638, %v4662
    %v4791 = vmax.f32 %v4640, %v4664
    %v4792 = vmax.f32 %v4790, %v4686
    %v4793 = vmax.f32 %v4791, %v4688
    %v4794 = vmax.f32 %v4792, %v4710
    %v4795 = vmax.f32 %v4793, %v4712
    %v4796 = vsub.f32 %v4638, %v4794
    %v4797 = vsub.f32 %v4640, %v4795
    %v4798 = vmul.f32 %v4796, 1.442695
    %v4799 = vpow.pop %v4798
    %v4800 = vmul.f32 %v4797, 1.442695
    %v4801 = vpow.pop %v4800
    %v4802 = vsub.f32 %v4662, %v4794
    %v4803 = vsub.f32 %v4664, %v4795
    %v4804 = vmul.f32 %v4802, 1.442695
    %v4805 = vpow.pop %v4804
    %v4806 = vmul.f32 %v4803, 1.442695
    %v4807 = vpow.pop %v4806
    %v4808 = vsub.f32 %v4686, %v4794
    %v4809 = vsub.f32 %v4688, %v4795
    %v4810 = vmul.f32 %v4808, 1.442695
    %v4811 = vpow.pop %v4810
    %v4812 = vmul.f32 %v4809, 1.442695
    %v4813 = vpow.pop %v4812
    %v4814 = vsub.f32 %v4710, %v4794
    %v4815 = vsub.f32 %v4712, %v4795
    %v4816 = vmul.f32 %v4814, 1.442695
    %v4817 = vpow.pop %v4816
    %v4818 = vmul.f32 %v4815, 1.442695
    %v4819 = vpow.pop %v4818
    %v4820 = vadd.f32 %v4799, %v4805
    %v4821 = vadd.f32 %v4801, %v4807
    %v4822 = vadd.f32 %v4820, %v4811
    %v4823 = vadd.f32 %v4821, %v4813
    %v4824 = vadd.f32 %v4822, %v4817
    %v4825 = vadd.f32 %v4823, %v4819
    %v4826 = vrcp.pop %v4824
    %v4827 = vrcp.pop %v4825
    %v4828 = vmul.f32 %v4799, %v4826
    %v4829 = vmul.f32 %v4801, %v4827
    %v4830 = vmul.f32 %v4828, %v4535
    %v4831 = vmul.f32 %v4829, %v4539
    %v4832 = vmul.f32 %v4805, %v4826
    %v4833 = vmul.f32 %v4807, %v4827
    %v4834 = vmul.f32 %v4832, %v4537
    %v4835 = vmul.f32 %v4833, %v4541
    %v4836 = vadd.f32 %v4830, %v4834
    %v4837 = vadd.f32 %v4831, %v4835
    %v4838 = vmul.f32 %v4811, %v4826
    %v4839 = vmul.f32 %v4813, %v4827
    %v4840 = vmul.f32 %v4838, %v4621
    %v4841 = vmul.f32 %v4839, %v4625
    %v4842 = vadd.f32 %v4836, %v4840
    %v4843 = vadd.f32 %v4837, %v4841
    %v4844 = vmul.f32 %v4817, %v4826
    %v4845 = vmul.f32 %v4819, %v4827
    %v4846 = vmul.f32 %v4844, %v4623
    %v4847 = vmul.f32 %v4845, %v4627
    %v4848 = vadd.f32 %v4842, %v4846
    %v4849 = vadd.f32 %v4843, %v4847
    %v4850 = vmul.f32 %v4785, %v4848
    %v4851 = vmul.f32 %v4785, %v4849
    %v4852 = vadd.f32 %v4850, %v1798
    %v4853 = vadd.f32 %v4851, %v1802
    %v4854 = vmax.f32 %v4644, %v4668
    %v4855 = vmax.f32 %v4646, %v4670
    %v4856 = vmax.f32 %v4854, %v4692
    %v4857 = vmax.f32 %v4855, %v4694
    %v4858 = vmax.f32 %v4856, %v4716
    %v4859 = vmax.f32 %v4857, %v4718
    %v4860 = vsub.f32 %v4644, %v4858
    %v4861 = vsub.f32 %v4646, %v4859
    %v4862 = vmul.f32 %v4860, 1.442695
    %v4863 = vpow.pop %v4862
    %v4864 = vmul.f32 %v4861, 1.442695
    %v4865 = vpow.pop %v4864
    %v4866 = vsub.f32 %v4668, %v4858
    %v4867 = vsub.f32 %v4670, %v4859
    %v4868 = vmul.f32 %v4866, 1.442695
    %v4869 = vpow.pop %v4868
    %v4870 = vmul.f32 %v4867, 1.442695
    %v4871 = vpow.pop %v4870
    %v4872 = vsub.f32 %v4692, %v4858
    %v4873 = vsub.f32 %v4694, %v4859
    %v4874 = vmul.f32 %v4872, 1.442695
    %v4875 = vpow.pop %v4874
    %v4876 = vmul.f32 %v4873, 1.442695
    %v4877 = vpow.pop %v4876
    %v4878 = vsub.f32 %v4716, %v4858
    %v4879 = vsub.f32 %v4718, %v4859
    %v4880 = vmul.f32 %v4878, 1.442695
    %v4881 = vpow.pop %v4880
    %v4882 = vmul.f32 %v4879, 1.442695
    %v4883 = vpow.pop %v4882
    %v4884 = vadd.f32 %v4863, %v4869
    %v4885 = vadd.f32 %v4865, %v4871
    %v4886 = vadd.f32 %v4884, %v4875
    %v4887 = vadd.f32 %v4885, %v4877
    %v4888 = vadd.f32 %v4886, %v4881
    %v4889 = vadd.f32 %v4887, %v4883
    %v4890 = vrcp.pop %v4888
    %v4891 = vrcp.pop %v4889
    %v4892 = vmul.f32 %v4863, %v4890
    %v4893 = vmul.f32 %v4865, %v4891
    %v4894 = vmul.f32 %v4892, %v4535
    %v4895 = vmul.f32 %v4893, %v4539
    %v4896 = vmul.f32 %v4869, %v4890
    %v4897 = vmul.f32 %v4871, %v4891
    %v4898 = vmul.f32 %v4896, %v4537
    %v4899 = vmul.f32 %v4897, %v4541
    %v4900 = vadd.f32 %v4894, %v4898
    %v4901 = vadd.f32 %v4895, %v4899
    %v4902 = vmul.f32 %v4875, %v4890
    %v4903 = vmul.f32 %v4877, %v4891
    %v4904 = vmul.f32 %v4902, %v4621
    %v4905 = vmul.f32 %v4903, %v4625
    %v4906 = vadd.f32 %v4900, %v4904
    %v4907 = vadd.f32 %v4901, %v4905
    %v4908 = vmul.f32 %v4881, %v4890
    %v4909 = vmul.f32 %v4883, %v4891
    %v4910 = vmul.f32 %v4908, %v4623
    %v4911 = vmul.f32 %v4909, %v4627
    %v4912 = vadd.f32 %v4906, %v4910
    %v4913 = vadd.f32 %v4907, %v4911
    %v4914 = vmul.f32 %v4785, %v4912
    %v4915 = vmul.f32 %v4785, %v4913
    %v4916 = vadd.f32 %v4914, %v1799
    %v4917 = vadd.f32 %v4915, %v1803
    %v4918 = vmax.f32 %v4650, %v4674
    %v4919 = vmax.f32 %v4652, %v4676
    %v4920 = vmax.f32 %v4918, %v4698
    %v4921 = vmax.f32 %v4919, %v4700
    %v4922 = vmax.f32 %v4920, %v4722
    %v4923 = vmax.f32 %v4921, %v4724
    %v4924 = vsub.f32 %v4650, %v4922
    %v4925 = vsub.f32 %v4652, %v4923
    %v4926 = vmul.f32 %v4924, 1.442695
    %v4927 = vpow.pop %v4926
    %v4928 = vmul.f32 %v4925, 1.442695
    %v4929 = vpow.pop %v4928
    %v4930 = vsub.f32 %v4674, %v4922
    %v4931 = vsub.f32 %v4676, %v4923
    %v4932 = vmul.f32 %v4930, 1.442695
    %v4933 = vpow.pop %v4932
    %v4934 = vmul.f32 %v4931, 1.442695
    %v4935 = vpow.pop %v4934
    %v4936 = vsub.f32 %v4698, %v4922
    %v4937 = vsub.f32 %v4700, %v4923
    %v4938 = vmul.f32 %v4936, 1.442695
    %v4939 = vpow.pop %v4938
    %v4940 = vmul.f32 %v4937, 1.442695
    %v4941 = vpow.pop %v4940
    %v4942 = vsub.f32 %v4722, %v4922
    %v4943 = vsub.f32 %v4724, %v4923
    %v4944 = vmul.f32 %v4942, 1.442695
    %v4945 = vpow.pop %v4944
    %v4946 = vmul.f32 %v4943, 1.442695
    %v4947 = vpow.pop %v4946
    %v4948 = vadd.f32 %v4927, %v4933
    %v4949 = vadd.f32 %v4929, %v4935
    %v4950 = vadd.f32 %v4948, %v4939
    %v4951 = vadd.f32 %v4949, %v4941
    %v4952 = vadd.f32 %v4950, %v4945
    %v4953 = vadd.f32 %v4951, %v4947
    %v4954 = vrcp.pop %v4952
    %v4955 = vrcp.pop %v4953
    %v4956 = vmul.f32 %v4927, %v4954
    %v4957 = vmul.f32 %v4929, %v4955
    %v4958 = vmul.f32 %v4956, %v4535
    %v4959 = vmul.f32 %v4957, %v4539
    %v4960 = vmul.f32 %v4933, %v4954
    %v4961 = vmul.f32 %v4935, %v4955
    %v4962 = vmul.f32 %v4960, %v4537
    %v4963 = vmul.f32 %v4961, %v4541
    %v4964 = vadd.f32 %v4958, %v4962
    %v4965 = vadd.f32 %v4959, %v4963
    %v4966 = vmul.f32 %v4939, %v4954
    %v4967 = vmul.f32 %v4941, %v4955
    %v4968 = vmul.f32 %v4966, %v4621
    %v4969 = vmul.f32 %v4967, %v4625
    %v4970 = vadd.f32 %v4964, %v4968
    %v4971 = vadd.f32 %v4965, %v4969
    %v4972 = vmul.f32 %v4945, %v4954
    %v4973 = vmul.f32 %v4947, %v4955
    %v4974 = vmul.f32 %v4972, %v4623
    %v4975 = vmul.f32 %v4973, %v4627
    %v4976 = vadd.f32 %v4970, %v4974
    %v4977 = vadd.f32 %v4971, %v4975
    %v4978 = vmul.f32 %v4785, %v4976
    %v4979 = vmul.f32 %v4785, %v4977
    %v4980 = vadd.f32 %v4978, %v1800
    %v4981 = vadd.f32 %v4979, %v1804
    %v4982 = vpack.c.bf16 %v4789, %v4788
    %v4983 = vpack.c.bf16 %v4853, %v4852
    %v4984 = vpack.c.bf16 %v4917, %v4916
    %v4985 = vpack.c.bf16 %v4981, %v4980
    %v4986 = vld [vmem:[#allocation21] sm:$0xf]
    %v4987 = vld [vmem:[#allocation21 + $0x4] sm:$0xf]
    %v4988 = vld [vmem:[#allocation21 + $0x8] sm:$0xf]
    %v4989 = vld [vmem:[#allocation21 + $0xc] sm:$0xf]
    %v4990 = vld [vmem:[#allocation21 + $0x10] sm:$0xf]
    %v4991 = vld [vmem:[#allocation21 + $0x14] sm:$0xf]
    %v4992 = vld [vmem:[#allocation21 + $0x18] sm:$0xf]
    %v4993 = vld [vmem:[#allocation21 + $0x1c] sm:$0xf]
    %v4994 = vld [vmem:[#allocation21 + $0x20] sm:$0xf]
    %v4995 = vld [vmem:[#allocation21 + $0x24] sm:$0xf]
    %v4996 = vld [vmem:[#allocation21 + $0x28] sm:$0xf]
    %v4997 = vld [vmem:[#allocation21 + $0x2c] sm:$0xf]
    %v4998 = vld [vmem:[#allocation21 + $0x30] sm:$0xf]
    %v4999 = vld [vmem:[#allocation21 + $0x34] sm:$0xf]
    %v5000 = vld [vmem:[#allocation21 + $0x38] sm:$0xf]
    %v5001 = vld [vmem:[#allocation21 + $0x3c] sm:$0xf]
    %v5002 = vld [vmem:[#allocation21 + $0x40] sm:$0xf]
    %v5003 = vld [vmem:[#allocation21 + $0x44] sm:$0xf]
    %v5004 = vld [vmem:[#allocation21 + $0x48] sm:$0xf]
    %v5005 = vld [vmem:[#allocation21 + $0x4c] sm:$0xf]
    %v5006 = vld [vmem:[#allocation21 + $0x50] sm:$0xf]
    %v5007 = vld [vmem:[#allocation21 + $0x54] sm:$0xf]
    %v5008 = vld [vmem:[#allocation21 + $0x58] sm:$0xf]
    %v5009 = vld [vmem:[#allocation21 + $0x5c] sm:$0xf]
    %v5010 = vld [vmem:[#allocation21 + $0x60] sm:$0xf]
    %v5011 = vld [vmem:[#allocation21 + $0x64] sm:$0xf]
    %v5012 = vld [vmem:[#allocation21 + $0x68] sm:$0xf]
    %v5013 = vld [vmem:[#allocation21 + $0x6c] sm:$0xf]
    %v5014 = vld [vmem:[#allocation21 + $0x70] sm:$0xf]
    %v5015 = vld [vmem:[#allocation21 + $0x74] sm:$0xf]
    %v5016 = vld [vmem:[#allocation21 + $0x78] sm:$0xf]
    %v5017 = vld [vmem:[#allocation21 + $0x7c] sm:$0xf]
    %v5018 = vld [vmem:[#allocation21 + $0x80] sm:$0xf]
    %v5019 = vld [vmem:[#allocation21 + $0x84] sm:$0xf]
    %v5020 = vld [vmem:[#allocation21 + $0x88] sm:$0xf]
    %v5021 = vld [vmem:[#allocation21 + $0x8c] sm:$0xf]
    %v5022 = vld [vmem:[#allocation21 + $0x90] sm:$0xf]
    %v5023 = vld [vmem:[#allocation21 + $0x94] sm:$0xf]
    %v5024 = vld [vmem:[#allocation21 + $0x98] sm:$0xf]
    %v5025 = vld [vmem:[#allocation21 + $0x9c] sm:$0xf]
    %v5026 = vld [vmem:[#allocation21 + $0xa0] sm:$0xf]
    %v5027 = vld [vmem:[#allocation21 + $0xa4] sm:$0xf]
    %v5028 = vld [vmem:[#allocation21 + $0xa8] sm:$0xf]
    %v5029 = vld [vmem:[#allocation21 + $0xac] sm:$0xf]
    %v5030 = vld [vmem:[#allocation21 + $0xb0] sm:$0xf]
    %v5031 = vld [vmem:[#allocation21 + $0xb4] sm:$0xf]
    %v5032 = vld [vmem:[#allocation21 + $0xb8] sm:$0xf]
    %v5033 = vld [vmem:[#allocation21 + $0xbc] sm:$0xf]
    %v5034 = vld [vmem:[#allocation21 + $0xc0] sm:$0xf]
    %v5035 = vld [vmem:[#allocation21 + $0xc4] sm:$0xf]
    %v5036 = vld [vmem:[#allocation21 + $0xc8] sm:$0xf]
    %v5037 = vld [vmem:[#allocation21 + $0xcc] sm:$0xf]
    %v5038 = vld [vmem:[#allocation21 + $0xd0] sm:$0xf]
    %v5039 = vld [vmem:[#allocation21 + $0xd4] sm:$0xf]
    %v5040 = vld [vmem:[#allocation21 + $0xd8] sm:$0xf]
    %v5041 = vld [vmem:[#allocation21 + $0xdc] sm:$0xf]
    %v5042 = vld [vmem:[#allocation21 + $0xe0] sm:$0xf]
    %v5043 = vld [vmem:[#allocation21 + $0xe4] sm:$0xf]
    %v5044 = vld [vmem:[#allocation21 + $0xe8] sm:$0xf]
    %v5045 = vld [vmem:[#allocation21 + $0xec] sm:$0xf]
    %v5046 = vld [vmem:[#allocation21 + $0xf0] sm:$0xf]
    %v5047 = vld [vmem:[#allocation21 + $0xf4] sm:$0xf]
    %v5048 = vld [vmem:[#allocation21 + $0xf8] sm:$0xf]
    %v5049 = vld [vmem:[#allocation21 + $0xfc] sm:$0xf]
    %v5050 = vld [vmem:[#allocation22] sm:$0x1]
    %v5052 = vlaneseq
    %v5053 = vshrl.u32 %v5052, 7
    %v5054 = vsub.s32 0, %v5053
    %v5055 = vrot.slane %v5050, %v5054
    %v5121 = vunpack.c.l.b16 %v4986
    %v5122 = vunpack.c.l.b16 %v4987
    %v5123 = vunpack.c.l.b16 %v4988
    %v5124 = vunpack.c.l.b16 %v4989
    %v5125 = vunpack.c.l.b16 %v4990
    %v5126 = vunpack.c.l.b16 %v4991
    %v5127 = vunpack.c.l.b16 %v4992
    %v5128 = vunpack.c.l.b16 %v4993
    %v5129 = vunpack.c.l.b16 %v4994
    %v5130 = vunpack.c.l.b16 %v4995
    %v5131 = vunpack.c.l.b16 %v4996
    %v5132 = vunpack.c.l.b16 %v4997
    %v5133 = vunpack.c.l.b16 %v4998
    %v5134 = vunpack.c.l.b16 %v4999
    %v5135 = vunpack.c.l.b16 %v5000
    %v5136 = vunpack.c.l.b16 %v5001
    %v5137 = vunpack.c.l.b16 %v5002
    %v5138 = vunpack.c.l.b16 %v5003
    %v5139 = vunpack.c.l.b16 %v5004
    %v5140 = vunpack.c.l.b16 %v5005
    %v5141 = vunpack.c.l.b16 %v5006
    %v5142 = vunpack.c.l.b16 %v5007
    %v5143 = vunpack.c.l.b16 %v5008
    %v5144 = vunpack.c.l.b16 %v5009
    %v5145 = vunpack.c.l.b16 %v5010
    %v5146 = vunpack.c.l.b16 %v5011
    %v5147 = vunpack.c.l.b16 %v5012
    %v5148 = vunpack.c.l.b16 %v5013
    %v5149 = vunpack.c.l.b16 %v5014
    %v5150 = vunpack.c.l.b16 %v5015
    %v5151 = vunpack.c.l.b16 %v5016
    %v5152 = vunpack.c.l.b16 %v5017
    %v5153 = vunpack.c.l.b16 %v5018
    %v5154 = vunpack.c.l.b16 %v5019
    %v5155 = vunpack.c.l.b16 %v5020
    %v5156 = vunpack.c.l.b16 %v5021
    %v5157 = vunpack.c.l.b16 %v5022
    %v5158 = vunpack.c.l.b16 %v5023
    %v5159 = vunpack.c.l.b16 %v5024
    %v5160 = vunpack.c.l.b16 %v5025
    %v5161 = vunpack.c.l.b16 %v5026
    %v5162 = vunpack.c.l.b16 %v5027
    %v5163 = vunpack.c.l.b16 %v5028
    %v5164 = vunpack.c.l.b16 %v5029
    %v5165 = vunpack.c.l.b16 %v5030
    %v5166 = vunpack.c.l.b16 %v5031
    %v5167 = vunpack.c.l.b16 %v5032
    %v5168 = vunpack.c.l.b16 %v5033
    %v5169 = vunpack.c.l.b16 %v5034
    %v5170 = vunpack.c.l.b16 %v5035
    %v5171 = vunpack.c.l.b16 %v5036
    %v5172 = vunpack.c.l.b16 %v5037
    %v5173 = vunpack.c.l.b16 %v5038
    %v5174 = vunpack.c.l.b16 %v5039
    %v5175 = vunpack.c.l.b16 %v5040
    %v5176 = vunpack.c.l.b16 %v5041
    %v5177 = vunpack.c.l.b16 %v5042
    %v5178 = vunpack.c.l.b16 %v5043
    %v5179 = vunpack.c.l.b16 %v5044
    %v5180 = vunpack.c.l.b16 %v5045
    %v5181 = vunpack.c.l.b16 %v5046
    %v5182 = vunpack.c.l.b16 %v5047
    %v5183 = vunpack.c.l.b16 %v5048
    %v5184 = vunpack.c.l.b16 %v5049
    %v5185 = vpack.c.b16 %v5122, %v5121
    %v5186 = vpack.c.b16 %v5124, %v5123
    %v5187 = vpack.c.b16 %v5126, %v5125
    %v5188 = vpack.c.b16 %v5128, %v5127
    %v5189 = vpack.c.b16 %v5130, %v5129
    %v5190 = vpack.c.b16 %v5132, %v5131
    %v5191 = vpack.c.b16 %v5134, %v5133
    %v5192 = vpack.c.b16 %v5136, %v5135
    %v5193 = vpack.c.b16 %v5138, %v5137
    %v5194 = vpack.c.b16 %v5140, %v5139
    %v5195 = vpack.c.b16 %v5142, %v5141
    %v5196 = vpack.c.b16 %v5144, %v5143
    %v5197 = vpack.c.b16 %v5146, %v5145
    %v5198 = vpack.c.b16 %v5148, %v5147
    %v5199 = vpack.c.b16 %v5150, %v5149
    %v5200 = vpack.c.b16 %v5152, %v5151
    %v5201 = vpack.c.b16 %v5154, %v5153
    %v5202 = vpack.c.b16 %v5156, %v5155
    %v5203 = vpack.c.b16 %v5158, %v5157
    %v5204 = vpack.c.b16 %v5160, %v5159
    %v5205 = vpack.c.b16 %v5162, %v5161
    %v5206 = vpack.c.b16 %v5164, %v5163
    %v5207 = vpack.c.b16 %v5166, %v5165
    %v5208 = vpack.c.b16 %v5168, %v5167
    %v5209 = vpack.c.b16 %v5170, %v5169
    %v5210 = vpack.c.b16 %v5172, %v5171
    %v5211 = vpack.c.b16 %v5174, %v5173
    %v5212 = vpack.c.b16 %v5176, %v5175
    %v5213 = vpack.c.b16 %v5178, %v5177
    %v5214 = vpack.c.b16 %v5180, %v5179
    %v5215 = vpack.c.b16 %v5182, %v5181
    %v5216 = vpack.c.b16 %v5184, %v5183
    %5249 = vmatprep.subr.bf16.mxu0 0
    %5250 = vmatpush1.bf16.msra.mxu0 %v5185
    %5251 = vmatprep.subr.bf16.mxu0 0
    %5252 = vmatpush1.bf16.msra.mxu0 %v5186
    %5253 = vmatprep.subr.bf16.mxu0 0
    %5254 = vmatpush1.bf16.msra.mxu0 %v5187
    %5255 = vmatprep.subr.bf16.mxu0 0
    %5256 = vmatpush1.bf16.msra.mxu0 %v5188
    %5257 = vmatprep.subr.bf16.mxu0 0
    %5258 = vmatpush1.bf16.msra.mxu0 %v5189
    %5259 = vmatprep.subr.bf16.mxu0 0
    %5260 = vmatpush1.bf16.msra.mxu0 %v5190
    %5261 = vmatprep.subr.bf16.mxu0 0
    %5262 = vmatpush1.bf16.msra.mxu0 %v5191
    %5263 = vmatprep.subr.bf16.mxu0 0
    %5264 = vmatpush1.bf16.msra.mxu0 %v5192
    %5265 = vmatprep.subr.bf16.mxu0 0
    %5266 = vmatpush1.bf16.msra.mxu0 %v5193
    %5267 = vmatprep.subr.bf16.mxu0 0
    %5268 = vmatpush1.bf16.msra.mxu0 %v5194
    %5269 = vmatprep.subr.bf16.mxu0 0
    %5270 = vmatpush1.bf16.msra.mxu0 %v5195
    %5271 = vmatprep.subr.bf16.mxu0 0
    %5272 = vmatpush1.bf16.msra.mxu0 %v5196
    %5273 = vmatprep.subr.bf16.mxu0 0
    %5274 = vmatpush1.bf16.msra.mxu0 %v5197
    %5275 = vmatprep.subr.bf16.mxu0 0
    %5276 = vmatpush1.bf16.msra.mxu0 %v5198
    %5277 = vmatprep.subr.bf16.mxu0 0
    %5278 = vmatpush1.bf16.msra.mxu0 %v5199
    %5279 = vmatprep.subr.bf16.mxu0 0
    %5280 = vmatpush1.bf16.msra.mxu0 %v5200
    %5281 = vmatprep.mubr.bf16.mxu0 %v4983
    %5282 = vmatmul.mubr.bf16.gmra.mrb[0].mxu0 %v4982
    %v5283 = vpop.f32.mrb[0].mxu0
    %v5284 = vadd.f32 %v5055, %v5283
    %v5285 = vpop.f32.mrb[0].mxu0
    %v5286 = vpop.f32.mrb[0].mxu0
    %v5287 = vadd.f32 %v5055, %v5286
    %v5288 = vpop.f32.mrb[0].mxu0
    %5289 = vdwg.mxu0
    %5290 = vmatprep.subr.bf16.mxu0 0
    %5291 = vmatpush1.bf16.msra.mxu0 %v5201
    %5292 = vmatprep.subr.bf16.mxu0 0
    %5293 = vmatpush1.bf16.msra.mxu0 %v5202
    %5294 = vmatprep.subr.bf16.mxu0 0
    %5295 = vmatpush1.bf16.msra.mxu0 %v5203
    %5296 = vmatprep.subr.bf16.mxu0 0
    %5297 = vmatpush1.bf16.msra.mxu0 %v5204
    %5298 = vmatprep.subr.bf16.mxu0 0
    %5299 = vmatpush1.bf16.msra.mxu0 %v5205
    %5300 = vmatprep.subr.bf16.mxu0 0
    %5301 = vmatpush1.bf16.msra.mxu0 %v5206
    %5302 = vmatprep.subr.bf16.mxu0 0
    %5303 = vmatpush1.bf16.msra.mxu0 %v5207
    %5304 = vmatprep.subr.bf16.mxu0 0
    %5305 = vmatpush1.bf16.msra.mxu0 %v5208
    %5306 = vmatprep.subr.bf16.mxu0 0
    %5307 = vmatpush1.bf16.msra.mxu0 %v5209
    %5308 = vmatprep.subr.bf16.mxu0 0
    %5309 = vmatpush1.bf16.msra.mxu0 %v5210
    %5310 = vmatprep.subr.bf16.mxu0 0
    %5311 = vmatpush1.bf16.msra.mxu0 %v5211
    %5312 = vmatprep.subr.bf16.mxu0 0
    %5313 = vmatpush1.bf16.msra.mxu0 %v5212
    %5314 = vmatprep.subr.bf16.mxu0 0
    %5315 = vmatpush1.bf16.msra.mxu0 %v5213
    %5316 = vmatprep.subr.bf16.mxu0 0
    %5317 = vmatpush1.bf16.msra.mxu0 %v5214
    %5318 = vmatprep.subr.bf16.mxu0 0
    %5319 = vmatpush1.bf16.msra.mxu0 %v5215
    %5320 = vmatprep.subr.bf16.mxu0 0
    %5321 = vmatpush1.bf16.msra.mxu0 %v5216
    %5322 = vmatprep.mubr.bf16.mxu0 %v4985
    %5323 = vmatmul.mubr.bf16.gmra.mrb[0].mxu0 %v4984
    %v5324 = vpop.f32.mrb[0].mxu0
    %v5325 = vadd.f32 %v5284, %v5324
    %v5326 = vpop.f32.mrb[0].mxu0
    %v5327 = vpop.f32.mrb[0].mxu0
    %v5328 = vadd.f32 %v5287, %v5327
    %v5329 = vpop.f32.mrb[0].mxu0
    %5330 = vdwg.mxu0
    %vm5331 = vcmp.ge.f32.partialorder %v5325, 0.0
    %vm5332 = vcmp.ge.f32.partialorder %v5328, 0.0
    %v5333 = vstv %s244
    %v5334 = vmul.f32 %v5333, %v5325
    %v5335 = vmul.f32 %v5333, %v5328
    %v5336 = vsel %vm5331, %v5325, %v5334
    %v5337 = vsel %vm5332, %v5328, %v5335
    %v5338 = vpack.c.bf16 %v5337, %v5336
    %v5339 = vld [vmem:[#allocation24] sm:$0xf]
    %v5340 = vld [vmem:[#allocation24 + $0x4] sm:$0xf]
    %v5341 = vld [vmem:[#allocation24 + $0x8] sm:$0xf]
    %v5342 = vld [vmem:[#allocation24 + $0xc] sm:$0xf]
    %v5343 = vld [vmem:[#allocation24 + $0x10] sm:$0xf]
    %v5344 = vld [vmem:[#allocation24 + $0x14] sm:$0xf]
    %v5345 = vld [vmem:[#allocation24 + $0x18] sm:$0xf]
    %v5346 = vld [vmem:[#allocation24 + $0x1c] sm:$0xf]
    %v5347 = vld [vmem:[#allocation24 + $0x20] sm:$0xf]
    %v5348 = vld [vmem:[#allocation24 + $0x24] sm:$0xf]
    %v5349 = vld [vmem:[#allocation24 + $0x28] sm:$0xf]
    %v5350 = vld [vmem:[#allocation24 + $0x2c] sm:$0xf]
    %v5351 = vld [vmem:[#allocation24 + $0x30] sm:$0xf]
    %v5352 = vld [vmem:[#allocation24 + $0x34] sm:$0xf]
    %v5353 = vld [vmem:[#allocation24 + $0x38] sm:$0xf]
    %v5354 = vld [vmem:[#allocation24 + $0x3c] sm:$0xf]
    %v5355 = vld [vmem:[#allocation25] sm:$0x1]
    %v5357 = vlaneseq
    %v5358 = vshrl.u32 %v5357, 7
    %v5359 = vsub.s32 0, %v5358
    %v5360 = vrot.slane %v5355, %v5359
    %v5378 = vunpack.c.l.b16 %v5339
    %v5379 = vunpack.c.l.b16 %v5340
    %v5380 = vunpack.c.l.b16 %v5341
    %v5381 = vunpack.c.l.b16 %v5342
    %v5382 = vunpack.c.l.b16 %v5343
    %v5383 = vunpack.c.l.b16 %v5344
    %v5384 = vunpack.c.l.b16 %v5345
    %v5385 = vunpack.c.l.b16 %v5346
    %v5386 = vunpack.c.l.b16 %v5347
    %v5387 = vunpack.c.l.b16 %v5348
    %v5388 = vunpack.c.l.b16 %v5349
    %v5389 = vunpack.c.l.b16 %v5350
    %v5390 = vunpack.c.l.b16 %v5351
    %v5391 = vunpack.c.l.b16 %v5352
    %v5392 = vunpack.c.l.b16 %v5353
    %v5393 = vunpack.c.l.b16 %v5354
    %v5394 = vpack.c.b16 %v5379, %v5378
    %v5395 = vpack.c.b16 %v5381, %v5380
    %v5396 = vpack.c.b16 %v5383, %v5382
    %v5397 = vpack.c.b16 %v5385, %v5384
    %v5398 = vpack.c.b16 %v5387, %v5386
    %v5399 = vpack.c.b16 %v5389, %v5388
    %v5400 = vpack.c.b16 %v5391, %v5390
    %v5401 = vpack.c.b16 %v5393, %v5392
    %5410 = vmatprep.subr.bf16.mxu0 0
    %5411 = vmatpush1.bf16.msra.mxu0 %v5394
    %5412 = vmatprep.subr.bf16.mxu0 0
    %5413 = vmatpush1.bf16.msra.mxu0 %v5395
    %5414 = vmatprep.subr.bf16.mxu0 0
    %5415 = vmatpush1.bf16.msra.mxu0 %v5396
    %5416 = vmatprep.subr.bf16.mxu0 0
    %5417 = vmatpush1.bf16.msra.mxu0 %v5397
    %5418 = vmatprep.subr.bf16.mxu0 0
    %5419 = vmatpush1.bf16.msra.mxu0 %v5398
    %5420 = vmatprep.subr.bf16.mxu0 0
    %5421 = vmatpush1.bf16.msra.mxu0 %v5399
    %5422 = vmatprep.subr.bf16.mxu0 0
    %5423 = vmatpush1.bf16.msra.mxu0 %v5400
    %5424 = vmatprep.subr.bf16.mxu0 0
    %5425 = vmatpush1.bf16.msra.mxu0 %v5401
    %5426 = vmatprep.subr.bf16.mxu0 0
    %5427 = vmatpush1.bf16.msra.mxu0 0
    %5428 = vmatprep.subr.bf16.mxu0 0
    %5429 = vmatpush1.bf16.msra.mxu0 0
    %5430 = vmatprep.subr.bf16.mxu0 0
    %5431 = vmatpush1.bf16.msra.mxu0 0
    %5432 = vmatprep.subr.bf16.mxu0 0
    %5433 = vmatpush1.bf16.msra.mxu0 0
    %5434 = vmatprep.subr.bf16.mxu0 0
    %5435 = vmatpush1.bf16.msra.mxu0 0
    %5436 = vmatprep.subr.bf16.mxu0 0
    %5437 = vmatpush1.bf16.msra.mxu0 0
    %5438 = vmatprep.subr.bf16.mxu0 0
    %5439 = vmatpush1.bf16.msra.mxu0 0
    %5440 = vmatprep.subr.bf16.mxu0 0
    %5441 = vmatpush1.bf16.msra.mxu0 0
    %5442 = vmatprep.mubr.bf16.mxu0 0
    %5443 = vmatmul.mubr.bf16.gmra.mrb[0].mxu0 %v5338
    %v5444 = vpop.f32.mrb[0].mxu0
    %v5445 = vadd.f32 %v5360, %v5444
    %v5446 = vpop.f32.mrb[0].mxu0
    %v5447 = vpop.f32.mrb[0].mxu0
    %v5448 = vadd.f32 %v5360, %v5447
    %v5449 = vpop.f32.mrb[0].mxu0
    %5450 = vdwg.mxu0
    %v5451 = vpack.c.bf16 %v5448, %v5445
    %v5453 = vunpack.c.l.b16 %v5451
    %v5454 = vunpack.c.h.b16 %v5451
    %v5455 = vpack.c.b16 %v5453, %v5453
    %v5456 = vpack.c.b16 %v5454, %v5454
    %5459 = vst [vmem:[#allocation27] sm:$0xf] %v5455
    %5460 = vst [vmem:[#allocation27 + $0x4] sm:$0xf] %v5456
    %v5461 = vlaneseq
    %v5462 = vshrl.u32 %v5461, 7
    %v5463 = vadd.s32 %v5462, 8
    %s5464 = smul.u32 0, 16
    %v5465 = vstv %s5464
    %v5466 = vadd.s32 %v5462, %v5465
    %v5467 = vadd.s32 %v5463, %v5465
    %vm5468 = vcmp.lt.s32.totalorder %v5466, 16
    %vm5469 = vcmp.lt.s32.totalorder %v5467, 16
    %v5470 = vsel %vm5468, %v5445, 0.0
    %v5471 = vsel %vm5469, %v5448, 0.0
    %v5472 = vadd.f32 %v5470, %v5471
    %v5473 = vrot.slane %v5472, 4
    %v5474 = vadd.f32 %v5472, %v5473
    %v5475 = vrot.slane %v5474, 2
    %v5476 = vadd.f32 %v5474, %v5475
    %v5477 = vrot.slane %v5476, 1
    %v5478 = vadd.f32 %v5476, %v5477
    %5479 = vst [vmem:[#allocation28] sm:$0x1] %v5478
    %v5480 = vmul.f32 %v5470, %v5470
    %v5481 = vmul.f32 %v5471, %v5471
    %v5482 = vadd.f32 %v5480, %v5481
    %v5483 = vrot.slane %v5482, 4
    %v5484 = vadd.f32 %v5482, %v5483
    %v5485 = vrot.slane %v5484, 2
    %v5486 = vadd.f32 %v5484, %v5485
    %v5487 = vrot.slane %v5486, 1
    %v5488 = vadd.f32 %v5486, %v5487
    %5489 = vst [vmem:[#allocation30] sm:$0x1] %v5488
    // Predicated region
    $region122: #{tpu_custom_call.1} parent=1 // pred_check
      _
    $region123: #{tpu_custom_call.1} parent=1 // pred_check_branch
      %5491 = sbr.rel (0) target = $region125
    $region124: #{tpu_custom_call.1} parent=1 // pred_region
      %s5493 = ssub.s32 128, 128
      %5494 = vsyncadd [#allocation4], %s5493
      %s5495 = sshll.u32 [#allocation27], 4
      %s5496 = int_to_ptr.vmem [resolvable:$true] %s5495
      %5501 = dma.vmem_to_hbm [thread:$0]  %s5496, 128, %s15, [#allocation4], 64, 64, 4
    $region125: #{tpu_custom_call.1} parent=1 // pred_fallthru
      _
    // Predicated region
    $region126: #{tpu_custom_call.1} parent=1 // pred_check
      _
    $region127: #{tpu_custom_call.1} parent=1 // pred_check_branch
      %5503 = sbr.rel (0) target = $region129
    $region128: #{tpu_custom_call.1} parent=1 // pred_region
      %s5505 = ssub.s32 16, 16
      %5506 = vsyncadd [#allocation29], %s5505
      %s5508 = sshll.u32 [#allocation28], 4
      %s5509 = int_to_ptr.vmem [resolvable:$true] %s5508
      %5511 = dma.vmem_to_hbm [thread:$0]  %s5509, 16, %s16, [#allocation29]
    $region129: #{tpu_custom_call.1} parent=1 // pred_fallthru
      _
    // Predicated region
    $region130: #{tpu_custom_call.1} parent=1 // pred_check
      _
    $region131: #{tpu_custom_call.1} parent=1 // pred_check_branch
      %5513 = sbr.rel (0) target = $region133
    $region132: #{tpu_custom_call.1} parent=1 // pred_region
      %s5515 = ssub.s32 16, 16
      %5516 = vsyncadd [#allocation29], %s5515
      %s5518 = sshll.u32 [#allocation30], 4
      %s5519 = int_to_ptr.vmem [resolvable:$true] %s5518
      %5521 = dma.vmem_to_hbm [thread:$0]  %s5519, 16, %s17, [#allocation29]
    $region133: #{tpu_custom_call.1} parent=1 // pred_fallthru
      _
    // Predicated region
    $region134: #{tpu_custom_call.1} parent=1 // pred_check
      _
    $region135: #{tpu_custom_call.1} parent=1 // pred_check_branch
      %5523 = sbr.rel (0) target = $region137
    $region136: #{tpu_custom_call.1} parent=1 // pred_region
      %5524 = dma.done [#allocation4], 128
    $region137: #{tpu_custom_call.1} parent=1 // pred_fallthru
      _
    // Predicated region
    $region138: #{tpu_custom_call.1} parent=1 // pred_check
      _
    $region139: #{tpu_custom_call.1} parent=1 // pred_check_branch
      %5526 = sbr.rel (0) target = $region141
    $region140: #{tpu_custom_call.1} parent=1 // pred_region
      %5527 = dma.done [#allocation29], 16
    $region141: #{tpu_custom_call.1} parent=1 // pred_fallthru
      _
    // Predicated region
    $region142: #{tpu_custom_call.1} parent=1 // pred_check
      _
    $region143: #{tpu_custom_call.1} parent=1 // pred_check_branch
      %5529 = sbr.rel (0) target = $region145
    $region144: #{tpu_custom_call.1} parent=1 // pred_region
      %5530 = dma.done [#allocation29], 16
    $region145: #{tpu_custom_call.1} parent=1 // pred_fallthru
      _
    %5531 = vsyncpa [#allocation3], 1
    %5532 = vsyncpa [#allocation8], 1
    %5533 = vsyncpa [#allocation11], 1
    %5534 = vsyncpa [#allocation14], 1
    %5535 = vsyncpa [#allocation17], 1
    %5536 = vsyncpa [#allocation20], 1
    %5537 = vsyncpa [#allocation23], 1
    %5538 = vsyncpa [#allocation26], 1
    %5539 = vsyncpa [#allocation4], 1
    %5540 = vsyncpa [#allocation29], 1
    %5541 = vsyncpa [#allocation5], 1

</llo_original>
